<compile_context>
chip_gen: v5e
topology: v5e:2x2
jax: 0.10.0
libtpu: 0.0.40
codegen_flags: <defaults>
</compile_context>

<pallas_src>
import functools

import jax
import jax.numpy as jnp
from jax.experimental import pallas as pl
from jax.experimental.pallas import tpu as pltpu

LEAKY = 0.5  # args.leaky


# ------------------------------- helpers --------------------------------------
def _round_up(x, m):
    return ((x + m - 1) // m) * m


def _pick_tile(n, tile=None):
    # At latdim ~128 the kernel is HBM-bound on v5e/v6e/v7x: the 256-wide MXU shape
    # buys nothing, while padding NP up to 256 inflates adjacency bytes (~NP^2).
    # 128 minimizes padding and yields more row tiles for megacore balance.
    if tile is not None:
        return tile
    return 128


def _vmem_budget_bytes():
    try:
        kind = jax.devices()[0].device_kind.lower()
    except Exception:
        kind = ""
    if "v7" in kind:
        return 48 * 1024 * 1024     # v7x: 64 MiB physical per TensorCore
    return 64 * 1024 * 1024         # v5e / v6e: 128 MiB physical


def _resident_x_fits(NP, Dp, tile, adj_itemsize, budget_bytes):
    """Conservative VMEM estimate of the resident-x layout (2 buffers per operand)."""
    need = (2 * NP * Dp * 2                        # x, bf16, kept resident
            + 2 * 2 * tile * tile * adj_itemsize   # adj + soc blocks
            + 2 * 2 * tile * 128 * 4               # per-row scale blocks (lane padded)
            + 2 * tile * Dp * 4                    # running-sum input block
            + 2 * tile * Dp * (4 + 4 + 2 + 4))     # tem, hyp, lat(bf16), sum_out blocks
    return need <= int(0.9 * budget_bytes)


def _quantize_rows_int8(a):
    """Symmetric per-row absmax int8 quantization: a ~= q * scale (row-wise)."""
    s = jnp.max(jnp.abs(a), axis=1, keepdims=True)
    s = jnp.where(s > 0, s, 1.0)
    q = jnp.clip(jnp.round(a / s * 127.0), -127.0, 127.0).astype(jnp.int8)
    return q, (s / 127.0).astype(jnp.float32)


# ----------------------------- Pallas kernel -----------------------------------
def _fused_layer_kernel(adj_ref, adj_s_ref, soc_ref, soc_s_ref, x_ref, sum_ref,
                        tem_ref, hyp_ref, lat_ref, sum_out_ref,
                        *, slope, nu_tiles, tile, x_resident, quantized):
    """One (row-tile, K-tile) grid step of a fused GCN + social-GCN layer."""
    i = pl.program_id(0)            # row tile ("parallel")
    k = pl.program_id(1)            # reduction tile ("arbitrary", innermost)
    nk = pl.num_programs(1)
    is_user_tile = i < nu_tiles

    # f32 accumulation directly in the (resident-across-k) output blocks.
    @pl.when(k == 0)
    def _init():
        tem_ref[...] = jnp.zeros_like(tem_ref)
        hyp_ref[...] = jnp.zeros_like(hyp_ref)

    if x_resident:
        off = pl.multiple_of(k * tile, tile)
        x_blk = x_ref[pl.ds(off, tile), :]       # slice the VMEM-resident x
    else:
        x_blk = x_ref[...]                       # K-streamed fallback

    # main user-item GCN:  tem += adj_tile @ x_tile   (bf16 in, f32 accumulate)
    a = adj_ref[...]
    if quantized:
        a = a.astype(jnp.bfloat16)               # int8 is HBM format only
    tem_ref[...] += jnp.dot(a, x_blk, preferred_element_type=jnp.float32)

    # social GCN batched into the same grid step, only on user row/K tiles
    @pl.when(jnp.logical_and(is_user_tile, k < nu_tiles))
    def _social():
        s = soc_ref[...]
        if quantized:
            s = s.astype(jnp.bfloat16)
        hyp_ref[...] += jnp.dot(s, x_blk, preferred_element_type=jnp.float32)

    # epilogue: per-row dequant scale, LeakyReLU, residual add, fused running sum
    @pl.when(k == nk - 1)
    def _finalize():
        g = tem_ref[...]
        h = hyp_ref[...]
        if quantized:
            g = g * adj_s_ref[...]
            h = h * soc_s_ref[...]
        tem = jnp.where(g > 0, g, slope * g)
        hyp = jnp.where(h > 0, h, slope * h)     # exactly 0 on item / padding rows
        lat = tem + hyp
        tem_ref[...] = tem
        hyp_ref[...] = hyp
        lat_ref[...] = lat.astype(lat_ref.dtype)           # bf16, next-layer input
        sum_out_ref[...] = sum_ref[...] + lat               # fused sum(lats)


def fused_layer(adj_q, adj_s, soc_q, soc_s, x, sum_in, *, tile, nu_tiles, slope,
                x_resident, quantized, vmem_limit_bytes):
    """One fused SocialModel GNN layer on padded operands.

    adj_q: (NP, NP) int8/bf16, soc_q: (SU, SU) int8/bf16, x: (NP, Dp) bf16,
    sum_in: (NP, Dp) f32 running sum.  Returns (tem f32, hyp f32, lat bf16, sum f32),
    all (NP, Dp); sum output aliases the sum_in buffer.
    """
    NP, Dp = sum_in.shape
    SU = soc_q.shape[0]
    assert adj_q.shape == (NP, NP) and soc_q.shape == (SU, SU)
    assert x.shape == (NP, Dp) and adj_s.shape == (NP, 1) and soc_s.shape == (SU, 1)
    assert NP % tile == 0 and SU % tile == 0 and Dp % 128 == 0
    nm = NP // tile
    nk = NP // tile
    nu_t = nu_tiles
    assert 1 <= nu_t <= nm and nu_t == SU // tile

    def adj_map(i, k):
        return (i, k)

    def adj_s_map(i, k):
        return (i, 0)

    def soc_map(i, k):
        # Only consumed when (i < nu_t) & (k < nu_t); clamping keeps the DMA in
        # bounds and constant (hence mostly skipped) on non-user tiles.
        iu = jnp.minimum(i, nu_t - 1)
        ku = jnp.where(i < nu_t, jnp.minimum(k, nu_t - 1), 0)
        return (iu, ku)

    def soc_s_map(i, k):
        return (jnp.minimum(i, nu_t - 1), 0)

    def row_map(i, k):
        return (i, 0)

    if x_resident:
        # whole embedding matrix DMA'd once per layer and kept in VMEM
        x_spec = pl.BlockSpec((NP, Dp), lambda i, k: (0, 0))
    else:
        # large-graph fallback: stream a (tile, Dp) K slice per grid step
        x_spec = pl.BlockSpec((tile, Dp), lambda i, k: (k, 0))

    kern = functools.partial(_fused_layer_kernel, slope=slope, nu_tiles=nu_t,
                             tile=tile, x_resident=x_resident, quantized=quantized)

    adj_isz = jnp.dtype(adj_q.dtype).itemsize
    flops = 2 * NP * NP * Dp + 2 * SU * SU * Dp
    x_bytes = NP * Dp * 2 if x_resident else nm * NP * Dp * 2
    bytes_accessed = (NP * NP * adj_isz + SU * SU * adj_isz + x_bytes
                      + NP * Dp * 4                       # running-sum read
                      + NP * Dp * (4 + 4 + 2 + 4))        # tem, hyp, lat, sum writes

    out_shape = (jax.ShapeDtypeStruct((NP, Dp), jnp.float32),    # tem
                 jax.ShapeDtypeStruct((NP, Dp), jnp.float32),    # hyp (0 on item rows)
                 jax.ShapeDtypeStruct((NP, Dp), jnp.bfloat16),   # lat (next-layer x)
                 jax.ShapeDtypeStruct((NP, Dp), jnp.float32))    # running sum

    return pl.pallas_call(
        kern,
        out_shape=out_shape,
        grid_spec=pltpu.PrefetchScalarGridSpec(
            num_scalar_prefetch=0,
            grid=(nm, nk),
            in_specs=[
                pl.BlockSpec((tile, tile), adj_map),
                pl.BlockSpec((tile, 1), adj_s_map),
                pl.BlockSpec((tile, tile), soc_map),
                pl.BlockSpec((tile, 1), soc_s_map),
                x_spec,
                pl.BlockSpec((tile, Dp), row_map),        # previous running sum
            ],
            out_specs=[
                pl.BlockSpec((tile, Dp), row_map),
                pl.BlockSpec((tile, Dp), row_map),
                pl.BlockSpec((tile, Dp), row_map),
                pl.BlockSpec((tile, Dp), row_map),
            ],
        ),
        input_output_aliases={5: 3},                       # sum_in -> sum_out
        compiler_params=pltpu.CompilerParams(
            dimension_semantics=("parallel", "arbitrary"),
            vmem_limit_bytes=vmem_limit_bytes),
        cost_estimate=pl.CostEstimate(
            flops=flops, transcendentals=0, bytes_accessed=bytes_accessed),
    )(adj_q, adj_s, soc_q, soc_s, x, sum_in)


# --------------------------- parameter init -------------------------------------
def xavier_uniform(key, shape, dtype=jnp.float32):
    # matches torch.nn.init.xavier_uniform_ for a 2-D tensor
    fan_out, fan_in = shape
    bound = (6.0 / (fan_in + fan_out)) ** 0.5
    return jax.random.uniform(key, shape, dtype, minval=-bound, maxval=bound)


def init_params(key, n_user, n_item, latdim):
    ku, ki = jax.random.split(key)
    return {
        "uEmbeds": xavier_uniform(ku, (n_user, latdim)),
        "iEmbeds": xavier_uniform(ki, (n_item, latdim)),
    }


# ------------------------- shared pre-processing ---------------------------------
def _prepare(params, adj, social_adj, *, n_user, tile, quantize):
    """Pad + (optionally) int8-quantize the static operands once per forward."""
    n_item = params["iEmbeds"].shape[0]
    N = n_user + n_item
    D = params["uEmbeds"].shape[1]
    NP = _round_up(N, tile)
    SU = _round_up(n_user, tile)
    Dp = _round_up(D, 128)

    embeds = jnp.concatenate([params["uEmbeds"], params["iEmbeds"]], axis=0)
    x0 = jnp.pad(embeds, ((0, NP - N), (0, Dp - D))).astype(jnp.float32)
    adj_p = jnp.pad(adj.astype(jnp.float32), ((0, NP - N), (0, NP - N)))
    soc_p = jnp.pad(social_adj.astype(jnp.float32),
                    ((0, SU - n_user), (0, SU - n_user)))  # zero padding is required
    if quantize:
        adj_q, adj_s = _quantize_rows_int8(adj_p)
        soc_q, soc_s = _quantize_rows_int8(soc_p)
    else:
        adj_q, adj_s = adj_p.astype(jnp.bfloat16), jnp.ones((NP, 1), jnp.float32)
        soc_q, soc_s = soc_p.astype(jnp.bfloat16), jnp.ones((SU, 1), jnp.float32)
    return dict(N=N, D=D, NP=NP, SU=SU, Dp=Dp, x0=x0,
                adj_q=adj_q, adj_s=adj_s, soc_q=soc_q, soc_s=soc_s)


# ------------------------------ forward pass ------------------------------------
def social_model_forward(params, adj, social_adj, *, n_user, gnn_layer,
                         tile=None, quantize=True, x_resident=None, slope=LEAKY):
    """SocialModel.forward(adj, keepRate=1.0) via one fused Pallas kernel per layer."""
    T = _pick_tile(n_user + params["iEmbeds"].shape[0], tile)
    p = _prepare(params, adj, social_adj, n_user=n_user, tile=T, quantize=quantize)
    N, D, NP, SU, Dp = p["N"], p["D"], p["NP"], p["SU"], p["Dp"]
    nu_t = SU // T

    budget = _vmem_budget_bytes()
    if x_resident is None:
        x_resident = _resident_x_fits(
            NP, Dp, T, jnp.dtype(p["adj_q"].dtype).itemsize, budget)

    x = p["x0"].astype(jnp.bfloat16)      # bf16 layer input, fed back from the kernel
    running = p["x0"]                     # f32 running sum of lats (starts at embeds)
    tems, hyps = [], []
    for _ in range(gnn_layer):
        tem, hyp, lat, running = fused_layer(
            p["adj_q"], p["adj_s"], p["soc_q"], p["soc_s"], x, running,
            tile=T, nu_tiles=nu_t, slope=slope, x_resident=x_resident,
            quantized=quantize, vmem_limit_bytes=budget)
        tems.append(tem)
        hyps.append(hyp)
        x = lat                            # bf16 feed-forward, no wrapper cast pass

    # single un-padding slice pass after the layer loop
    out_embeds = running[:N, :D]
    gnn_lats = [t_[:N, :D] for t_ in tems]
    hyper_lats = [h[:n_user, :D] for h in hyps]
    return out_embeds, gnn_lats, hyper_lats


# -------------------------------- references -------------------------------------
def social_model_forward_ref_matched(params, adj, social_adj, *, n_user, gnn_layer,
                                     tile=None, quantize=True, slope=LEAKY):
    """Pure-JAX reference with the exact same padding / quantization / dtype contract."""
    T = _pick_tile(n_user + params["iEmbeds"].shape[0], tile)
    p = _prepare(params, adj, social_adj, n_user=n_user, tile=T, quantize=quantize)
    N, D, NP, SU, Dp = p["N"], p["D"], p["NP"], p["SU"], p["Dp"]

    def leaky(v):
        return jnp.where(v > 0, v, slope * v)

    def mm(q, s, xb):
        acc = jnp.dot(q.astype(jnp.bfloat16), xb, preferred_element_type=jnp.float32)
        return acc * s

    xb = p["x0"].astype(jnp.bfloat16)
    running = p["x0"]
    tems, hyps = [], []
    for _ in range(gnn_layer):
        tem = leaky(mm(p["adj_q"], p["adj_s"], xb))
        hyp_u = leaky(mm(p["soc_q"], p["soc_s"], xb[:SU]))
        hyp = jnp.concatenate([hyp_u, jnp.zeros((NP - SU, Dp), jnp.float32)], axis=0)
        lat = tem + hyp
        running = running + lat
        tems.append(tem)
        hyps.append(hyp)
        xb = lat.astype(jnp.bfloat16)
    return (running[:N, :D], [t_[:N, :D] for t_ in tems],
            [h[:n_user, :D] for h in hyps])


def social_model_forward_ref_f32(params, adj, social_adj, *, n_user, gnn_layer,
                                 slope=LEAKY):
    """Straight float32 reference matching the PyTorch module semantics."""
    def leaky(v):
        return jnp.where(v > 0, v, slope * v)

    embeds = jnp.concatenate([params["uEmbeds"], params["iEmbeds"]], axis=0)
    lats = [embeds]
    gnn, hyp = [], []
    for _ in range(gnn_layer):
        tem = leaky(adj @ lats[-1])
        hu = leaky(social_adj @ lats[-1][:n_user])
        gnn.append(tem)
        hyp.append(hu)
        lats.append(jnp.concatenate([tem[:n_user] + hu, tem[n_user:]], axis=0))
    return sum(lats), gnn, hyp


# ---------------------------------- main -----------------------------------------
if __name__ == "__main__":
    # ragged sizes on purpose: exercises tile padding and the user/item straddle tile
    n_user, n_item, latdim, gnn_layer = 192, 328, 128, 2
    N = n_user + n_item

    key = jax.random.PRNGKey(0)
    kp, ka, ks = jax.random.split(key, 3)
    params = init_params(kp, n_user, n_item, latdim)

    # deterministic synthetic (dense) adjacencies, row-normalized
    adj_raw = (jax.random.uniform(ka, (N, N)) < 0.05).astype(jnp.float32)
    adj = adj_raw / jnp.maximum(adj_raw.sum(axis=1, keepdims=True), 1.0)
    soc_raw = (jax.random.uniform(ks, (n_user, n_user)) < 0.05).astype(jnp.float32)
    social_adj = soc_raw / jnp.maximum(soc_raw.sum(axis=1, keepdims=True), 1.0)

    def check(out, ref, atol, rtol):
        o_e, o_g, o_h = out
        r_e, r_g, r_h = ref
        assert o_e.shape == (N, latdim)
        assert len(o_g) == gnn_layer and len(o_h) == gnn_layer
        assert jnp.allclose(o_e, r_e, atol=atol, rtol=rtol)
        for a, b in zip(o_g, r_g):
            assert a.shape == (N, latdim)
            assert jnp.allclose(a, b, atol=atol, rtol=rtol)
        for a, b in zip(o_h, r_h):
            assert a.shape == (n_user, latdim)
            assert jnp.allclose(a, b, atol=atol, rtol=rtol)

    # Config A (default / fast path): int8-compressed adjacency + VMEM-resident x.
    fwd_a = jax.jit(functools.partial(social_model_forward, n_user=n_user,
                                      gnn_layer=gnn_layer, quantize=True))
    out_a = fwd_a(params, adj, social_adj)
    jax.block_until_ready(out_a[0])
    ref_a = social_model_forward_ref_matched(params, adj, social_adj, n_user=n_user,
                                             gnn_layer=gnn_layer, quantize=True)
    check(out_a, ref_a, atol=1e-3, rtol=1e-2)       # exact-contract check
    ref_f32 = social_model_forward_ref_f32(params, adj, social_adj, n_user=n_user,
                                           gnn_layer=gnn_layer)
    check(out_a, ref_f32, atol=1e-2, rtol=5e-2)     # vs f32 PyTorch semantics

    # Config B (large-graph fallback path): bf16 adjacency + K-streamed x.
    fwd_b = jax.jit(functools.partial(social_model_forward, n_user=n_user,
                                      gnn_layer=gnn_layer, quantize=False,
                                      x_resident=False))
    out_b = fwd_b(params, adj, social_adj)
    jax.block_until_ready(out_b[0])
    ref_b = social_model_forward_ref_matched(params, adj, social_adj, n_user=n_user,
                                             gnn_layer=gnn_layer, quantize=False)
    check(out_b, ref_b, atol=1e-3, rtol=1e-2)

    print("KERNEL_OK")
</pallas_src>

<mosaic_0001>
module attributes {stable_mosaic.version = 11 : i64} {
  func.func @_fused_layer_kernel(%arg0: i32, %arg1: i32, %arg2: memref<128x128xi8, #tpu.memory_space<vmem>>, %arg3: memref<128x1xf32, #tpu.memory_space<vmem>>, %arg4: memref<128x128xi8, #tpu.memory_space<vmem>>, %arg5: memref<128x1xf32, #tpu.memory_space<vmem>>, %arg6: memref<640x128xbf16, #tpu.memory_space<vmem>>, %arg7: memref<128x128xf32, #tpu.memory_space<vmem>>, %arg8: memref<128x128xf32, #tpu.memory_space<vmem>>, %arg9: memref<128x128xf32, #tpu.memory_space<vmem>>, %arg10: memref<128x128xbf16, #tpu.memory_space<vmem>>, %arg11: memref<128x128xf32, #tpu.memory_space<vmem>>) attributes {dimension_semantics = [#tpu.dimension_semantics<parallel>, #tpu.dimension_semantics<arbitrary>], iteration_bounds = array<i64: 5, 5>, scalar_prefetch = 0 : i64, scratch_operands = 0 : i64, tpu.core_type = #tpu.core_type<tc>, window_params = [{transform_indices = @transform_0, window_bounds = array<i64: 128, 128>}, {transform_indices = @transform_1, window_bounds = array<i64: 128, 1>}, {transform_indices = @transform_2, window_bounds = array<i64: 128, 128>}, {transform_indices = @transform_3, window_bounds = array<i64: 128, 1>}, {pipeline_mode = #tpu.pipeline_mode<synchronous>, transform_indices = @transform_4, window_bounds = array<i64: 640, 128>}, {transform_indices = @transform_5, window_bounds = array<i64: 128, 128>}, {transform_indices = @transform_6, window_bounds = array<i64: 128, 128>}, {transform_indices = @transform_7, window_bounds = array<i64: 128, 128>}, {transform_indices = @transform_8, window_bounds = array<i64: 128, 128>}, {transform_indices = @transform_9, window_bounds = array<i64: 128, 128>}]} {
    %c2_i32 = arith.constant 2 : i32
    %0 = arith.cmpi slt, %arg0, %c2_i32 : i32
    %c0_i32 = arith.constant 0 : i32
    %1 = arith.cmpi eq, %arg1, %c0_i32 : i32
    %2 = arith.extui %1 : i1 to i32
    %c0_i32_0 = arith.constant 0 : i32
    %3 = arith.cmpi ne, %2, %c0_i32_0 : i32
    scf.if %3 {
      %cst_10 = arith.constant 0.000000e+00 : f32
      %21 = vector.broadcast %cst_10 : f32 to vector<128x128xf32>
      %c0_11 = arith.constant 0 : index
      %c0_12 = arith.constant 0 : index
      %22 = vector.load %arg8[%c0_11, %c0_12] : memref<128x128xf32, #tpu.memory_space<vmem>>, vector<128x128xf32>
      tpu.vector_store %arg8[%c0_11, %c0_12], %21 {strides = array<i32>} : memref<128x128xf32, #tpu.memory_space<vmem>>, vector<128x128xf32>,
      %cst_13 = arith.constant 0.000000e+00 : f32
      %23 = vector.broadcast %cst_13 : f32 to vector<128x128xf32>
      %c0_14 = arith.constant 0 : index
      %c0_15 = arith.constant 0 : index
      %24 = vector.load %arg9[%c0_14, %c0_15] : memref<128x128xf32, #tpu.memory_space<vmem>>, vector<128x128xf32>
      tpu.vector_store %arg9[%c0_14, %c0_15], %23 {strides = array<i32>} : memref<128x128xf32, #tpu.memory_space<vmem>>, vector<128x128xf32>,
    } else {
    }
    %c128_i32 = arith.constant 128 : i32
    %4 = arith.muli %arg1, %c128_i32 : i32
    %5 = tpu.assume_multiple %4, 128 : i32
    %6 = arith.index_cast %5 : i32 to index
    %c0 = arith.constant 0 : index
    %7 = vector.load %arg6[%6, %c0] : memref<640x128xbf16, #tpu.memory_space<vmem>>, vector<128x128xbf16>
    %c0_1 = arith.constant 0 : index
    %c0_2 = arith.constant 0 : index
    %8 = vector.load %arg2[%c0_1, %c0_2] : memref<128x128xi8, #tpu.memory_space<vmem>>, vector<128x128xi8>
    %9 = arith.sitofp %8 : vector<128x128xi8> to vector<128x128xbf16>
    %c0_3 = arith.constant 0 : index
    %c0_4 = arith.constant 0 : index
    %10 = vector.load %arg8[%c0_3, %c0_4] : memref<128x128xf32, #tpu.memory_space<vmem>>, vector<128x128xf32>
    %cst = arith.constant dense<0.000000e+00> : vector<128x128xf32>
    %11 = tpu.matmul %9, %7, %cst {dimension_numbers = #tpu.dot_dimension_numbers<[1], [0], [0], [1], [0, 0, 1, 1], [], []>} : vector<128x128xbf16>, vector<128x128xbf16>, vector<128x128xf32> -> vector<128x128xf32>
    %12 = arith.addf %10, %11 : vector<128x128xf32>
    %c0_5 = arith.constant 0 : index
    %c0_6 = arith.constant 0 : index
    %13 = vector.load %arg8[%c0_5, %c0_6] : memref<128x128xf32, #tpu.memory_space<vmem>>, vector<128x128xf32>
    tpu.vector_store %arg8[%c0_5, %c0_6], %12 {strides = array<i32>} : memref<128x128xf32, #tpu.memory_space<vmem>>, vector<128x128xf32>,
    %c2_i32_7 = arith.constant 2 : i32
    %14 = arith.cmpi slt, %arg1, %c2_i32_7 : i32
    %15 = arith.andi %0, %14 : i1
    %16 = arith.extui %15 : i1 to i32
    %c0_i32_8 = arith.constant 0 : i32
    %17 = arith.cmpi ne, %16, %c0_i32_8 : i32
    scf.if %17 {
      %c0_10 = arith.constant 0 : index
      %c0_11 = arith.constant 0 : index
      %21 = vector.load %arg4[%c0_10, %c0_11] : memref<128x128xi8, #tpu.memory_space<vmem>>, vector<128x128xi8>
      %22 = arith.sitofp %21 : vector<128x128xi8> to vector<128x128xbf16>
      %c0_12 = arith.constant 0 : index
      %c0_13 = arith.constant 0 : index
      %23 = vector.load %arg9[%c0_12, %c0_13] : memref<128x128xf32, #tpu.memory_space<vmem>>, vector<128x128xf32>
      %cst_14 = arith.constant dense<0.000000e+00> : vector<128x128xf32>
      %24 = tpu.matmul %22, %7, %cst_14 {dimension_numbers = #tpu.dot_dimension_numbers<[1], [0], [0], [1], [0, 0, 1, 1], [], []>} : vector<128x128xbf16>, vector<128x128xbf16>, vector<128x128xf32> -> vector<128x128xf32>
      %25 = arith.addf %23, %24 : vector<128x128xf32>
      %c0_15 = arith.constant 0 : index
      %c0_16 = arith.constant 0 : index
      %26 = vector.load %arg9[%c0_15, %c0_16] : memref<128x128xf32, #tpu.memory_space<vmem>>, vector<128x128xf32>
      tpu.vector_store %arg9[%c0_15, %c0_16], %25 {strides = array<i32>} : memref<128x128xf32, #tpu.memory_space<vmem>>, vector<128x128xf32>,
    } else {
    }
    %c4_i32 = arith.constant 4 : i32
    %18 = arith.cmpi eq, %arg1, %c4_i32 : i32
    %19 = arith.extui %18 : i1 to i32
    %c0_i32_9 = arith.constant 0 : i32
    %20 = arith.cmpi ne, %19, %c0_i32_9 : i32
    scf.if %20 {
      %c0_10 = arith.constant 0 : index
      %c0_11 = arith.constant 0 : index
      %21 = vector.load %arg8[%c0_10, %c0_11] : memref<128x128xf32, #tpu.memory_space<vmem>>, vector<128x128xf32>
      %c0_12 = arith.constant 0 : index
      %c0_13 = arith.constant 0 : index
      %22 = vector.load %arg9[%c0_12, %c0_13] : memref<128x128xf32, #tpu.memory_space<vmem>>, vector<128x128xf32>
      %c0_14 = arith.constant 0 : index
      %c0_15 = arith.constant 0 : index
      %23 = vector.load %arg3[%c0_14, %c0_15] : memref<128x1xf32, #tpu.memory_space<vmem>>, vector<128x1xf32>
      %24 = vector.broadcast %23 : vector<128x1xf32> to vector<128x128xf32>
      %25 = arith.mulf %21, %24 : vector<128x128xf32>
      %c0_16 = arith.constant 0 : index
      %c0_17 = arith.constant 0 : index
      %26 = vector.load %arg5[%c0_16, %c0_17] : memref<128x1xf32, #tpu.memory_space<vmem>>, vector<128x1xf32>
      %27 = vector.broadcast %26 : vector<128x1xf32> to vector<128x128xf32>
      %28 = arith.mulf %22, %27 : vector<128x128xf32>
      %cst_18 = arith.constant 0.000000e+00 : f32
      %29 = vector.broadcast %cst_18 : f32 to vector<128x128xf32>
      %30 = arith.cmpf ogt, %25, %29 : vector<128x128xf32>
      %cst_19 = arith.constant 5.000000e-01 : f32
      %31 = vector.broadcast %cst_19 : f32 to vector<128x128xf32>
      %32 = arith.mulf %31, %25 : vector<128x128xf32>
      %33 = arith.select %30, %25, %32 : vector<128x128xi1>, vector<128x128xf32>
      %cst_20 = arith.constant 0.000000e+00 : f32
      %34 = vector.broadcast %cst_20 : f32 to vector<128x128xf32>
      %35 = arith.cmpf ogt, %28, %34 : vector<128x128xf32>
      %cst_21 = arith.constant 5.000000e-01 : f32
      %36 = vector.broadcast %cst_21 : f32 to vector<128x128xf32>
      %37 = arith.mulf %36, %28 : vector<128x128xf32>
      %38 = arith.select %35, %28, %37 : vector<128x128xi1>, vector<128x128xf32>
      %39 = arith.addf %33, %38 : vector<128x128xf32>
      %c0_22 = arith.constant 0 : index
      %c0_23 = arith.constant 0 : index
      %40 = vector.load %arg8[%c0_22, %c0_23] : memref<128x128xf32, #tpu.memory_space<vmem>>, vector<128x128xf32>
      tpu.vector_store %arg8[%c0_22, %c0_23], %33 {strides = array<i32>} : memref<128x128xf32, #tpu.memory_space<vmem>>, vector<128x128xf32>,
      %c0_24 = arith.constant 0 : index
      %c0_25 = arith.constant 0 : index
      %41 = vector.load %arg9[%c0_24, %c0_25] : memref<128x128xf32, #tpu.memory_space<vmem>>, vector<128x128xf32>
      tpu.vector_store %arg9[%c0_24, %c0_25], %38 {strides = array<i32>} : memref<128x128xf32, #tpu.memory_space<vmem>>, vector<128x128xf32>,
      %42 = arith.truncf %39 : vector<128x128xf32> to vector<128x128xbf16>
      %c0_26 = arith.constant 0 : index
      %c0_27 = arith.constant 0 : index
      %43 = vector.load %arg10[%c0_26, %c0_27] : memref<128x128xbf16, #tpu.memory_space<vmem>>, vector<128x128xbf16>
      tpu.vector_store %arg10[%c0_26, %c0_27], %42 {strides = array<i32>} : memref<128x128xbf16, #tpu.memory_space<vmem>>, vector<128x128xbf16>,
      %c0_28 = arith.constant 0 : index
      %c0_29 = arith.constant 0 : index
      %44 = vector.load %arg7[%c0_28, %c0_29] : memref<128x128xf32, #tpu.memory_space<vmem>>, vector<128x128xf32>
      %45 = arith.addf %44, %39 : vector<128x128xf32>
      %c0_30 = arith.constant 0 : index
      %c0_31 = arith.constant 0 : index
      %46 = vector.load %arg11[%c0_30, %c0_31] : memref<128x128xf32, #tpu.memory_space<vmem>>, vector<128x128xf32>
      tpu.vector_store %arg11[%c0_30, %c0_31], %45 {strides = array<i32>} : memref<128x128xf32, #tpu.memory_space<vmem>>, vector<128x128xf32>,
    } else {
    }
    return
  }
  func.func @transform_0(%arg0: i32, %arg1: i32) -> (i32, i32) {
    %c0_i32 = arith.constant 0 : i32
    return %arg0, %arg1 : i32, i32
  }
  func.func @transform_1(%arg0: i32, %arg1: i32) -> (i32, i32) {
    %c0_i32 = arith.constant 0 : i32
    %c0_i32_0 = arith.constant 0 : i32
    return %arg0, %c0_i32 : i32, i32
  }
  func.func @transform_2(%arg0: i32, %arg1: i32) -> (i32, i32) {
    %c1_i32 = arith.constant 1 : i32
    %0 = arith.minsi %arg0, %c1_i32 : i32
    %c2_i32 = arith.constant 2 : i32
    %1 = arith.cmpi slt, %arg0, %c2_i32 : i32
    %c1_i32_0 = arith.constant 1 : i32
    %2 = arith.minsi %arg1, %c1_i32_0 : i32
    %c0_i32 = arith.constant 0 : i32
    %3 = arith.select %1, %2, %c0_i32 : i32
    %c0_i32_1 = arith.constant 0 : i32
    return %0, %3 : i32, i32
  }
  func.func @transform_3(%arg0: i32, %arg1: i32) -> (i32, i32) {
    %c1_i32 = arith.constant 1 : i32
    %0 = arith.minsi %arg0, %c1_i32 : i32
    %c0_i32 = arith.constant 0 : i32
    %c0_i32_0 = arith.constant 0 : i32
    return %0, %c0_i32 : i32, i32
  }
  func.func @transform_4(%arg0: i32, %arg1: i32) -> (i32, i32) {
    %c0_i32 = arith.constant 0 : i32
    %c0_i32_0 = arith.constant 0 : i32
    %c0_i32_1 = arith.constant 0 : i32
    return %c0_i32, %c0_i32_0 : i32, i32
  }
  func.func @transform_5(%arg0: i32, %arg1: i32) -> (i32, i32) {
    %c0_i32 = arith.constant 0 : i32
    %c0_i32_0 = arith.constant 0 : i32
    return %arg0, %c0_i32 : i32, i32
  }
  func.func @transform_6(%arg0: i32, %arg1: i32) -> (i32, i32) {
    %c0_i32 = arith.constant 0 : i32
    %c0_i32_0 = arith.constant 0 : i32
    return %arg0, %c0_i32 : i32, i32
  }
  func.func @transform_7(%arg0: i32, %arg1: i32) -> (i32, i32) {
    %c0_i32 = arith.constant 0 : i32
    %c0_i32_0 = arith.constant 0 : i32
    return %arg0, %c0_i32 : i32, i32
  }
  func.func @transform_8(%arg0: i32, %arg1: i32) -> (i32, i32) {
    %c0_i32 = arith.constant 0 : i32
    %c0_i32_0 = arith.constant 0 : i32
    return %arg0, %c0_i32 : i32, i32
  }
  func.func @transform_9(%arg0: i32, %arg1: i32) -> (i32, i32) {
    %c0_i32 = arith.constant 0 : i32
    %c0_i32_0 = arith.constant 0 : i32
    return %arg0, %c0_i32 : i32, i32
  }
}

module attributes {stable_mosaic.version = 11 : i64} {
  func.func @_fused_layer_kernel(%arg0: i32, %arg1: i32, %arg2: memref<128x128xi8, #tpu.memory_space<vmem>>, %arg3: memref<128x1xf32, #tpu.memory_space<vmem>>, %arg4: memref<128x128xi8, #tpu.memory_space<vmem>>, %arg5: memref<128x1xf32, #tpu.memory_space<vmem>>, %arg6: memref<640x128xbf16, #tpu.memory_space<vmem>>, %arg7: memref<128x128xf32, #tpu.memory_space<vmem>>, %arg8: memref<128x128xf32, #tpu.memory_space<vmem>>, %arg9: memref<128x128xf32, #tpu.memory_space<vmem>>, %arg10: memref<128x128xbf16, #tpu.memory_space<vmem>>, %arg11: memref<128x128xf32, #tpu.memory_space<vmem>>) attributes {dimension_semantics = [#tpu.dimension_semantics<parallel>, #tpu.dimension_semantics<arbitrary>], iteration_bounds = array<i64: 5, 5>, scalar_prefetch = 0 : i64, scratch_operands = 0 : i64, tpu.core_type = #tpu.core_type<tc>, window_params = [{transform_indices = @transform_0, window_bounds = array<i64: 128, 128>}, {transform_indices = @transform_1, window_bounds = array<i64: 128, 1>}, {transform_indices = @transform_2, window_bounds = array<i64: 128, 128>}, {transform_indices = @transform_3, window_bounds = array<i64: 128, 1>}, {pipeline_mode = #tpu.pipeline_mode<synchronous>, transform_indices = @transform_4, window_bounds = array<i64: 640, 128>}, {transform_indices = @transform_5, window_bounds = array<i64: 128, 128>}, {transform_indices = @transform_6, window_bounds = array<i64: 128, 128>}, {transform_indices = @transform_7, window_bounds = array<i64: 128, 128>}, {transform_indices = @transform_8, window_bounds = array<i64: 128, 128>}, {transform_indices = @transform_9, window_bounds = array<i64: 128, 128>}]} {
    %c2_i32 = arith.constant 2 : i32
    %0 = arith.cmpi slt, %arg0, %c2_i32 : i32
    %c0_i32 = arith.constant 0 : i32
    %1 = arith.cmpi eq, %arg1, %c0_i32 : i32
    %2 = arith.extui %1 : i1 to i32
    %c0_i32_0 = arith.constant 0 : i32
    %3 = arith.cmpi ne, %2, %c0_i32_0 : i32
    scf.if %3 {
      %cst_10 = arith.constant 0.000000e+00 : f32
      %21 = vector.broadcast %cst_10 : f32 to vector<128x128xf32>
      %c0_11 = arith.constant 0 : index
      %c0_12 = arith.constant 0 : index
      %22 = vector.load %arg8[%c0_11, %c0_12] : memref<128x128xf32, #tpu.memory_space<vmem>>, vector<128x128xf32>
      tpu.vector_store %arg8[%c0_11, %c0_12], %21 {strides = array<i32>} : memref<128x128xf32, #tpu.memory_space<vmem>>, vector<128x128xf32>,
      %cst_13 = arith.constant 0.000000e+00 : f32
      %23 = vector.broadcast %cst_13 : f32 to vector<128x128xf32>
      %c0_14 = arith.constant 0 : index
      %c0_15 = arith.constant 0 : index
      %24 = vector.load %arg9[%c0_14, %c0_15] : memref<128x128xf32, #tpu.memory_space<vmem>>, vector<128x128xf32>
      tpu.vector_store %arg9[%c0_14, %c0_15], %23 {strides = array<i32>} : memref<128x128xf32, #tpu.memory_space<vmem>>, vector<128x128xf32>,
    } else {
    }
    %c128_i32 = arith.constant 128 : i32
    %4 = arith.muli %arg1, %c128_i32 : i32
    %5 = tpu.assume_multiple %4, 128 : i32
    %6 = arith.index_cast %5 : i32 to index
    %c0 = arith.constant 0 : index
    %7 = vector.load %arg6[%6, %c0] : memref<640x128xbf16, #tpu.memory_space<vmem>>, vector<128x128xbf16>
    %c0_1 = arith.constant 0 : index
    %c0_2 = arith.constant 0 : index
    %8 = vector.load %arg2[%c0_1, %c0_2] : memref<128x128xi8, #tpu.memory_space<vmem>>, vector<128x128xi8>
    %9 = arith.sitofp %8 : vector<128x128xi8> to vector<128x128xbf16>
    %c0_3 = arith.constant 0 : index
    %c0_4 = arith.constant 0 : index
    %10 = vector.load %arg8[%c0_3, %c0_4] : memref<128x128xf32, #tpu.memory_space<vmem>>, vector<128x128xf32>
    %cst = arith.constant dense<0.000000e+00> : vector<128x128xf32>
    %11 = tpu.matmul %9, %7, %cst {dimension_numbers = #tpu.dot_dimension_numbers<[1], [0], [0], [1], [0, 0, 1, 1], [], []>} : vector<128x128xbf16>, vector<128x128xbf16>, vector<128x128xf32> -> vector<128x128xf32>
    %12 = arith.addf %10, %11 : vector<128x128xf32>
    %c0_5 = arith.constant 0 : index
    %c0_6 = arith.constant 0 : index
    %13 = vector.load %arg8[%c0_5, %c0_6] : memref<128x128xf32, #tpu.memory_space<vmem>>, vector<128x128xf32>
    tpu.vector_store %arg8[%c0_5, %c0_6], %12 {strides = array<i32>} : memref<128x128xf32, #tpu.memory_space<vmem>>, vector<128x128xf32>,
    %c2_i32_7 = arith.constant 2 : i32
    %14 = arith.cmpi slt, %arg1, %c2_i32_7 : i32
    %15 = arith.andi %0, %14 : i1
    %16 = arith.extui %15 : i1 to i32
    %c0_i32_8 = arith.constant 0 : i32
    %17 = arith.cmpi ne, %16, %c0_i32_8 : i32
    scf.if %17 {
      %c0_10 = arith.constant 0 : index
      %c0_11 = arith.constant 0 : index
      %21 = vector.load %arg4[%c0_10, %c0_11] : memref<128x128xi8, #tpu.memory_space<vmem>>, vector<128x128xi8>
      %22 = arith.sitofp %21 : vector<128x128xi8> to vector<128x128xbf16>
      %c0_12 = arith.constant 0 : index
      %c0_13 = arith.constant 0 : index
      %23 = vector.load %arg9[%c0_12, %c0_13] : memref<128x128xf32, #tpu.memory_space<vmem>>, vector<128x128xf32>
      %cst_14 = arith.constant dense<0.000000e+00> : vector<128x128xf32>
      %24 = tpu.matmul %22, %7, %cst_14 {dimension_numbers = #tpu.dot_dimension_numbers<[1], [0], [0], [1], [0, 0, 1, 1], [], []>} : vector<128x128xbf16>, vector<128x128xbf16>, vector<128x128xf32> -> vector<128x128xf32>
      %25 = arith.addf %23, %24 : vector<128x128xf32>
      %c0_15 = arith.constant 0 : index
      %c0_16 = arith.constant 0 : index
      %26 = vector.load %arg9[%c0_15, %c0_16] : memref<128x128xf32, #tpu.memory_space<vmem>>, vector<128x128xf32>
      tpu.vector_store %arg9[%c0_15, %c0_16], %25 {strides = array<i32>} : memref<128x128xf32, #tpu.memory_space<vmem>>, vector<128x128xf32>,
    } else {
    }
    %c4_i32 = arith.constant 4 : i32
    %18 = arith.cmpi eq, %arg1, %c4_i32 : i32
    %19 = arith.extui %18 : i1 to i32
    %c0_i32_9 = arith.constant 0 : i32
    %20 = arith.cmpi ne, %19, %c0_i32_9 : i32
    scf.if %20 {
      %c0_10 = arith.constant 0 : index
      %c0_11 = arith.constant 0 : index
      %21 = vector.load %arg8[%c0_10, %c0_11] : memref<128x128xf32, #tpu.memory_space<vmem>>, vector<128x128xf32>
      %c0_12 = arith.constant 0 : index
      %c0_13 = arith.constant 0 : index
      %22 = vector.load %arg9[%c0_12, %c0_13] : memref<128x128xf32, #tpu.memory_space<vmem>>, vector<128x128xf32>
      %c0_14 = arith.constant 0 : index
      %c0_15 = arith.constant 0 : index
      %23 = vector.load %arg3[%c0_14, %c0_15] : memref<128x1xf32, #tpu.memory_space<vmem>>, vector<128x1xf32>
      %24 = vector.broadcast %23 : vector<128x1xf32> to vector<128x128xf32>
      %25 = arith.mulf %21, %24 : vector<128x128xf32>
      %c0_16 = arith.constant 0 : index
      %c0_17 = arith.constant 0 : index
      %26 = vector.load %arg5[%c0_16, %c0_17] : memref<128x1xf32, #tpu.memory_space<vmem>>, vector<128x1xf32>
      %27 = vector.broadcast %26 : vector<128x1xf32> to vector<128x128xf32>
      %28 = arith.mulf %22, %27 : vector<128x128xf32>
      %cst_18 = arith.constant 0.000000e+00 : f32
      %29 = vector.broadcast %cst_18 : f32 to vector<128x128xf32>
      %30 = arith.cmpf ogt, %25, %29 : vector<128x128xf32>
      %cst_19 = arith.constant 5.000000e-01 : f32
      %31 = vector.broadcast %cst_19 : f32 to vector<128x128xf32>
      %32 = arith.mulf %31, %25 : vector<128x128xf32>
      %33 = arith.select %30, %25, %32 : vector<128x128xi1>, vector<128x128xf32>
      %cst_20 = arith.constant 0.000000e+00 : f32
      %34 = vector.broadcast %cst_20 : f32 to vector<128x128xf32>
      %35 = arith.cmpf ogt, %28, %34 : vector<128x128xf32>
      %cst_21 = arith.constant 5.000000e-01 : f32
      %36 = vector.broadcast %cst_21 : f32 to vector<128x128xf32>
      %37 = arith.mulf %36, %28 : vector<128x128xf32>
      %38 = arith.select %35, %28, %37 : vector<128x128xi1>, vector<128x128xf32>
      %39 = arith.addf %33, %38 : vector<128x128xf32>
      %c0_22 = arith.constant 0 : index
      %c0_23 = arith.constant 0 : index
      %40 = vector.load %arg8[%c0_22, %c0_23] : memref<128x128xf32, #tpu.memory_space<vmem>>, vector<128x128xf32>
      tpu.vector_store %arg8[%c0_22, %c0_23], %33 {strides = array<i32>} : memref<128x128xf32, #tpu.memory_space<vmem>>, vector<128x128xf32>,
      %c0_24 = arith.constant 0 : index
      %c0_25 = arith.constant 0 : index
      %41 = vector.load %arg9[%c0_24, %c0_25] : memref<128x128xf32, #tpu.memory_space<vmem>>, vector<128x128xf32>
      tpu.vector_store %arg9[%c0_24, %c0_25], %38 {strides = array<i32>} : memref<128x128xf32, #tpu.memory_space<vmem>>, vector<128x128xf32>,
      %42 = arith.truncf %39 : vector<128x128xf32> to vector<128x128xbf16>
      %c0_26 = arith.constant 0 : index
      %c0_27 = arith.constant 0 : index
      %43 = vector.load %arg10[%c0_26, %c0_27] : memref<128x128xbf16, #tpu.memory_space<vmem>>, vector<128x128xbf16>
      tpu.vector_store %arg10[%c0_26, %c0_27], %42 {strides = array<i32>} : memref<128x128xbf16, #tpu.memory_space<vmem>>, vector<128x128xbf16>,
      %c0_28 = arith.constant 0 : index
      %c0_29 = arith.constant 0 : index
      %44 = vector.load %arg7[%c0_28, %c0_29] : memref<128x128xf32, #tpu.memory_space<vmem>>, vector<128x128xf32>
      %45 = arith.addf %44, %39 : vector<128x128xf32>
      %c0_30 = arith.constant 0 : index
      %c0_31 = arith.constant 0 : index
      %46 = vector.load %arg11[%c0_30, %c0_31] : memref<128x128xf32, #tpu.memory_space<vmem>>, vector<128x128xf32>
      tpu.vector_store %arg11[%c0_30, %c0_31], %45 {strides = array<i32>} : memref<128x128xf32, #tpu.memory_space<vmem>>, vector<128x128xf32>,
    } else {
    }
    return
  }
  func.func @transform_0(%arg0: i32, %arg1: i32) -> (i32, i32) {
    %c0_i32 = arith.constant 0 : i32
    return %arg0, %arg1 : i32, i32
  }
  func.func @transform_1(%arg0: i32, %arg1: i32) -> (i32, i32) {
    %c0_i32 = arith.constant 0 : i32
    %c0_i32_0 = arith.constant 0 : i32
    return %arg0, %c0_i32 : i32, i32
  }
  func.func @transform_2(%arg0: i32, %arg1: i32) -> (i32, i32) {
    %c1_i32 = arith.constant 1 : i32
    %0 = arith.minsi %arg0, %c1_i32 : i32
    %c2_i32 = arith.constant 2 : i32
    %1 = arith.cmpi slt, %arg0, %c2_i32 : i32
    %c1_i32_0 = arith.constant 1 : i32
    %2 = arith.minsi %arg1, %c1_i32_0 : i32
    %c0_i32 = arith.constant 0 : i32
    %3 = arith.select %1, %2, %c0_i32 : i32
    %c0_i32_1 = arith.constant 0 : i32
    return %0, %3 : i32, i32
  }
  func.func @transform_3(%arg0: i32, %arg1: i32) -> (i32, i32) {
    %c1_i32 = arith.constant 1 : i32
    %0 = arith.minsi %arg0, %c1_i32 : i32
    %c0_i32 = arith.constant 0 : i32
    %c0_i32_0 = arith.constant 0 : i32
    return %0, %c0_i32 : i32, i32
  }
  func.func @transform_4(%arg0: i32, %arg1: i32) -> (i32, i32) {
    %c0_i32 = arith.constant 0 : i32
    %c0_i32_0 = arith.constant 0 : i32
    %c0_i32_1 = arith.constant 0 : i32
    return %c0_i32, %c0_i32_0 : i32, i32
  }
  func.func @transform_5(%arg0: i32, %arg1: i32) -> (i32, i32) {
    %c0_i32 = arith.constant 0 : i32
    %c0_i32_0 = arith.constant 0 : i32
    return %arg0, %c0_i32 : i32, i32
  }
  func.func @transform_6(%arg0: i32, %arg1: i32) -> (i32, i32) {
    %c0_i32 = arith.constant 0 : i32
    %c0_i32_0 = arith.constant 0 : i32
    return %arg0, %c0_i32 : i32, i32
  }
  func.func @transform_7(%arg0: i32, %arg1: i32) -> (i32, i32) {
    %c0_i32 = arith.constant 0 : i32
    %c0_i32_0 = arith.constant 0 : i32
    return %arg0, %c0_i32 : i32, i32
  }
  func.func @transform_8(%arg0: i32, %arg1: i32) -> (i32, i32) {
    %c0_i32 = arith.constant 0 : i32
    %c0_i32_0 = arith.constant 0 : i32
    return %arg0, %c0_i32 : i32, i32
  }
  func.func @transform_9(%arg0: i32, %arg1: i32) -> (i32, i32) {
    %c0_i32 = arith.constant 0 : i32
    %c0_i32_0 = arith.constant 0 : i32
    return %arg0, %c0_i32 : i32, i32
  }
}

</mosaic_0001>

<llo_original>
// kernel: social_model_forward.2
$region0: #{social_model_forward.2}
  #allocation0 [shape = 'u32[]', space=smem, size = 0x4, offset = 0x4, fixed_abs, tag = 'smem constant byte address 0x4 - core index']
  #allocation1 [shape = 'u32[72,128]{1,0:T(1,128)}', space=vmem, size = 0x9000, scoped, tag = 'internal scratch']
  %s0 = inlined_call_operand.vmem [shape: s8[640,640], index: 0, kind: input, shape index: {}]
  %s1 = inlined_call_operand.vmem [shape: f32[640,1], index: 1, kind: input, shape index: {}]
  %s2 = inlined_call_operand.vmem [shape: s8[256,256], index: 2, kind: input, shape index: {}]
  %s3 = inlined_call_operand.vmem [shape: f32[256,1], index: 3, kind: input, shape index: {}]
  %s4 = inlined_call_operand.vmem [shape: bf16[640,128], index: 4, kind: input, shape index: {}]
  %s5 = inlined_call_operand.vmem [shape: f32[640,128], index: 5, kind: input, shape index: {}, may-alias: {5,9}]
  %s6 = inlined_call_operand.vmem [shape: f32[640,128], index: 6, kind: output, shape index: {0}]
  %s7 = inlined_call_operand.vmem [shape: f32[640,128], index: 7, kind: output, shape index: {1}]
  %s8 = inlined_call_operand.vmem [shape: bf16[640,128], index: 8, kind: output, shape index: {2}]
  %s9 = inlined_call_operand.vmem [shape: f32[640,128], index: 9, kind: output, shape index: {3}, may-alias: {5,9}]
  %10 = xla_tuple %s6, %s7, %s8, %s9
  %s11 = sld [smem:[#allocation0]]
  $region169: #{social_model_forward.2} parent=0
    _
  %s13 = ssub.s32 1, %s11
  %s14 = scalar_select 0, %s13, %s11
  $region1: #{social_model_forward.2} parent=0
    #allocation2 [shape = 'u8[32768]{0}', space=vmem, size = 0x8000, scoped, tag = 'input window, operand 0']
    #allocation3 [shape = 'u8[32768]{0}', space=vmem, size = 0x8000, scoped, tag = 'input window, operand 2']
    loop: start=0, step=1, limit=27
    $region2: #{social_model_forward.2} parent=1 // loop_pre_header
      _
    $region3: #{social_model_forward.2} parent=1 // loop_header
      %s16 = sphi 0, %s20
      %p17 = scmp.ge.s32.totalorder %s16, 27
      %s23 = sphi 0, %s35
      %s24 = sphi 0, %s31
      %s25 = sphi 0, %s23
      %s26 = sphi 0, %s24
      %s27 = sphi 0, %s25
      %s28 = sphi 0, %s26
      %s40 = sphi 0, %s42
      %s43 = sphi 0, %s40
      %s44 = sphi 0, %s43
      %s60 = sphi 0, %s44
      %s66 = sphi 0, %s68
      %s69 = sphi 0, %s66
      %s70 = sphi 0, %s69
      %s86 = sphi 0, %s70
      %s106 = sphi 0, %s108
      %s109 = sphi 0, %s106
      %s110 = sphi 0, %s109
      %s126 = sphi 0, %s110
      %s136 = sphi 0, %s138
      %s139 = sphi 0, %s136
      %s140 = sphi 0, %s139
      %s156 = sphi 0, %s140
      %s160 = sphi 0, %s160
      %s162 = sphi 0, %s160
      %s163 = sphi 0, %s162
      %s177 = sphi 0, %s163
      %s183 = sphi 0, %s185
      %s186 = sphi 0, %s183
      %s187 = sphi 0, %s186
      %s203 = sphi 0, %s187
      %s209 = sphi 0, %s211
      %s212 = sphi 0, %s209
      %s213 = sphi 0, %s212
      %s229 = sphi 0, %s213
      %s235 = sphi 0, %s237
      %s238 = sphi 0, %s235
      %s239 = sphi 0, %s238
      %s255 = sphi 0, %s239
      %s261 = sphi 0, %s263
      %s264 = sphi 0, %s261
      %s265 = sphi 0, %s264
      %s281 = sphi 0, %s265
      %s287 = sphi 0, %s289
      %s290 = sphi 0, %s287
      %s291 = sphi 0, %s290
      %s307 = sphi 0, %s291
    $region4: #{social_model_forward.2} parent=1 // loop_header_branch
      %19 = sbr.rel (%p17) target = $region8
    $region5: #{social_model_forward.2} parent=1 // loop_body
      %s21 = ssub.s32 %s16, 1
      %s22 = ssub.s32 %s16, 2
      %s29 = sadd.s32 1, %s24
      %p30 = scmp.ge.s32.totalorder %s29, 5
      %s31 = scalar_select %p30, 0, %s29
      %s32 = sadd.s32 1, %s23
      %s33 = scalar_select %p30, %s32, %s23
      %p34 = scmp.ge.s32.totalorder %s33, 5
      %s35 = scalar_select %p34, 0, %s33
      %s36 = ssub.s32 %s23, %s35
      %s37 = ssub.s32 %s24, %s31
      %s38 = sor.u32 %s36, %s37
      %p39 = scmp.eq.s32.totalorder %s38, 0
      %s41 = sadd.s32 %s40, 1
      %s42 = scalar_select %p39, %s40, %s41
      %p45 = pneg %p39
      %p46 = scmp.eq.s32.totalorder %s16, 24
      %p47 = por %p45, %p46
      %p48 = scmp.ne.s32.totalorder %s40, %s43
      %p49 = scmp.eq.s32.totalorder %s16, 0
      %p50 = por %p48, %p49
      %p51 = scmp.ne.s32.totalorder %s40, %s43
      %p52 = scmp.eq.s32.totalorder %s21, 24
      %p53 = por %p51, %p52
      %p54 = scmp.ne.s32.totalorder %s43, %s44
      %p55 = scmp.eq.s32.totalorder %s21, 0
      %p56 = por %p54, %p55
      %p57 = scmp.ne.s32.totalorder %s43, %s44
      %p58 = scmp.eq.s32.totalorder %s22, 24
      %p59 = por %p57, %p58
      %p61 = scmp.ne.s32.totalorder %s44, %s60
      %p62 = scmp.eq.s32.totalorder %s22, 0
      %p63 = por %p61, %p62
      %s64 = ssub.s32 %s23, %s35
      %p65 = scmp.eq.s32.totalorder %s64, 0
      %s67 = sadd.s32 %s66, 1
      %s68 = scalar_select %p65, %s66, %s67
      %p71 = pneg %p65
      %p72 = scmp.eq.s32.totalorder %s16, 24
      %p73 = por %p71, %p72
      %p74 = scmp.ne.s32.totalorder %s66, %s69
      %p75 = scmp.eq.s32.totalorder %s16, 0
      %p76 = por %p74, %p75
      %p77 = scmp.ne.s32.totalorder %s66, %s69
      %p78 = scmp.eq.s32.totalorder %s21, 24
      %p79 = por %p77, %p78
      %p80 = scmp.ne.s32.totalorder %s69, %s70
      %p81 = scmp.eq.s32.totalorder %s21, 0
      %p82 = por %p80, %p81
      %p83 = scmp.ne.s32.totalorder %s69, %s70
      %p84 = scmp.eq.s32.totalorder %s22, 24
      %p85 = por %p83, %p84
      %p87 = scmp.ne.s32.totalorder %s70, %s86
      %p88 = scmp.eq.s32.totalorder %s22, 0
      %p89 = por %p87, %p88
      %p90 = scmp.lt.s32.totalorder %s23, 1
      %s91 = scalar_select %p90, %s23, 1
      %p92 = scmp.lt.s32.totalorder %s23, 2
      %p93 = scmp.lt.s32.totalorder %s24, 1
      %s94 = scalar_select %p93, %s24, 1
      %s95 = scalar_select %p92, %s94, 0
      %p96 = scmp.lt.s32.totalorder %s35, 1
      %s97 = scalar_select %p96, %s35, 1
      %p98 = scmp.lt.s32.totalorder %s35, 2
      %p99 = scmp.lt.s32.totalorder %s31, 1
      %s100 = scalar_select %p99, %s31, 1
      %s101 = scalar_select %p98, %s100, 0
      %s102 = ssub.s32 %s91, %s97
      %s103 = ssub.s32 %s95, %s101
      %s104 = sor.u32 %s102, %s103
      %p105 = scmp.eq.s32.totalorder %s104, 0
      %s107 = sadd.s32 %s106, 1
      %s108 = scalar_select %p105, %s106, %s107
      %p111 = pneg %p105
      %p112 = scmp.eq.s32.totalorder %s16, 24
      %p113 = por %p111, %p112
      %p114 = scmp.ne.s32.totalorder %s106, %s109
      %p115 = scmp.eq.s32.totalorder %s16, 0
      %p116 = por %p114, %p115
      %p117 = scmp.ne.s32.totalorder %s106, %s109
      %p118 = scmp.eq.s32.totalorder %s21, 24
      %p119 = por %p117, %p118
      %p120 = scmp.ne.s32.totalorder %s109, %s110
      %p121 = scmp.eq.s32.totalorder %s21, 0
      %p122 = por %p120, %p121
      %p123 = scmp.ne.s32.totalorder %s109, %s110
      %p124 = scmp.eq.s32.totalorder %s22, 24
      %p125 = por %p123, %p124
      %p127 = scmp.ne.s32.totalorder %s110, %s126
      %p128 = scmp.eq.s32.totalorder %s22, 0
      %p129 = por %p127, %p128
      %p130 = scmp.lt.s32.totalorder %s23, 1
      %s131 = scalar_select %p130, %s23, 1
      %p132 = scmp.lt.s32.totalorder %s35, 1
      %s133 = scalar_select %p132, %s35, 1
      %s134 = ssub.s32 %s131, %s133
      %p135 = scmp.eq.s32.totalorder %s134, 0
      %s137 = sadd.s32 %s136, 1
      %s138 = scalar_select %p135, %s136, %s137
      %p141 = pneg %p135
      %p142 = scmp.eq.s32.totalorder %s16, 24
      %p143 = por %p141, %p142
      %p144 = scmp.ne.s32.totalorder %s136, %s139
      %p145 = scmp.eq.s32.totalorder %s16, 0
      %p146 = por %p144, %p145
      %p147 = scmp.ne.s32.totalorder %s136, %s139
      %p148 = scmp.eq.s32.totalorder %s21, 24
      %p149 = por %p147, %p148
      %p150 = scmp.ne.s32.totalorder %s139, %s140
      %p151 = scmp.eq.s32.totalorder %s21, 0
      %p152 = por %p150, %p151
      %p153 = scmp.ne.s32.totalorder %s139, %s140
      %p154 = scmp.eq.s32.totalorder %s22, 24
      %p155 = por %p153, %p154
      %p157 = scmp.ne.s32.totalorder %s140, %s156
      %p158 = scmp.eq.s32.totalorder %s22, 0
      %p159 = por %p157, %p158
      %s161 = sadd.s32 %s160, 1
      %p164 = scmp.eq.s32.totalorder %s16, 24
      %p165 = scmp.ne.s32.totalorder %s160, %s162
      %p166 = scmp.eq.s32.totalorder %s16, 0
      %p167 = por %p165, %p166
      %p168 = scmp.ne.s32.totalorder %s160, %s162
      %p169 = scmp.eq.s32.totalorder %s21, 24
      %p170 = por %p168, %p169
      %p171 = scmp.ne.s32.totalorder %s162, %s163
      %p172 = scmp.eq.s32.totalorder %s21, 0
      %p173 = por %p171, %p172
      %p174 = scmp.ne.s32.totalorder %s162, %s163
      %p175 = scmp.eq.s32.totalorder %s22, 24
      %p176 = por %p174, %p175
      %p178 = scmp.ne.s32.totalorder %s163, %s177
      %p179 = scmp.eq.s32.totalorder %s22, 0
      %p180 = por %p178, %p179
      %s181 = ssub.s32 %s23, %s35
      %p182 = scmp.eq.s32.totalorder %s181, 0
      %s184 = sadd.s32 %s183, 1
      %s185 = scalar_select %p182, %s183, %s184
      %p188 = pneg %p182
      %p189 = scmp.eq.s32.totalorder %s16, 24
      %p190 = por %p188, %p189
      %p191 = scmp.ne.s32.totalorder %s183, %s186
      %p192 = scmp.eq.s32.totalorder %s16, 0
      %p193 = por %p191, %p192
      %p194 = scmp.ne.s32.totalorder %s183, %s186
      %p195 = scmp.eq.s32.totalorder %s21, 24
      %p196 = por %p194, %p195
      %p197 = scmp.ne.s32.totalorder %s186, %s187
      %p198 = scmp.eq.s32.totalorder %s21, 0
      %p199 = por %p197, %p198
      %p200 = scmp.ne.s32.totalorder %s186, %s187
      %p201 = scmp.eq.s32.totalorder %s22, 24
      %p202 = por %p200, %p201
      %p204 = scmp.ne.s32.totalorder %s187, %s203
      %p205 = scmp.eq.s32.totalorder %s22, 0
      %p206 = por %p204, %p205
      %s207 = ssub.s32 %s23, %s35
      %p208 = scmp.eq.s32.totalorder %s207, 0
      %s210 = sadd.s32 %s209, 1
      %s211 = scalar_select %p208, %s209, %s210
      %p214 = pneg %p208
      %p215 = scmp.eq.s32.totalorder %s16, 24
      %p216 = por %p214, %p215
      %p217 = scmp.ne.s32.totalorder %s209, %s212
      %p218 = scmp.eq.s32.totalorder %s16, 0
      %p219 = por %p217, %p218
      %p220 = scmp.ne.s32.totalorder %s209, %s212
      %p221 = scmp.eq.s32.totalorder %s21, 24
      %p222 = por %p220, %p221
      %p223 = scmp.ne.s32.totalorder %s212, %s213
      %p224 = scmp.eq.s32.totalorder %s21, 0
      %p225 = por %p223, %p224
      %p226 = scmp.ne.s32.totalorder %s212, %s213
      %p227 = scmp.eq.s32.totalorder %s22, 24
      %p228 = por %p226, %p227
      %p230 = scmp.ne.s32.totalorder %s213, %s229
      %p231 = scmp.eq.s32.totalorder %s22, 0
      %p232 = por %p230, %p231
      %s233 = ssub.s32 %s23, %s35
      %p234 = scmp.eq.s32.totalorder %s233, 0
      %s236 = sadd.s32 %s235, 1
      %s237 = scalar_select %p234, %s235, %s236
      %p240 = pneg %p234
      %p241 = scmp.eq.s32.totalorder %s16, 24
      %p242 = por %p240, %p241
      %p243 = scmp.ne.s32.totalorder %s235, %s238
      %p244 = scmp.eq.s32.totalorder %s16, 0
      %p245 = por %p243, %p244
      %p246 = scmp.ne.s32.totalorder %s235, %s238
      %p247 = scmp.eq.s32.totalorder %s21, 24
      %p248 = por %p246, %p247
      %p249 = scmp.ne.s32.totalorder %s238, %s239
      %p250 = scmp.eq.s32.totalorder %s21, 0
      %p251 = por %p249, %p250
      %p252 = scmp.ne.s32.totalorder %s238, %s239
      %p253 = scmp.eq.s32.totalorder %s22, 24
      %p254 = por %p252, %p253
      %p256 = scmp.ne.s32.totalorder %s239, %s255
      %p257 = scmp.eq.s32.totalorder %s22, 0
      %p258 = por %p256, %p257
      %s259 = ssub.s32 %s23, %s35
      %p260 = scmp.eq.s32.totalorder %s259, 0
      %s262 = sadd.s32 %s261, 1
      %s263 = scalar_select %p260, %s261, %s262
      %p266 = pneg %p260
      %p267 = scmp.eq.s32.totalorder %s16, 24
      %p268 = por %p266, %p267
      %p269 = scmp.ne.s32.totalorder %s261, %s264
      %p270 = scmp.eq.s32.totalorder %s16, 0
      %p271 = por %p269, %p270
      %p272 = scmp.ne.s32.totalorder %s261, %s264
      %p273 = scmp.eq.s32.totalorder %s21, 24
      %p274 = por %p272, %p273
      %p275 = scmp.ne.s32.totalorder %s264, %s265
      %p276 = scmp.eq.s32.totalorder %s21, 0
      %p277 = por %p275, %p276
      %p278 = scmp.ne.s32.totalorder %s264, %s265
      %p279 = scmp.eq.s32.totalorder %s22, 24
      %p280 = por %p278, %p279
      %p282 = scmp.ne.s32.totalorder %s265, %s281
      %p283 = scmp.eq.s32.totalorder %s22, 0
      %p284 = por %p282, %p283
      %s285 = ssub.s32 %s23, %s35
      %p286 = scmp.eq.s32.totalorder %s285, 0
      %s288 = sadd.s32 %s287, 1
      %s289 = scalar_select %p286, %s287, %s288
      %p292 = pneg %p286
      %p293 = scmp.eq.s32.totalorder %s16, 24
      %p294 = por %p292, %p293
      %p295 = scmp.ne.s32.totalorder %s287, %s290
      %p296 = scmp.eq.s32.totalorder %s16, 0
      %p297 = por %p295, %p296
      %p298 = scmp.ne.s32.totalorder %s287, %s290
      %p299 = scmp.eq.s32.totalorder %s21, 24
      %p300 = por %p298, %p299
      %p301 = scmp.ne.s32.totalorder %s290, %s291
      %p302 = scmp.eq.s32.totalorder %s21, 0
      %p303 = por %p301, %p302
      %p304 = scmp.ne.s32.totalorder %s290, %s291
      %p305 = scmp.eq.s32.totalorder %s22, 24
      %p306 = por %p304, %p305
      %p308 = scmp.ne.s32.totalorder %s291, %s307
      %p309 = scmp.eq.s32.totalorder %s22, 0
      %p310 = por %p308, %p309
      %p311 = scmp.le.s32.totalorder 1, %s16
      %p312 = scmp.lt.s32.totalorder %s16, 26
      %p313 = pnand %p311, %p312
      %p314 = pneg %p313
      // Predicated region
      $region9: #{social_model_forward.2} parent=5 // pred_check
        _
      $region10: #{social_model_forward.2} parent=5 // pred_check_branch
        %316 = sbr.rel (%p313) target = $region12
      $region11: #{social_model_forward.2} parent=5 // pred_region
        %s317 = ssub.s32 %s16, 1
        // Predicated region
        $region13: #{social_model_forward.2} parent=11 // pred_check
          %p318 = pneg %p173
        $region14: #{social_model_forward.2} parent=11 // pred_check_branch
          %320 = sbr.rel (%p318) target = $region16
        $region15: #{social_model_forward.2} parent=11 // pred_region
          _
        $region16: #{social_model_forward.2} parent=11 // pred_fallthru
          _
      $region12: #{social_model_forward.2} parent=5 // pred_fallthru
        _
      %p321 = scmp.lt.s32.totalorder %s16, 25
      // Predicated region
      $region17: #{social_model_forward.2} parent=5 // pred_check
        %p322 = pneg %p321
      $region18: #{social_model_forward.2} parent=5 // pred_check_branch
        %324 = sbr.rel (%p322) target = $region20
      $region19: #{social_model_forward.2} parent=5 // pred_region
        // Predicated region
        $region21: #{social_model_forward.2} parent=19 // pred_check
          %p325 = pneg %p50
        $region22: #{social_model_forward.2} parent=19 // pred_check_branch
          %327 = sbr.rel (%p325) target = $region24
        $region23: #{social_model_forward.2} parent=19 // pred_region
          %s328 = sand.u32 %s40, 1
          %s329 = sand.u32 %s40, 1
          %s330 = smul.addr %s329, 32
          %s331 = scalar_lea.vmem [#allocation2], %s330
          %s332 = smul.u32 4, %s23
          %s333 = smul.addr %s332, 5
          %s334 = sadd.s32 %s24, %s333
          %s335 = smul.addr %s334, 8
          %s336 = scalar_lea.vmem %s0, %s335
          // Predicated region
          $region25: #{social_model_forward.2} parent=23 // pred_check
            _
          $region26: #{social_model_forward.2} parent=23 // pred_check_branch
            %338 = sbr.rel (0) target = $region28
          $region27: #{social_model_forward.2} parent=23 // pred_region
            // Predicated region
            $region29: #{social_model_forward.2} parent=27 // pred_check
              _
            $region30: #{social_model_forward.2} parent=27 // pred_check_branch
              %340 = sbr.rel (0) target = $region32
            $region31: #{social_model_forward.2} parent=27 // pred_region
              // Predicated region
              $region44: #{social_model_forward.2} parent=31 // pred_check
                _
              $region45: #{social_model_forward.2} parent=31 // pred_check_branch
                %362 = sbr.rel (0) target = $region47
              $region46: #{social_model_forward.2} parent=31 // pred_region
                loop: start=0, step=1, limit=1
                $region48: #{social_model_forward.2} parent=46 // loop_pre_header
                  _
                $region49: #{social_model_forward.2} parent=46 // loop_header
                  %s364 = sphi 0, %s368
                  %p365 = scmp.ge.s32.totalorder %s364, 1
                  %s369 = sphi %s336, %s336
                  %s370 = sphi %s331, %s331
                $region50: #{social_model_forward.2} parent=46 // loop_header_branch
                  %367 = sbr.rel (%p365) target = $region54
                $region51: #{social_model_forward.2} parent=46 // loop_body
                  %v371 = vld [vmem:[%s369] sm:$0xff]
                  %372 = vst [vmem:[%s370] sm:$0xff] %v371
                  %v373 = vld [vmem:[%s369 + $0x28] sm:$0xff]
                  %374 = vst [vmem:[%s370 + $0x8] sm:$0xff] %v373
                  %v375 = vld [vmem:[%s369 + $0x50] sm:$0xff]
                  %376 = vst [vmem:[%s370 + $0x10] sm:$0xff] %v375
                  %v377 = vld [vmem:[%s369 + $0x78] sm:$0xff]
                  %378 = vst [vmem:[%s370 + $0x18] sm:$0xff] %v377
                $region52: #{social_model_forward.2} parent=46 // loop_footer
                  %s368 = sadd.s32 1, %s364
                $region53: #{social_model_forward.2} parent=46 // loop_footer_branch
                  %363 = sbr.rel target = $region49
                $region54: #{social_model_forward.2} parent=46 // loop_exit
                  _
              $region47: #{social_model_forward.2} parent=31 // pred_fallthru
                _
              // Predicated region
              $region55: #{social_model_forward.2} parent=31 // pred_check
                _
              $region56: #{social_model_forward.2} parent=31 // pred_check_branch
                %380 = sbr.rel target = $region58
              $region57: #{social_model_forward.2} parent=31 // pred_region
                _
              $region58: #{social_model_forward.2} parent=31 // pred_fallthru
                _
            $region32: #{social_model_forward.2} parent=27 // pred_fallthru
              _
            // Predicated region
            $region33: #{social_model_forward.2} parent=27 // pred_check
              _
            $region34: #{social_model_forward.2} parent=27 // pred_check_branch
              %342 = sbr.rel target = $region36
            $region35: #{social_model_forward.2} parent=27 // pred_region
              %s344 = ssub.s32 256, 1
              loop: start=0, step=1, limit=1
              $region37: #{social_model_forward.2} parent=35 // loop_pre_header
                _
              $region38: #{social_model_forward.2} parent=35 // loop_header
                %s346 = sphi 0, %s350
                %p347 = scmp.ge.s32.totalorder %s346, 1
                %s351 = sphi %s336, %s336
                %s352 = sphi %s331, %s331
              $region39: #{social_model_forward.2} parent=35 // loop_header_branch
                %349 = sbr.rel (%p347) target = $region43
              $region40: #{social_model_forward.2} parent=35 // loop_body
                %v353 = vld [vmem:[%s351] sm:%s344]
                %354 = vst [vmem:[%s352] sm:%s344] %v353
                %v355 = vld [vmem:[%s351 + $0x28] sm:%s344]
                %356 = vst [vmem:[%s352 + $0x8] sm:%s344] %v355
                %v357 = vld [vmem:[%s351 + $0x50] sm:%s344]
                %358 = vst [vmem:[%s352 + $0x10] sm:%s344] %v357
                %v359 = vld [vmem:[%s351 + $0x78] sm:%s344]
                %360 = vst [vmem:[%s352 + $0x18] sm:%s344] %v359
              $region41: #{social_model_forward.2} parent=35 // loop_footer
                %s350 = sadd.s32 1, %s346
              $region42: #{social_model_forward.2} parent=35 // loop_footer_branch
                %345 = sbr.rel target = $region38
              $region43: #{social_model_forward.2} parent=35 // loop_exit
                _
            $region36: #{social_model_forward.2} parent=27 // pred_fallthru
              _
          $region28: #{social_model_forward.2} parent=23 // pred_fallthru
            _
          %381 = vnop
        $region24: #{social_model_forward.2} parent=19 // pred_fallthru
          _
        // Predicated region
        $region59: #{social_model_forward.2} parent=19 // pred_check
          %p382 = pneg %p76
        $region60: #{social_model_forward.2} parent=19 // pred_check_branch
          %384 = sbr.rel (%p382) target = $region62
        $region61: #{social_model_forward.2} parent=19 // pred_region
          %s385 = smul.u32 16, %s23
          %p386 = scmp.lt.s32.totalorder %s385, 79
          %s387 = scalar_select %p386, %s385, 79
          %s388 = smul.addr %s387, 8
          %s389 = scalar_lea.vmem %s1, %s388
          %s390 = smul.u32 16, %s23
        $region62: #{social_model_forward.2} parent=19 // pred_fallthru
          _
        // Predicated region
        $region63: #{social_model_forward.2} parent=19 // pred_check
          %p391 = pneg %p116
        $region64: #{social_model_forward.2} parent=19 // pred_check_branch
          %393 = sbr.rel (%p391) target = $region66
        $region65: #{social_model_forward.2} parent=19 // pred_region
          %s394 = sand.u32 %s106, 1
          %s395 = sand.u32 %s106, 1
          %s396 = smul.addr %s395, 32
          %s397 = scalar_lea.vmem [#allocation3], %s396
          %p398 = scmp.lt.s32.totalorder %s23, 1
          %s399 = scalar_select %p398, %s23, 1
          %p400 = scmp.lt.s32.totalorder %s23, 2
          %p401 = scmp.lt.s32.totalorder %s24, 1
          %s402 = scalar_select %p401, %s24, 1
          %s403 = scalar_select %p400, %s402, 0
          %s404 = smul.u32 4, %s399
          %s405 = smul.addr %s404, 2
          %s406 = sadd.s32 %s403, %s405
          %s407 = smul.addr %s406, 8
          %s408 = scalar_lea.vmem %s2, %s407
          // Predicated region
          $region67: #{social_model_forward.2} parent=65 // pred_check
            _
          $region68: #{social_model_forward.2} parent=65 // pred_check_branch
            %410 = sbr.rel (0) target = $region70
          $region69: #{social_model_forward.2} parent=65 // pred_region
            // Predicated region
            $region71: #{social_model_forward.2} parent=69 // pred_check
              _
            $region72: #{social_model_forward.2} parent=69 // pred_check_branch
              %412 = sbr.rel (0) target = $region74
            $region73: #{social_model_forward.2} parent=69 // pred_region
              // Predicated region
              $region86: #{social_model_forward.2} parent=73 // pred_check
                _
              $region87: #{social_model_forward.2} parent=73 // pred_check_branch
                %434 = sbr.rel (0) target = $region89
              $region88: #{social_model_forward.2} parent=73 // pred_region
                loop: start=0, step=1, limit=1
                $region90: #{social_model_forward.2} parent=88 // loop_pre_header
                  _
                $region91: #{social_model_forward.2} parent=88 // loop_header
                  %s436 = sphi 0, %s440
                  %p437 = scmp.ge.s32.totalorder %s436, 1
                  %s441 = sphi %s408, %s408
                  %s442 = sphi %s397, %s397
                $region92: #{social_model_forward.2} parent=88 // loop_header_branch
                  %439 = sbr.rel (%p437) target = $region96
                $region93: #{social_model_forward.2} parent=88 // loop_body
                  %v443 = vld [vmem:[%s441] sm:$0xff]
                  %444 = vst [vmem:[%s442] sm:$0xff] %v443
                  %v445 = vld [vmem:[%s441 + $0x10] sm:$0xff]
                  %446 = vst [vmem:[%s442 + $0x8] sm:$0xff] %v445
                  %v447 = vld [vmem:[%s441 + $0x20] sm:$0xff]
                  %448 = vst [vmem:[%s442 + $0x10] sm:$0xff] %v447
                  %v449 = vld [vmem:[%s441 + $0x30] sm:$0xff]
                  %450 = vst [vmem:[%s442 + $0x18] sm:$0xff] %v449
                $region94: #{social_model_forward.2} parent=88 // loop_footer
                  %s440 = sadd.s32 1, %s436
                $region95: #{social_model_forward.2} parent=88 // loop_footer_branch
                  %435 = sbr.rel target = $region91
                $region96: #{social_model_forward.2} parent=88 // loop_exit
                  _
              $region89: #{social_model_forward.2} parent=73 // pred_fallthru
                _
              // Predicated region
              $region97: #{social_model_forward.2} parent=73 // pred_check
                _
              $region98: #{social_model_forward.2} parent=73 // pred_check_branch
                %452 = sbr.rel target = $region100
              $region99: #{social_model_forward.2} parent=73 // pred_region
                _
              $region100: #{social_model_forward.2} parent=73 // pred_fallthru
                _
            $region74: #{social_model_forward.2} parent=69 // pred_fallthru
              _
            // Predicated region
            $region75: #{social_model_forward.2} parent=69 // pred_check
              _
            $region76: #{social_model_forward.2} parent=69 // pred_check_branch
              %414 = sbr.rel target = $region78
            $region77: #{social_model_forward.2} parent=69 // pred_region
              %s416 = ssub.s32 256, 1
              loop: start=0, step=1, limit=1
              $region79: #{social_model_forward.2} parent=77 // loop_pre_header
                _
              $region80: #{social_model_forward.2} parent=77 // loop_header
                %s418 = sphi 0, %s422
                %p419 = scmp.ge.s32.totalorder %s418, 1
                %s423 = sphi %s408, %s408
                %s424 = sphi %s397, %s397
              $region81: #{social_model_forward.2} parent=77 // loop_header_branch
                %421 = sbr.rel (%p419) target = $region85
              $region82: #{social_model_forward.2} parent=77 // loop_body
                %v425 = vld [vmem:[%s423] sm:%s416]
                %426 = vst [vmem:[%s424] sm:%s416] %v425
                %v427 = vld [vmem:[%s423 + $0x10] sm:%s416]
                %428 = vst [vmem:[%s424 + $0x8] sm:%s416] %v427
                %v429 = vld [vmem:[%s423 + $0x20] sm:%s416]
                %430 = vst [vmem:[%s424 + $0x10] sm:%s416] %v429
                %v431 = vld [vmem:[%s423 + $0x30] sm:%s416]
                %432 = vst [vmem:[%s424 + $0x18] sm:%s416] %v431
              $region83: #{social_model_forward.2} parent=77 // loop_footer
                %s422 = sadd.s32 1, %s418
              $region84: #{social_model_forward.2} parent=77 // loop_footer_branch
                %417 = sbr.rel target = $region80
              $region85: #{social_model_forward.2} parent=77 // loop_exit
                _
            $region78: #{social_model_forward.2} parent=69 // pred_fallthru
              _
          $region70: #{social_model_forward.2} parent=65 // pred_fallthru
            _
          %453 = vnop
        $region66: #{social_model_forward.2} parent=19 // pred_fallthru
          _
        // Predicated region
        $region101: #{social_model_forward.2} parent=19 // pred_check
          %p454 = pneg %p146
        $region102: #{social_model_forward.2} parent=19 // pred_check_branch
          %456 = sbr.rel (%p454) target = $region104
        $region103: #{social_model_forward.2} parent=19 // pred_region
          %p457 = scmp.lt.s32.totalorder %s23, 1
          %s458 = scalar_select %p457, %s23, 1
          %s459 = smul.u32 16, %s458
          %p460 = scmp.lt.s32.totalorder %s459, 31
          %s461 = scalar_select %p460, %s459, 31
          %s462 = smul.addr %s461, 8
          %s463 = scalar_lea.vmem %s3, %s462
          %p464 = scmp.lt.s32.totalorder %s23, 1
          %s465 = scalar_select %p464, %s23, 1
          %s466 = smul.u32 16, %s465
        $region104: #{social_model_forward.2} parent=19 // pred_fallthru
          _
        // Predicated region
        $region105: #{social_model_forward.2} parent=19 // pred_check
          %p467 = pneg %p193
        $region106: #{social_model_forward.2} parent=19 // pred_check_branch
          %469 = sbr.rel (%p467) target = $region108
        $region107: #{social_model_forward.2} parent=19 // pred_region
          %s470 = smul.u32 16, %s23
          %p471 = scmp.lt.s32.totalorder %s470, 79
          %s472 = scalar_select %p471, %s470, 79
          %s473 = smul.addr %s472, 8
          %s474 = scalar_lea.vmem %s5, %s473
          %s475 = smul.u32 16, %s23
        $region108: #{social_model_forward.2} parent=19 // pred_fallthru
          _
      $region20: #{social_model_forward.2} parent=5 // pred_fallthru
        _
      %p476 = scmp.le.s32.totalorder 1, %s16
      %p477 = scmp.lt.s32.totalorder %s16, 26
      %p478 = pnand %p476, %p477
      %p479 = pneg %p478
      // Predicated region
      $region109: #{social_model_forward.2} parent=5 // pred_check
        _
      $region110: #{social_model_forward.2} parent=5 // pred_check_branch
        %481 = sbr.rel (%p478) target = $region112
      $region111: #{social_model_forward.2} parent=5 // pred_region
        %s482 = ssub.s32 %s16, 1
        %s483 = sand.u32 %s43, 1
        %s484 = sand.u32 %s43, 1
        %s485 = smul.addr %s484, 32
        %s486 = scalar_lea.vmem [#allocation2], %s485
        // Predicated region
        $region113: #{social_model_forward.2} parent=111 // pred_check
          %p487 = pneg %p56
        $region114: #{social_model_forward.2} parent=111 // pred_check_branch
          %489 = sbr.rel (%p487) target = $region116
        $region115: #{social_model_forward.2} parent=111 // pred_region
          _
        $region116: #{social_model_forward.2} parent=111 // pred_fallthru
          _
        %s490 = sand.u32 %s109, 1
        %s491 = sand.u32 %s109, 1
        %s492 = smul.addr %s491, 32
        %s493 = scalar_lea.vmem [#allocation3], %s492
        // Predicated region
        $region117: #{social_model_forward.2} parent=111 // pred_check
          %p494 = pneg %p122
        $region118: #{social_model_forward.2} parent=111 // pred_check_branch
          %496 = sbr.rel (%p494) target = $region120
        $region119: #{social_model_forward.2} parent=111 // pred_region
          _
        $region120: #{social_model_forward.2} parent=111 // pred_fallthru
          _
        %s497 = sand.u32 %s43, 1
        %s498 = sand.u32 %s43, 1
        %s499 = smul.addr %s498, 32
        %s500 = scalar_lea.vmem [#allocation2], %s499
        %p501 = pneg %p56
        %p502 = pneg %p53
        %s503 = smul.u32 16, %s25
        %p504 = scmp.lt.s32.totalorder %s503, 79
        %s505 = scalar_select %p504, %s503, 79
        %s506 = smul.addr %s505, 8
        %s507 = scalar_lea.vmem %s1, %s506
        %p508 = pneg %p82
        %p509 = pneg %p79
        %s510 = sand.u32 %s109, 1
        %s511 = sand.u32 %s109, 1
        %s512 = smul.addr %s511, 32
        %s513 = scalar_lea.vmem [#allocation3], %s512
        %p514 = pneg %p122
        %p515 = pneg %p119
        %p516 = scmp.lt.s32.totalorder %s25, 1
        %s517 = scalar_select %p516, %s25, 1
        %s518 = smul.u32 16, %s517
        %p519 = scmp.lt.s32.totalorder %s518, 31
        %s520 = scalar_select %p519, %s518, 31
        %s521 = smul.addr %s520, 8
        %s522 = scalar_lea.vmem %s3, %s521
        %p523 = pneg %p152
        %p524 = pneg %p149
        %p525 = pneg %p173
        %p526 = pneg %p170
        %s527 = smul.u32 16, %s25
        %p528 = scmp.lt.s32.totalorder %s527, 79
        %s529 = scalar_select %p528, %s527, 79
        %s530 = smul.addr %s529, 8
        %s531 = scalar_lea.vmem %s5, %s530
        %p532 = pneg %p199
        %p533 = pneg %p196
        %p534 = pneg %p225
        %p535 = pneg %p222
        %s536 = smul.u32 16, %s25
        %p537 = scmp.lt.s32.totalorder %s536, 79
        %s538 = scalar_select %p537, %s536, 79
        %s539 = smul.addr %s538, 8
        %s540 = scalar_lea.vmem %s6, %s539
        %p541 = pneg %p251
        %p542 = pneg %p248
        %s543 = smul.u32 16, %s25
        %p544 = scmp.lt.s32.totalorder %s543, 79
        %s545 = scalar_select %p544, %s543, 79
        %s546 = smul.addr %s545, 8
        %s547 = scalar_lea.vmem %s7, %s546
        %p548 = pneg %p277
        %p549 = pneg %p274
        %s550 = smul.u32 16, %s25
        %p551 = scmp.lt.s32.totalorder %s550, 79
        %s552 = scalar_select %p551, %s550, 79
        %s553 = smul.addr %s552, 4
        %s554 = scalar_lea.vmem %s8, %s553
        %p555 = pneg %p303
        %p556 = pneg %p300
        %s557 = smul.u32 16, %s25
        %p558 = scmp.lt.s32.totalorder %s557, 79
        %s559 = scalar_select %p558, %s557, 79
        %s560 = smul.addr %s559, 8
        %s561 = scalar_lea.vmem %s9, %s560
        %s562 = smul.u32 4, %s25
        %s563 = smul.u32 16, %s25
        %p564 = scmp.lt.s32.totalorder %s563, 79
        %s565 = scalar_select %p564, %s563, 79
        %s566 = smul.addr %s565, 8
        %s567 = scalar_lea.vmem %s1, %s566
        %s568 = smul.u32 16, %s25
        %p569 = scmp.lt.s32.totalorder %s25, 1
        %s570 = scalar_select %p569, %s25, 1
        %p571 = scmp.lt.s32.totalorder %s25, 2
        %p572 = scmp.lt.s32.totalorder %s26, 1
        %s573 = scalar_select %p572, %s26, 1
        %s574 = scalar_select %p571, %s573, 0
        %s575 = smul.u32 4, %s570
        %p576 = scmp.lt.s32.totalorder %s25, 1
        %s577 = scalar_select %p576, %s25, 1
        %s578 = smul.u32 16, %s577
        %p579 = scmp.lt.s32.totalorder %s578, 31
        %s580 = scalar_select %p579, %s578, 31
        %s581 = smul.addr %s580, 8
        %s582 = scalar_lea.vmem %s3, %s581
        %p583 = scmp.lt.s32.totalorder %s25, 1
        %s584 = scalar_select %p583, %s25, 1
        %s585 = smul.u32 16, %s584
        %s586 = smul.u32 16, %s25
        %p587 = scmp.lt.s32.totalorder %s586, 79
        %s588 = scalar_select %p587, %s586, 79
        %s589 = smul.addr %s588, 8
        %s590 = scalar_lea.vmem %s5, %s589
        %s591 = smul.u32 16, %s25
        %s592 = smul.u32 16, %s25
        %p593 = scmp.lt.s32.totalorder %s592, 79
        %s594 = scalar_select %p593, %s592, 79
        %s595 = smul.addr %s594, 8
        %s596 = scalar_lea.vmem %s6, %s595
        %s597 = smul.u32 16, %s25
        %s598 = smul.u32 16, %s25
        %p599 = scmp.lt.s32.totalorder %s598, 79
        %s600 = scalar_select %p599, %s598, 79
        %s601 = smul.addr %s600, 8
        %s602 = scalar_lea.vmem %s7, %s601
        %s603 = smul.u32 16, %s25
        %s604 = smul.u32 16, %s25
        %p605 = scmp.lt.s32.totalorder %s604, 79
        %s606 = scalar_select %p605, %s604, 79
        %s607 = smul.addr %s606, 4
        %s608 = scalar_lea.vmem %s8, %s607
        %s609 = smul.u32 16, %s25
        %s610 = smul.u32 16, %s25
        %p611 = scmp.lt.s32.totalorder %s610, 79
        %s612 = scalar_select %p611, %s610, 79
        %s613 = smul.addr %s612, 8
        %s614 = scalar_lea.vmem %s9, %s613
        %s615 = smul.u32 16, %s25
        %p616 = scmp.lt.s32.totalorder %s25, 2
        %p617 = scmp.eq.s32.totalorder %s26, 0
        // Predicated region
        $region121: #{social_model_forward.2} parent=111 // pred_check
          %p618 = pneg %p617
        $region122: #{social_model_forward.2} parent=111 // pred_check_branch
          %620 = sbr.rel (%p618) target = $region124
        $region123: #{social_model_forward.2} parent=111 // pred_region
          %621 = vst [vmem:[%s596] sm:$0xff] 0.0
          %622 = vst [vmem:[%s596 + $0x8] sm:$0xff] 0.0
          %623 = vst [vmem:[%s596 + $0x10] sm:$0xff] 0.0
          %624 = vst [vmem:[%s596 + $0x18] sm:$0xff] 0.0
          %625 = vst [vmem:[%s596 + $0x20] sm:$0xff] 0.0
          %626 = vst [vmem:[%s596 + $0x28] sm:$0xff] 0.0
          %627 = vst [vmem:[%s596 + $0x30] sm:$0xff] 0.0
          %628 = vst [vmem:[%s596 + $0x38] sm:$0xff] 0.0
          %629 = vst [vmem:[%s596 + $0x40] sm:$0xff] 0.0
          %630 = vst [vmem:[%s596 + $0x48] sm:$0xff] 0.0
          %631 = vst [vmem:[%s596 + $0x50] sm:$0xff] 0.0
          %632 = vst [vmem:[%s596 + $0x58] sm:$0xff] 0.0
          %633 = vst [vmem:[%s596 + $0x60] sm:$0xff] 0.0
          %634 = vst [vmem:[%s596 + $0x68] sm:$0xff] 0.0
          %635 = vst [vmem:[%s596 + $0x70] sm:$0xff] 0.0
          %636 = vst [vmem:[%s596 + $0x78] sm:$0xff] 0.0
          %637 = vst [vmem:[%s602] sm:$0xff] 0.0
          %638 = vst [vmem:[%s602 + $0x8] sm:$0xff] 0.0
          %639 = vst [vmem:[%s602 + $0x10] sm:$0xff] 0.0
          %640 = vst [vmem:[%s602 + $0x18] sm:$0xff] 0.0
          %641 = vst [vmem:[%s602 + $0x20] sm:$0xff] 0.0
          %642 = vst [vmem:[%s602 + $0x28] sm:$0xff] 0.0
          %643 = vst [vmem:[%s602 + $0x30] sm:$0xff] 0.0
          %644 = vst [vmem:[%s602 + $0x38] sm:$0xff] 0.0
          %645 = vst [vmem:[%s602 + $0x40] sm:$0xff] 0.0
          %646 = vst [vmem:[%s602 + $0x48] sm:$0xff] 0.0
          %647 = vst [vmem:[%s602 + $0x50] sm:$0xff] 0.0
          %648 = vst [vmem:[%s602 + $0x58] sm:$0xff] 0.0
          %649 = vst [vmem:[%s602 + $0x60] sm:$0xff] 0.0
          %650 = vst [vmem:[%s602 + $0x68] sm:$0xff] 0.0
          %651 = vst [vmem:[%s602 + $0x70] sm:$0xff] 0.0
          %652 = vst [vmem:[%s602 + $0x78] sm:$0xff] 0.0
        $region124: #{social_model_forward.2} parent=111 // pred_fallthru
          _
        %s653 = smul.u32 %s26, 128
        %s654 = sshra.s32 %s653, 3
        %s655 = sand.u32 %s653, 7
        %s656 = smul.addr %s654, 4
        %s657 = scalar_lea.vmem %s4, %s656
        %v658 = vld [vmem:[%s657] sm:$0xf]
        %v659 = vld [vmem:[%s657 + $0x4] sm:$0xf]
        %v660 = vld [vmem:[%s657 + $0x8] sm:$0xf]
        %v661 = vld [vmem:[%s657 + $0xc] sm:$0xf]
        %v662 = vld [vmem:[%s657 + $0x10] sm:$0xf]
        %v663 = vld [vmem:[%s657 + $0x14] sm:$0xf]
        %v664 = vld [vmem:[%s657 + $0x18] sm:$0xf]
        %v665 = vld [vmem:[%s657 + $0x1c] sm:$0xf]
        %v666 = vld [vmem:[%s657 + $0x20] sm:$0xf]
        %v667 = vld [vmem:[%s657 + $0x24] sm:$0xf]
        %v668 = vld [vmem:[%s657 + $0x28] sm:$0xf]
        %v669 = vld [vmem:[%s657 + $0x2c] sm:$0xf]
        %v670 = vld [vmem:[%s657 + $0x30] sm:$0xf]
        %v671 = vld [vmem:[%s657 + $0x34] sm:$0xf]
        %v672 = vld [vmem:[%s657 + $0x38] sm:$0xf]
        %v673 = vld [vmem:[%s657 + $0x3c] sm:$0xf]
        %v674 = vld [vmem:[%s486] sm:$0xff]
        %v675 = vld [vmem:[%s486 + $0x8] sm:$0xff]
        %v676 = vld [vmem:[%s486 + $0x10] sm:$0xff]
        %v677 = vld [vmem:[%s486 + $0x18] sm:$0xff]
        %v678 = vunpack.c.0.s8 %v674
        %v679 = vunpack.c.1.s8 %v674
        %v680 = vunpack.c.2.s8 %v674
        %v681 = vunpack.c.3.s8 %v674
        %v682 = vunpack.c.0.s8 %v675
        %v683 = vunpack.c.1.s8 %v675
        %v684 = vunpack.c.2.s8 %v675
        %v685 = vunpack.c.3.s8 %v675
        %v686 = vunpack.c.0.s8 %v676
        %v687 = vunpack.c.1.s8 %v676
        %v688 = vunpack.c.2.s8 %v676
        %v689 = vunpack.c.3.s8 %v676
        %v690 = vunpack.c.0.s8 %v677
        %v691 = vunpack.c.1.s8 %v677
        %v692 = vunpack.c.2.s8 %v677
        %v693 = vunpack.c.3.s8 %v677
        %v694 = vcvt.s32.f32 %v678
        %v695 = vcvt.s32.f32 %v679
        %v696 = vcvt.s32.f32 %v680
        %v697 = vcvt.s32.f32 %v681
        %v698 = vcvt.s32.f32 %v682
        %v699 = vcvt.s32.f32 %v683
        %v700 = vcvt.s32.f32 %v684
        %v701 = vcvt.s32.f32 %v685
        %v702 = vcvt.s32.f32 %v686
        %v703 = vcvt.s32.f32 %v687
        %v704 = vcvt.s32.f32 %v688
        %v705 = vcvt.s32.f32 %v689
        %v706 = vcvt.s32.f32 %v690
        %v707 = vcvt.s32.f32 %v691
        %v708 = vcvt.s32.f32 %v692
        %v709 = vcvt.s32.f32 %v693
        %v710 = vpack.c.bf16 %v695, %v694
        %v711 = vpack.c.bf16 %v697, %v696
        %v712 = vpack.c.bf16 %v699, %v698
        %v713 = vpack.c.bf16 %v701, %v700
        %v714 = vpack.c.bf16 %v703, %v702
        %v715 = vpack.c.bf16 %v705, %v704
        %v716 = vpack.c.bf16 %v707, %v706
        %v717 = vpack.c.bf16 %v709, %v708
        %v718 = vld [vmem:[%s596] sm:$0xff]
        %v719 = vld [vmem:[%s596 + $0x8] sm:$0xff]
        %v720 = vld [vmem:[%s596 + $0x10] sm:$0xff]
        %v721 = vld [vmem:[%s596 + $0x18] sm:$0xff]
        %v722 = vld [vmem:[%s596 + $0x20] sm:$0xff]
        %v723 = vld [vmem:[%s596 + $0x28] sm:$0xff]
        %v724 = vld [vmem:[%s596 + $0x30] sm:$0xff]
        %v725 = vld [vmem:[%s596 + $0x38] sm:$0xff]
        %v726 = vld [vmem:[%s596 + $0x40] sm:$0xff]
        %v727 = vld [vmem:[%s596 + $0x48] sm:$0xff]
        %v728 = vld [vmem:[%s596 + $0x50] sm:$0xff]
        %v729 = vld [vmem:[%s596 + $0x58] sm:$0xff]
        %v730 = vld [vmem:[%s596 + $0x60] sm:$0xff]
        %v731 = vld [vmem:[%s596 + $0x68] sm:$0xff]
        %v732 = vld [vmem:[%s596 + $0x70] sm:$0xff]
        %v733 = vld [vmem:[%s596 + $0x78] sm:$0xff]
        %v750 = vunpack.c.l.b16 %v658
        %v751 = vunpack.c.l.b16 %v659
        %v752 = vunpack.c.l.b16 %v660
        %v753 = vunpack.c.l.b16 %v661
        %v754 = vunpack.c.l.b16 %v662
        %v755 = vunpack.c.l.b16 %v663
        %v756 = vunpack.c.l.b16 %v664
        %v757 = vunpack.c.l.b16 %v665
        %v758 = vunpack.c.l.b16 %v666
        %v759 = vunpack.c.l.b16 %v667
        %v760 = vunpack.c.l.b16 %v668
        %v761 = vunpack.c.l.b16 %v669
        %v762 = vunpack.c.l.b16 %v670
        %v763 = vunpack.c.l.b16 %v671
        %v764 = vunpack.c.l.b16 %v672
        %v765 = vunpack.c.l.b16 %v673
        %v766 = vpack.c.b16 %v751, %v750
        %v767 = vpack.c.b16 %v753, %v752
        %v768 = vpack.c.b16 %v755, %v754
        %v769 = vpack.c.b16 %v757, %v756
        %v770 = vpack.c.b16 %v759, %v758
        %v771 = vpack.c.b16 %v761, %v760
        %v772 = vpack.c.b16 %v763, %v762
        %v773 = vpack.c.b16 %v765, %v764
        %782 = vmatpush.bf16.msra.mxu0 %v773
        %783 = vmatpush.bf16.msra.mxu0 %v772
        %784 = vmatpush.bf16.msra.mxu0 %v771
        %785 = vmatpush.bf16.msra.mxu0 %v770
        %786 = vmatpush.bf16.msra.mxu0 %v769
        %787 = vmatpush.bf16.msra.mxu0 %v768
        %788 = vmatpush.bf16.msra.mxu0 %v767
        %789 = vmatpush.bf16.msra.mxu0 %v766
        %790 = vmatmul.bf16.gmra.mxu0 %v710
        %v791 = vpop.f32.mrf.mxu0
        %v792 = vadd.f32 0.0, %v791
        %v793 = vpop.f32.mrf.mxu0
        %v794 = vadd.f32 0.0, %v793
        %795 = vmatmul.bf16.gmra.mxu0 %v711
        %v796 = vpop.f32.mrf.mxu0
        %v797 = vadd.f32 0.0, %v796
        %v798 = vpop.f32.mrf.mxu0
        %v799 = vadd.f32 0.0, %v798
        %800 = vmatmul.bf16.gmra.mxu0 %v712
        %v801 = vpop.f32.mrf.mxu0
        %v802 = vadd.f32 0.0, %v801
        %v803 = vpop.f32.mrf.mxu0
        %v804 = vadd.f32 0.0, %v803
        %805 = vmatmul.bf16.gmra.mxu0 %v713
        %v806 = vpop.f32.mrf.mxu0
        %v807 = vadd.f32 0.0, %v806
        %v808 = vpop.f32.mrf.mxu0
        %v809 = vadd.f32 0.0, %v808
        %810 = vmatmul.bf16.gmra.mxu0 %v714
        %v811 = vpop.f32.mrf.mxu0
        %v812 = vadd.f32 0.0, %v811
        %v813 = vpop.f32.mrf.mxu0
        %v814 = vadd.f32 0.0, %v813
        %815 = vmatmul.bf16.gmra.mxu0 %v715
        %v816 = vpop.f32.mrf.mxu0
        %v817 = vadd.f32 0.0, %v816
        %v818 = vpop.f32.mrf.mxu0
        %v819 = vadd.f32 0.0, %v818
        %820 = vmatmul.bf16.gmra.mxu0 %v716
        %v821 = vpop.f32.mrf.mxu0
        %v822 = vadd.f32 0.0, %v821
        %v823 = vpop.f32.mrf.mxu0
        %v824 = vadd.f32 0.0, %v823
        %825 = vmatmul.bf16.gmra.mxu0 %v717
        %v826 = vpop.f32.mrf.mxu0
        %v827 = vadd.f32 0.0, %v826
        %v828 = vpop.f32.mrf.mxu0
        %v829 = vadd.f32 0.0, %v828
        %830 = vdwg.mxu0
        %v831 = vadd.f32 %v718, %v792
        %v832 = vadd.f32 %v719, %v794
        %v833 = vadd.f32 %v720, %v797
        %v834 = vadd.f32 %v721, %v799
        %v835 = vadd.f32 %v722, %v802
        %v836 = vadd.f32 %v723, %v804
        %v837 = vadd.f32 %v724, %v807
        %v838 = vadd.f32 %v725, %v809
        %v839 = vadd.f32 %v726, %v812
        %v840 = vadd.f32 %v727, %v814
        %v841 = vadd.f32 %v728, %v817
        %v842 = vadd.f32 %v729, %v819
        %v843 = vadd.f32 %v730, %v822
        %v844 = vadd.f32 %v731, %v824
        %v845 = vadd.f32 %v732, %v827
        %v846 = vadd.f32 %v733, %v829
        %847 = vst [vmem:[%s596] sm:$0xff] %v831
        %848 = vst [vmem:[%s596 + $0x8] sm:$0xff] %v832
        %849 = vst [vmem:[%s596 + $0x10] sm:$0xff] %v833
        %850 = vst [vmem:[%s596 + $0x18] sm:$0xff] %v834
        %851 = vst [vmem:[%s596 + $0x20] sm:$0xff] %v835
        %852 = vst [vmem:[%s596 + $0x28] sm:$0xff] %v836
        %853 = vst [vmem:[%s596 + $0x30] sm:$0xff] %v837
        %854 = vst [vmem:[%s596 + $0x38] sm:$0xff] %v838
        %855 = vst [vmem:[%s596 + $0x40] sm:$0xff] %v839
        %856 = vst [vmem:[%s596 + $0x48] sm:$0xff] %v840
        %857 = vst [vmem:[%s596 + $0x50] sm:$0xff] %v841
        %858 = vst [vmem:[%s596 + $0x58] sm:$0xff] %v842
        %859 = vst [vmem:[%s596 + $0x60] sm:$0xff] %v843
        %860 = vst [vmem:[%s596 + $0x68] sm:$0xff] %v844
        %861 = vst [vmem:[%s596 + $0x70] sm:$0xff] %v845
        %862 = vst [vmem:[%s596 + $0x78] sm:$0xff] %v846
        %p863 = scmp.lt.s32.totalorder %s26, 2
        %p864 = pnand %p616, %p863
        %p865 = pneg %p864
        // Predicated region
        $region125: #{social_model_forward.2} parent=111 // pred_check
          _
        $region126: #{social_model_forward.2} parent=111 // pred_check_branch
          %867 = sbr.rel (%p864) target = $region128
        $region127: #{social_model_forward.2} parent=111 // pred_region
          %v868 = vld [vmem:[%s493] sm:$0xff]
          %v869 = vld [vmem:[%s493 + $0x8] sm:$0xff]
          %v870 = vld [vmem:[%s493 + $0x10] sm:$0xff]
          %v871 = vld [vmem:[%s493 + $0x18] sm:$0xff]
          %v872 = vunpack.c.0.s8 %v868
          %v873 = vunpack.c.1.s8 %v868
          %v874 = vunpack.c.2.s8 %v868
          %v875 = vunpack.c.3.s8 %v868
          %v876 = vunpack.c.0.s8 %v869
          %v877 = vunpack.c.1.s8 %v869
          %v878 = vunpack.c.2.s8 %v869
          %v879 = vunpack.c.3.s8 %v869
          %v880 = vunpack.c.0.s8 %v870
          %v881 = vunpack.c.1.s8 %v870
          %v882 = vunpack.c.2.s8 %v870
          %v883 = vunpack.c.3.s8 %v870
          %v884 = vunpack.c.0.s8 %v871
          %v885 = vunpack.c.1.s8 %v871
          %v886 = vunpack.c.2.s8 %v871
          %v887 = vunpack.c.3.s8 %v871
          %v888 = vcvt.s32.f32 %v872
          %v889 = vcvt.s32.f32 %v873
          %v890 = vcvt.s32.f32 %v874
          %v891 = vcvt.s32.f32 %v875
          %v892 = vcvt.s32.f32 %v876
          %v893 = vcvt.s32.f32 %v877
          %v894 = vcvt.s32.f32 %v878
          %v895 = vcvt.s32.f32 %v879
          %v896 = vcvt.s32.f32 %v880
          %v897 = vcvt.s32.f32 %v881
          %v898 = vcvt.s32.f32 %v882
          %v899 = vcvt.s32.f32 %v883
          %v900 = vcvt.s32.f32 %v884
          %v901 = vcvt.s32.f32 %v885
          %v902 = vcvt.s32.f32 %v886
          %v903 = vcvt.s32.f32 %v887
          %v904 = vpack.c.bf16 %v889, %v888
          %v905 = vpack.c.bf16 %v891, %v890
          %v906 = vpack.c.bf16 %v893, %v892
          %v907 = vpack.c.bf16 %v895, %v894
          %v908 = vpack.c.bf16 %v897, %v896
          %v909 = vpack.c.bf16 %v899, %v898
          %v910 = vpack.c.bf16 %v901, %v900
          %v911 = vpack.c.bf16 %v903, %v902
          %v912 = vld [vmem:[%s602] sm:$0xff]
          %v913 = vld [vmem:[%s602 + $0x8] sm:$0xff]
          %v914 = vld [vmem:[%s602 + $0x10] sm:$0xff]
          %v915 = vld [vmem:[%s602 + $0x18] sm:$0xff]
          %v916 = vld [vmem:[%s602 + $0x20] sm:$0xff]
          %v917 = vld [vmem:[%s602 + $0x28] sm:$0xff]
          %v918 = vld [vmem:[%s602 + $0x30] sm:$0xff]
          %v919 = vld [vmem:[%s602 + $0x38] sm:$0xff]
          %v920 = vld [vmem:[%s602 + $0x40] sm:$0xff]
          %v921 = vld [vmem:[%s602 + $0x48] sm:$0xff]
          %v922 = vld [vmem:[%s602 + $0x50] sm:$0xff]
          %v923 = vld [vmem:[%s602 + $0x58] sm:$0xff]
          %v924 = vld [vmem:[%s602 + $0x60] sm:$0xff]
          %v925 = vld [vmem:[%s602 + $0x68] sm:$0xff]
          %v926 = vld [vmem:[%s602 + $0x70] sm:$0xff]
          %v927 = vld [vmem:[%s602 + $0x78] sm:$0xff]
          %928 = vmatpush.bf16.msra.mxu0 %v773
          %929 = vmatpush.bf16.msra.mxu0 %v772
          %930 = vmatpush.bf16.msra.mxu0 %v771
          %931 = vmatpush.bf16.msra.mxu0 %v770
          %932 = vmatpush.bf16.msra.mxu0 %v769
          %933 = vmatpush.bf16.msra.mxu0 %v768
          %934 = vmatpush.bf16.msra.mxu0 %v767
          %935 = vmatpush.bf16.msra.mxu0 %v766
          %936 = vmatmul.bf16.gmra.mxu0 %v904
          %v937 = vpop.f32.mrf.mxu0
          %v938 = vadd.f32 0.0, %v937
          %v939 = vpop.f32.mrf.mxu0
          %v940 = vadd.f32 0.0, %v939
          %941 = vmatmul.bf16.gmra.mxu0 %v905
          %v942 = vpop.f32.mrf.mxu0
          %v943 = vadd.f32 0.0, %v942
          %v944 = vpop.f32.mrf.mxu0
          %v945 = vadd.f32 0.0, %v944
          %946 = vmatmul.bf16.gmra.mxu0 %v906
          %v947 = vpop.f32.mrf.mxu0
          %v948 = vadd.f32 0.0, %v947
          %v949 = vpop.f32.mrf.mxu0
          %v950 = vadd.f32 0.0, %v949
          %951 = vmatmul.bf16.gmra.mxu0 %v907
          %v952 = vpop.f32.mrf.mxu0
          %v953 = vadd.f32 0.0, %v952
          %v954 = vpop.f32.mrf.mxu0
          %v955 = vadd.f32 0.0, %v954
          %956 = vmatmul.bf16.gmra.mxu0 %v908
          %v957 = vpop.f32.mrf.mxu0
          %v958 = vadd.f32 0.0, %v957
          %v959 = vpop.f32.mrf.mxu0
          %v960 = vadd.f32 0.0, %v959
          %961 = vmatmul.bf16.gmra.mxu0 %v909
          %v962 = vpop.f32.mrf.mxu0
          %v963 = vadd.f32 0.0, %v962
          %v964 = vpop.f32.mrf.mxu0
          %v965 = vadd.f32 0.0, %v964
          %966 = vmatmul.bf16.gmra.mxu0 %v910
          %v967 = vpop.f32.mrf.mxu0
          %v968 = vadd.f32 0.0, %v967
          %v969 = vpop.f32.mrf.mxu0
          %v970 = vadd.f32 0.0, %v969
          %971 = vmatmul.bf16.gmra.mxu0 %v911
          %v972 = vpop.f32.mrf.mxu0
          %v973 = vadd.f32 0.0, %v972
          %v974 = vpop.f32.mrf.mxu0
          %v975 = vadd.f32 0.0, %v974
          %976 = vdwg.mxu0
          %v977 = vadd.f32 %v912, %v938
          %v978 = vadd.f32 %v913, %v940
          %v979 = vadd.f32 %v914, %v943
          %v980 = vadd.f32 %v915, %v945
          %v981 = vadd.f32 %v916, %v948
          %v982 = vadd.f32 %v917, %v950
          %v983 = vadd.f32 %v918, %v953
          %v984 = vadd.f32 %v919, %v955
          %v985 = vadd.f32 %v920, %v958
          %v986 = vadd.f32 %v921, %v960
          %v987 = vadd.f32 %v922, %v963
          %v988 = vadd.f32 %v923, %v965
          %v989 = vadd.f32 %v924, %v968
          %v990 = vadd.f32 %v925, %v970
          %v991 = vadd.f32 %v926, %v973
          %v992 = vadd.f32 %v927, %v975
          %993 = vst [vmem:[%s602] sm:$0xff] %v977
          %994 = vst [vmem:[%s602 + $0x8] sm:$0xff] %v978
          %995 = vst [vmem:[%s602 + $0x10] sm:$0xff] %v979
          %996 = vst [vmem:[%s602 + $0x18] sm:$0xff] %v980
          %997 = vst [vmem:[%s602 + $0x20] sm:$0xff] %v981
          %998 = vst [vmem:[%s602 + $0x28] sm:$0xff] %v982
          %999 = vst [vmem:[%s602 + $0x30] sm:$0xff] %v983
          %1000 = vst [vmem:[%s602 + $0x38] sm:$0xff] %v984
          %1001 = vst [vmem:[%s602 + $0x40] sm:$0xff] %v985
          %1002 = vst [vmem:[%s602 + $0x48] sm:$0xff] %v986
          %1003 = vst [vmem:[%s602 + $0x50] sm:$0xff] %v987
          %1004 = vst [vmem:[%s602 + $0x58] sm:$0xff] %v988
          %1005 = vst [vmem:[%s602 + $0x60] sm:$0xff] %v989
          %1006 = vst [vmem:[%s602 + $0x68] sm:$0xff] %v990
          %1007 = vst [vmem:[%s602 + $0x70] sm:$0xff] %v991
          %1008 = vst [vmem:[%s602 + $0x78] sm:$0xff] %v992
        $region128: #{social_model_forward.2} parent=111 // pred_fallthru
          _
        %p1009 = scmp.eq.s32.totalorder %s26, 4
        // Predicated region
        $region129: #{social_model_forward.2} parent=111 // pred_check
          %p1010 = pneg %p1009
        $region130: #{social_model_forward.2} parent=111 // pred_check_branch
          %1012 = sbr.rel (%p1010) target = $region132
        $region131: #{social_model_forward.2} parent=111 // pred_region
          %v1013 = vld [vmem:[%s596] sm:$0xff]
          %v1014 = vld [vmem:[%s596 + $0x8] sm:$0xff]
          %v1015 = vld [vmem:[%s596 + $0x10] sm:$0xff]
          %v1016 = vld [vmem:[%s596 + $0x18] sm:$0xff]
          %v1017 = vld [vmem:[%s596 + $0x20] sm:$0xff]
          %v1018 = vld [vmem:[%s596 + $0x28] sm:$0xff]
          %v1019 = vld [vmem:[%s596 + $0x30] sm:$0xff]
          %v1020 = vld [vmem:[%s596 + $0x38] sm:$0xff]
          %v1021 = vld [vmem:[%s596 + $0x40] sm:$0xff]
          %v1022 = vld [vmem:[%s596 + $0x48] sm:$0xff]
          %v1023 = vld [vmem:[%s596 + $0x50] sm:$0xff]
          %v1024 = vld [vmem:[%s596 + $0x58] sm:$0xff]
          %v1025 = vld [vmem:[%s596 + $0x60] sm:$0xff]
          %v1026 = vld [vmem:[%s596 + $0x68] sm:$0xff]
          %v1027 = vld [vmem:[%s596 + $0x70] sm:$0xff]
          %v1028 = vld [vmem:[%s596 + $0x78] sm:$0xff]
          %v1029 = vld [vmem:[%s602] sm:$0xff]
          %v1030 = vld [vmem:[%s602 + $0x8] sm:$0xff]
          %v1031 = vld [vmem:[%s602 + $0x10] sm:$0xff]
          %v1032 = vld [vmem:[%s602 + $0x18] sm:$0xff]
          %v1033 = vld [vmem:[%s602 + $0x20] sm:$0xff]
          %v1034 = vld [vmem:[%s602 + $0x28] sm:$0xff]
          %v1035 = vld [vmem:[%s602 + $0x30] sm:$0xff]
          %v1036 = vld [vmem:[%s602 + $0x38] sm:$0xff]
          %v1037 = vld [vmem:[%s602 + $0x40] sm:$0xff]
          %v1038 = vld [vmem:[%s602 + $0x48] sm:$0xff]
          %v1039 = vld [vmem:[%s602 + $0x50] sm:$0xff]
          %v1040 = vld [vmem:[%s602 + $0x58] sm:$0xff]
          %v1041 = vld [vmem:[%s602 + $0x60] sm:$0xff]
          %v1042 = vld [vmem:[%s602 + $0x68] sm:$0xff]
          %v1043 = vld [vmem:[%s602 + $0x70] sm:$0xff]
          %v1044 = vld [vmem:[%s602 + $0x78] sm:$0xff]
          %v1045 = vld [vmem:[%s567] sm:$0xff]
          %v1046 = vld [vmem:[%s567 + $0x8] sm:$0xff]
          %v1047 = vld [vmem:[%s567 + $0x10] sm:$0xff]
          %v1048 = vld [vmem:[%s567 + $0x18] sm:$0xff]
          %v1049 = vld [vmem:[%s567 + $0x20] sm:$0xff]
          %v1050 = vld [vmem:[%s567 + $0x28] sm:$0xff]
          %v1051 = vld [vmem:[%s567 + $0x30] sm:$0xff]
          %v1052 = vld [vmem:[%s567 + $0x38] sm:$0xff]
          %v1053 = vld [vmem:[%s567 + $0x40] sm:$0xff]
          %v1054 = vld [vmem:[%s567 + $0x48] sm:$0xff]
          %v1055 = vld [vmem:[%s567 + $0x50] sm:$0xff]
          %v1056 = vld [vmem:[%s567 + $0x58] sm:$0xff]
          %v1057 = vld [vmem:[%s567 + $0x60] sm:$0xff]
          %v1058 = vld [vmem:[%s567 + $0x68] sm:$0xff]
          %v1059 = vld [vmem:[%s567 + $0x70] sm:$0xff]
          %v1060 = vld [vmem:[%s567 + $0x78] sm:$0xff]
          %1062 = vset.pattern.permute.xlu0 0
          %1063 = vperm.xlu0 %1062, %v1045
          %v1064 = vpop.permute.xlu0 %1063
          %1067 = vset.pattern.permute.xlu0 0
          %1068 = vperm.xlu0 %1067, %v1046
          %v1069 = vpop.permute.xlu0 %1068
          %1072 = vset.pattern.permute.xlu0 0
          %1073 = vperm.xlu0 %1072, %v1047
          %v1074 = vpop.permute.xlu0 %1073
          %1077 = vset.pattern.permute.xlu0 0
          %1078 = vperm.xlu0 %1077, %v1048
          %v1079 = vpop.permute.xlu0 %1078
          %1082 = vset.pattern.permute.xlu0 0
          %1083 = vperm.xlu0 %1082, %v1049
          %v1084 = vpop.permute.xlu0 %1083
          %1087 = vset.pattern.permute.xlu0 0
          %1088 = vperm.xlu0 %1087, %v1050
          %v1089 = vpop.permute.xlu0 %1088
          %1092 = vset.pattern.permute.xlu0 0
          %1093 = vperm.xlu0 %1092, %v1051
          %v1094 = vpop.permute.xlu0 %1093
          %1097 = vset.pattern.permute.xlu0 0
          %1098 = vperm.xlu0 %1097, %v1052
          %v1099 = vpop.permute.xlu0 %1098
          %1102 = vset.pattern.permute.xlu0 0
          %1103 = vperm.xlu0 %1102, %v1053
          %v1104 = vpop.permute.xlu0 %1103
          %1107 = vset.pattern.permute.xlu0 0
          %1108 = vperm.xlu0 %1107, %v1054
          %v1109 = vpop.permute.xlu0 %1108
          %1112 = vset.pattern.permute.xlu0 0
          %1113 = vperm.xlu0 %1112, %v1055
          %v1114 = vpop.permute.xlu0 %1113
          %1117 = vset.pattern.permute.xlu0 0
          %1118 = vperm.xlu0 %1117, %v1056
          %v1119 = vpop.permute.xlu0 %1118
          %1122 = vset.pattern.permute.xlu0 0
          %1123 = vperm.xlu0 %1122, %v1057
          %v1124 = vpop.permute.xlu0 %1123
          %1127 = vset.pattern.permute.xlu0 0
          %1128 = vperm.xlu0 %1127, %v1058
          %v1129 = vpop.permute.xlu0 %1128
          %1132 = vset.pattern.permute.xlu0 0
          %1133 = vperm.xlu0 %1132, %v1059
          %v1134 = vpop.permute.xlu0 %1133
          %1137 = vset.pattern.permute.xlu0 0
          %1138 = vperm.xlu0 %1137, %v1060
          %v1139 = vpop.permute.xlu0 %1138
          %v1141 = vmul.f32 %v1013, %v1064
          %v1142 = vmul.f32 %v1014, %v1069
          %v1143 = vmul.f32 %v1015, %v1074
          %v1144 = vmul.f32 %v1016, %v1079
          %v1145 = vmul.f32 %v1017, %v1084
          %v1146 = vmul.f32 %v1018, %v1089
          %v1147 = vmul.f32 %v1019, %v1094
          %v1148 = vmul.f32 %v1020, %v1099
          %v1149 = vmul.f32 %v1021, %v1104
          %v1150 = vmul.f32 %v1022, %v1109
          %v1151 = vmul.f32 %v1023, %v1114
          %v1152 = vmul.f32 %v1024, %v1119
          %v1153 = vmul.f32 %v1025, %v1124
          %v1154 = vmul.f32 %v1026, %v1129
          %v1155 = vmul.f32 %v1027, %v1134
          %v1156 = vmul.f32 %v1028, %v1139
          %v1157 = vld [vmem:[%s582] sm:$0xff]
          %v1158 = vld [vmem:[%s582 + $0x8] sm:$0xff]
          %v1159 = vld [vmem:[%s582 + $0x10] sm:$0xff]
          %v1160 = vld [vmem:[%s582 + $0x18] sm:$0xff]
          %v1161 = vld [vmem:[%s582 + $0x20] sm:$0xff]
          %v1162 = vld [vmem:[%s582 + $0x28] sm:$0xff]
          %v1163 = vld [vmem:[%s582 + $0x30] sm:$0xff]
          %v1164 = vld [vmem:[%s582 + $0x38] sm:$0xff]
          %v1165 = vld [vmem:[%s582 + $0x40] sm:$0xff]
          %v1166 = vld [vmem:[%s582 + $0x48] sm:$0xff]
          %v1167 = vld [vmem:[%s582 + $0x50] sm:$0xff]
          %v1168 = vld [vmem:[%s582 + $0x58] sm:$0xff]
          %v1169 = vld [vmem:[%s582 + $0x60] sm:$0xff]
          %v1170 = vld [vmem:[%s582 + $0x68] sm:$0xff]
          %v1171 = vld [vmem:[%s582 + $0x70] sm:$0xff]
          %v1172 = vld [vmem:[%s582 + $0x78] sm:$0xff]
          %1174 = vset.pattern.permute.xlu0 0
          %1175 = vperm.xlu0 %1174, %v1157
          %v1176 = vpop.permute.xlu0 %1175
          %1179 = vset.pattern.permute.xlu0 0
          %1180 = vperm.xlu0 %1179, %v1158
          %v1181 = vpop.permute.xlu0 %1180
          %1184 = vset.pattern.permute.xlu0 0
          %1185 = vperm.xlu0 %1184, %v1159
          %v1186 = vpop.permute.xlu0 %1185
          %1189 = vset.pattern.permute.xlu0 0
          %1190 = vperm.xlu0 %1189, %v1160
          %v1191 = vpop.permute.xlu0 %1190
          %1194 = vset.pattern.permute.xlu0 0
          %1195 = vperm.xlu0 %1194, %v1161
          %v1196 = vpop.permute.xlu0 %1195
          %1199 = vset.pattern.permute.xlu0 0
          %1200 = vperm.xlu0 %1199, %v1162
          %v1201 = vpop.permute.xlu0 %1200
          %1204 = vset.pattern.permute.xlu0 0
          %1205 = vperm.xlu0 %1204, %v1163
          %v1206 = vpop.permute.xlu0 %1205
          %1209 = vset.pattern.permute.xlu0 0
          %1210 = vperm.xlu0 %1209, %v1164
          %v1211 = vpop.permute.xlu0 %1210
          %1214 = vset.pattern.permute.xlu0 0
          %1215 = vperm.xlu0 %1214, %v1165
          %v1216 = vpop.permute.xlu0 %1215
          %1219 = vset.pattern.permute.xlu0 0
          %1220 = vperm.xlu0 %1219, %v1166
          %v1221 = vpop.permute.xlu0 %1220
          %1224 = vset.pattern.permute.xlu0 0
          %1225 = vperm.xlu0 %1224, %v1167
          %v1226 = vpop.permute.xlu0 %1225
          %1229 = vset.pattern.permute.xlu0 0
          %1230 = vperm.xlu0 %1229, %v1168
          %v1231 = vpop.permute.xlu0 %1230
          %1234 = vset.pattern.permute.xlu0 0
          %1235 = vperm.xlu0 %1234, %v1169
          %v1236 = vpop.permute.xlu0 %1235
          %1239 = vset.pattern.permute.xlu0 0
          %1240 = vperm.xlu0 %1239, %v1170
          %v1241 = vpop.permute.xlu0 %1240
          %1244 = vset.pattern.permute.xlu0 0
          %1245 = vperm.xlu0 %1244, %v1171
          %v1246 = vpop.permute.xlu0 %1245
          %1249 = vset.pattern.permute.xlu0 0
          %1250 = vperm.xlu0 %1249, %v1172
          %v1251 = vpop.permute.xlu0 %1250
          %v1253 = vmul.f32 %v1029, %v1176
          %v1254 = vmul.f32 %v1030, %v1181
          %v1255 = vmul.f32 %v1031, %v1186
          %v1256 = vmul.f32 %v1032, %v1191
          %v1257 = vmul.f32 %v1033, %v1196
          %v1258 = vmul.f32 %v1034, %v1201
          %v1259 = vmul.f32 %v1035, %v1206
          %v1260 = vmul.f32 %v1036, %v1211
          %v1261 = vmul.f32 %v1037, %v1216
          %v1262 = vmul.f32 %v1038, %v1221
          %v1263 = vmul.f32 %v1039, %v1226
          %v1264 = vmul.f32 %v1040, %v1231
          %v1265 = vmul.f32 %v1041, %v1236
          %v1266 = vmul.f32 %v1042, %v1241
          %v1267 = vmul.f32 %v1043, %v1246
          %v1268 = vmul.f32 %v1044, %v1251
          %vm1269 = vcmp.gt.f32.partialorder %v1141, 0.0
          %vm1270 = vcmp.gt.f32.partialorder %v1142, 0.0
          %vm1271 = vcmp.gt.f32.partialorder %v1143, 0.0
          %vm1272 = vcmp.gt.f32.partialorder %v1144, 0.0
          %vm1273 = vcmp.gt.f32.partialorder %v1145, 0.0
          %vm1274 = vcmp.gt.f32.partialorder %v1146, 0.0
          %vm1275 = vcmp.gt.f32.partialorder %v1147, 0.0
          %vm1276 = vcmp.gt.f32.partialorder %v1148, 0.0
          %vm1277 = vcmp.gt.f32.partialorder %v1149, 0.0
          %vm1278 = vcmp.gt.f32.partialorder %v1150, 0.0
          %vm1279 = vcmp.gt.f32.partialorder %v1151, 0.0
          %vm1280 = vcmp.gt.f32.partialorder %v1152, 0.0
          %vm1281 = vcmp.gt.f32.partialorder %v1153, 0.0
          %vm1282 = vcmp.gt.f32.partialorder %v1154, 0.0
          %vm1283 = vcmp.gt.f32.partialorder %v1155, 0.0
          %vm1284 = vcmp.gt.f32.partialorder %v1156, 0.0
          %v1285 = vmul.f32 %v1141, 0.5
          %v1286 = vmul.f32 %v1142, 0.5
          %v1287 = vmul.f32 %v1143, 0.5
          %v1288 = vmul.f32 %v1144, 0.5
          %v1289 = vmul.f32 %v1145, 0.5
          %v1290 = vmul.f32 %v1146, 0.5
          %v1291 = vmul.f32 %v1147, 0.5
          %v1292 = vmul.f32 %v1148, 0.5
          %v1293 = vmul.f32 %v1149, 0.5
          %v1294 = vmul.f32 %v1150, 0.5
          %v1295 = vmul.f32 %v1151, 0.5
          %v1296 = vmul.f32 %v1152, 0.5
          %v1297 = vmul.f32 %v1153, 0.5
          %v1298 = vmul.f32 %v1154, 0.5
          %v1299 = vmul.f32 %v1155, 0.5
          %v1300 = vmul.f32 %v1156, 0.5
          %v1301 = vsel %vm1269, %v1141, %v1285
          %v1302 = vsel %vm1270, %v1142, %v1286
          %v1303 = vsel %vm1271, %v1143, %v1287
          %v1304 = vsel %vm1272, %v1144, %v1288
          %v1305 = vsel %vm1273, %v1145, %v1289
          %v1306 = vsel %vm1274, %v1146, %v1290
          %v1307 = vsel %vm1275, %v1147, %v1291
          %v1308 = vsel %vm1276, %v1148, %v1292
          %v1309 = vsel %vm1277, %v1149, %v1293
          %v1310 = vsel %vm1278, %v1150, %v1294
          %v1311 = vsel %vm1279, %v1151, %v1295
          %v1312 = vsel %vm1280, %v1152, %v1296
          %v1313 = vsel %vm1281, %v1153, %v1297
          %v1314 = vsel %vm1282, %v1154, %v1298
          %v1315 = vsel %vm1283, %v1155, %v1299
          %v1316 = vsel %vm1284, %v1156, %v1300
          %vm1317 = vcmp.gt.f32.partialorder %v1253, 0.0
          %vm1318 = vcmp.gt.f32.partialorder %v1254, 0.0
          %vm1319 = vcmp.gt.f32.partialorder %v1255, 0.0
          %vm1320 = vcmp.gt.f32.partialorder %v1256, 0.0
          %vm1321 = vcmp.gt.f32.partialorder %v1257, 0.0
          %vm1322 = vcmp.gt.f32.partialorder %v1258, 0.0
          %vm1323 = vcmp.gt.f32.partialorder %v1259, 0.0
          %vm1324 = vcmp.gt.f32.partialorder %v1260, 0.0
          %vm1325 = vcmp.gt.f32.partialorder %v1261, 0.0
          %vm1326 = vcmp.gt.f32.partialorder %v1262, 0.0
          %vm1327 = vcmp.gt.f32.partialorder %v1263, 0.0
          %vm1328 = vcmp.gt.f32.partialorder %v1264, 0.0
          %vm1329 = vcmp.gt.f32.partialorder %v1265, 0.0
          %vm1330 = vcmp.gt.f32.partialorder %v1266, 0.0
          %vm1331 = vcmp.gt.f32.partialorder %v1267, 0.0
          %vm1332 = vcmp.gt.f32.partialorder %v1268, 0.0
          %v1333 = vmul.f32 %v1253, 0.5
          %v1334 = vmul.f32 %v1254, 0.5
          %v1335 = vmul.f32 %v1255, 0.5
          %v1336 = vmul.f32 %v1256, 0.5
          %v1337 = vmul.f32 %v1257, 0.5
          %v1338 = vmul.f32 %v1258, 0.5
          %v1339 = vmul.f32 %v1259, 0.5
          %v1340 = vmul.f32 %v1260, 0.5
          %v1341 = vmul.f32 %v1261, 0.5
          %v1342 = vmul.f32 %v1262, 0.5
          %v1343 = vmul.f32 %v1263, 0.5
          %v1344 = vmul.f32 %v1264, 0.5
          %v1345 = vmul.f32 %v1265, 0.5
          %v1346 = vmul.f32 %v1266, 0.5
          %v1347 = vmul.f32 %v1267, 0.5
          %v1348 = vmul.f32 %v1268, 0.5
          %v1349 = vsel %vm1317, %v1253, %v1333
          %v1350 = vsel %vm1318, %v1254, %v1334
          %v1351 = vsel %vm1319, %v1255, %v1335
          %v1352 = vsel %vm1320, %v1256, %v1336
          %v1353 = vsel %vm1321, %v1257, %v1337
          %v1354 = vsel %vm1322, %v1258, %v1338
          %v1355 = vsel %vm1323, %v1259, %v1339
          %v1356 = vsel %vm1324, %v1260, %v1340
          %v1357 = vsel %vm1325, %v1261, %v1341
          %v1358 = vsel %vm1326, %v1262, %v1342
          %v1359 = vsel %vm1327, %v1263, %v1343
          %v1360 = vsel %vm1328, %v1264, %v1344
          %v1361 = vsel %vm1329, %v1265, %v1345
          %v1362 = vsel %vm1330, %v1266, %v1346
          %v1363 = vsel %vm1331, %v1267, %v1347
          %v1364 = vsel %vm1332, %v1268, %v1348
          %v1365 = vadd.f32 %v1301, %v1349
          %v1366 = vadd.f32 %v1302, %v1350
          %v1367 = vadd.f32 %v1303, %v1351
          %v1368 = vadd.f32 %v1304, %v1352
          %v1369 = vadd.f32 %v1305, %v1353
          %v1370 = vadd.f32 %v1306, %v1354
          %v1371 = vadd.f32 %v1307, %v1355
          %v1372 = vadd.f32 %v1308, %v1356
          %v1373 = vadd.f32 %v1309, %v1357
          %v1374 = vadd.f32 %v1310, %v1358
          %v1375 = vadd.f32 %v1311, %v1359
          %v1376 = vadd.f32 %v1312, %v1360
          %v1377 = vadd.f32 %v1313, %v1361
          %v1378 = vadd.f32 %v1314, %v1362
          %v1379 = vadd.f32 %v1315, %v1363
          %v1380 = vadd.f32 %v1316, %v1364
          %1381 = vst [vmem:[%s596] sm:$0xff] %v1301
          %1382 = vst [vmem:[%s596 + $0x8] sm:$0xff] %v1302
          %1383 = vst [vmem:[%s596 + $0x10] sm:$0xff] %v1303
          %1384 = vst [vmem:[%s596 + $0x18] sm:$0xff] %v1304
          %1385 = vst [vmem:[%s596 + $0x20] sm:$0xff] %v1305
          %1386 = vst [vmem:[%s596 + $0x28] sm:$0xff] %v1306
          %1387 = vst [vmem:[%s596 + $0x30] sm:$0xff] %v1307
          %1388 = vst [vmem:[%s596 + $0x38] sm:$0xff] %v1308
          %1389 = vst [vmem:[%s596 + $0x40] sm:$0xff] %v1309
          %1390 = vst [vmem:[%s596 + $0x48] sm:$0xff] %v1310
          %1391 = vst [vmem:[%s596 + $0x50] sm:$0xff] %v1311
          %1392 = vst [vmem:[%s596 + $0x58] sm:$0xff] %v1312
          %1393 = vst [vmem:[%s596 + $0x60] sm:$0xff] %v1313
          %1394 = vst [vmem:[%s596 + $0x68] sm:$0xff] %v1314
          %1395 = vst [vmem:[%s596 + $0x70] sm:$0xff] %v1315
          %1396 = vst [vmem:[%s596 + $0x78] sm:$0xff] %v1316
          %1397 = vst [vmem:[%s602] sm:$0xff] %v1349
          %1398 = vst [vmem:[%s602 + $0x8] sm:$0xff] %v1350
          %1399 = vst [vmem:[%s602 + $0x10] sm:$0xff] %v1351
          %1400 = vst [vmem:[%s602 + $0x18] sm:$0xff] %v1352
          %1401 = vst [vmem:[%s602 + $0x20] sm:$0xff] %v1353
          %1402 = vst [vmem:[%s602 + $0x28] sm:$0xff] %v1354
          %1403 = vst [vmem:[%s602 + $0x30] sm:$0xff] %v1355
          %1404 = vst [vmem:[%s602 + $0x38] sm:$0xff] %v1356
          %1405 = vst [vmem:[%s602 + $0x40] sm:$0xff] %v1357
          %1406 = vst [vmem:[%s602 + $0x48] sm:$0xff] %v1358
          %1407 = vst [vmem:[%s602 + $0x50] sm:$0xff] %v1359
          %1408 = vst [vmem:[%s602 + $0x58] sm:$0xff] %v1360
          %1409 = vst [vmem:[%s602 + $0x60] sm:$0xff] %v1361
          %1410 = vst [vmem:[%s602 + $0x68] sm:$0xff] %v1362
          %1411 = vst [vmem:[%s602 + $0x70] sm:$0xff] %v1363
          %1412 = vst [vmem:[%s602 + $0x78] sm:$0xff] %v1364
          %v1413 = vpack.c.bf16 %v1365, %v1365
          %v1414 = vpack.c.bf16 %v1366, %v1366
          %v1415 = vpack.c.bf16 %v1367, %v1367
          %v1416 = vpack.c.bf16 %v1368, %v1368
          %v1417 = vpack.c.bf16 %v1369, %v1369
          %v1418 = vpack.c.bf16 %v1370, %v1370
          %v1419 = vpack.c.bf16 %v1371, %v1371
          %v1420 = vpack.c.bf16 %v1372, %v1372
          %v1421 = vpack.c.bf16 %v1373, %v1373
          %v1422 = vpack.c.bf16 %v1374, %v1374
          %v1423 = vpack.c.bf16 %v1375, %v1375
          %v1424 = vpack.c.bf16 %v1376, %v1376
          %v1425 = vpack.c.bf16 %v1377, %v1377
          %v1426 = vpack.c.bf16 %v1378, %v1378
          %v1427 = vpack.c.bf16 %v1379, %v1379
          %v1428 = vpack.c.bf16 %v1380, %v1380
          %1429 = vst [vmem:[%s608] sm:$0xf] %v1413
          %1430 = vst [vmem:[%s608 + $0x4] sm:$0xf] %v1414
          %1431 = vst [vmem:[%s608 + $0x8] sm:$0xf] %v1415
          %1432 = vst [vmem:[%s608 + $0xc] sm:$0xf] %v1416
          %1433 = vst [vmem:[%s608 + $0x10] sm:$0xf] %v1417
          %1434 = vst [vmem:[%s608 + $0x14] sm:$0xf] %v1418
          %1435 = vst [vmem:[%s608 + $0x18] sm:$0xf] %v1419
          %1436 = vst [vmem:[%s608 + $0x1c] sm:$0xf] %v1420
          %1437 = vst [vmem:[%s608 + $0x20] sm:$0xf] %v1421
          %1438 = vst [vmem:[%s608 + $0x24] sm:$0xf] %v1422
          %1439 = vst [vmem:[%s608 + $0x28] sm:$0xf] %v1423
          %1440 = vst [vmem:[%s608 + $0x2c] sm:$0xf] %v1424
          %1441 = vst [vmem:[%s608 + $0x30] sm:$0xf] %v1425
          %1442 = vst [vmem:[%s608 + $0x34] sm:$0xf] %v1426
          %1443 = vst [vmem:[%s608 + $0x38] sm:$0xf] %v1427
          %1444 = vst [vmem:[%s608 + $0x3c] sm:$0xf] %v1428
          %v1445 = vld [vmem:[%s590] sm:$0xff]
          %v1446 = vld [vmem:[%s590 + $0x8] sm:$0xff]
          %v1447 = vld [vmem:[%s590 + $0x10] sm:$0xff]
          %v1448 = vld [vmem:[%s590 + $0x18] sm:$0xff]
          %v1449 = vld [vmem:[%s590 + $0x20] sm:$0xff]
          %v1450 = vld [vmem:[%s590 + $0x28] sm:$0xff]
          %v1451 = vld [vmem:[%s590 + $0x30] sm:$0xff]
          %v1452 = vld [vmem:[%s590 + $0x38] sm:$0xff]
          %v1453 = vld [vmem:[%s590 + $0x40] sm:$0xff]
          %v1454 = vld [vmem:[%s590 + $0x48] sm:$0xff]
          %v1455 = vld [vmem:[%s590 + $0x50] sm:$0xff]
          %v1456 = vld [vmem:[%s590 + $0x58] sm:$0xff]
          %v1457 = vld [vmem:[%s590 + $0x60] sm:$0xff]
          %v1458 = vld [vmem:[%s590 + $0x68] sm:$0xff]
          %v1459 = vld [vmem:[%s590 + $0x70] sm:$0xff]
          %v1460 = vld [vmem:[%s590 + $0x78] sm:$0xff]
          %v1461 = vadd.f32 %v1445, %v1365
          %v1462 = vadd.f32 %v1446, %v1366
          %v1463 = vadd.f32 %v1447, %v1367
          %v1464 = vadd.f32 %v1448, %v1368
          %v1465 = vadd.f32 %v1449, %v1369
          %v1466 = vadd.f32 %v1450, %v1370
          %v1467 = vadd.f32 %v1451, %v1371
          %v1468 = vadd.f32 %v1452, %v1372
          %v1469 = vadd.f32 %v1453, %v1373
          %v1470 = vadd.f32 %v1454, %v1374
          %v1471 = vadd.f32 %v1455, %v1375
          %v1472 = vadd.f32 %v1456, %v1376
          %v1473 = vadd.f32 %v1457, %v1377
          %v1474 = vadd.f32 %v1458, %v1378
          %v1475 = vadd.f32 %v1459, %v1379
          %v1476 = vadd.f32 %v1460, %v1380
          %1477 = vst [vmem:[%s614] sm:$0xff] %v1461
          %1478 = vst [vmem:[%s614 + $0x8] sm:$0xff] %v1462
          %1479 = vst [vmem:[%s614 + $0x10] sm:$0xff] %v1463
          %1480 = vst [vmem:[%s614 + $0x18] sm:$0xff] %v1464
          %1481 = vst [vmem:[%s614 + $0x20] sm:$0xff] %v1465
          %1482 = vst [vmem:[%s614 + $0x28] sm:$0xff] %v1466
          %1483 = vst [vmem:[%s614 + $0x30] sm:$0xff] %v1467
          %1484 = vst [vmem:[%s614 + $0x38] sm:$0xff] %v1468
          %1485 = vst [vmem:[%s614 + $0x40] sm:$0xff] %v1469
          %1486 = vst [vmem:[%s614 + $0x48] sm:$0xff] %v1470
          %1487 = vst [vmem:[%s614 + $0x50] sm:$0xff] %v1471
          %1488 = vst [vmem:[%s614 + $0x58] sm:$0xff] %v1472
          %1489 = vst [vmem:[%s614 + $0x60] sm:$0xff] %v1473
          %1490 = vst [vmem:[%s614 + $0x68] sm:$0xff] %v1474
          %1491 = vst [vmem:[%s614 + $0x70] sm:$0xff] %v1475
          %1492 = vst [vmem:[%s614 + $0x78] sm:$0xff] %v1476
        $region132: #{social_model_forward.2} parent=111 // pred_fallthru
          _
        %s1493 = smul.u32 16, %s25
        %p1494 = scmp.lt.s32.totalorder %s1493, 79
        %s1495 = scalar_select %p1494, %s1493, 79
        %s1496 = smul.addr %s1495, 8
        %s1497 = scalar_lea.vmem %s6, %s1496
        %s1498 = smul.u32 16, %s25
        %p1499 = scmp.lt.s32.totalorder %s1498, 79
        %s1500 = scalar_select %p1499, %s1498, 79
        %s1501 = smul.addr %s1500, 8
        %s1502 = scalar_lea.vmem %s7, %s1501
        %s1503 = smul.u32 16, %s25
        %p1504 = scmp.lt.s32.totalorder %s1503, 79
        %s1505 = scalar_select %p1504, %s1503, 79
        %s1506 = smul.addr %s1505, 4
        %s1507 = scalar_lea.vmem %s8, %s1506
        %s1508 = smul.u32 16, %s25
        %p1509 = scmp.lt.s32.totalorder %s1508, 79
        %s1510 = scalar_select %p1509, %s1508, 79
        %s1511 = smul.addr %s1510, 8
        %s1512 = scalar_lea.vmem %s9, %s1511
        // Predicated region
        $region133: #{social_model_forward.2} parent=111 // pred_check
          %p1513 = pneg %p222
        $region134: #{social_model_forward.2} parent=111 // pred_check_branch
          %1515 = sbr.rel (%p1513) target = $region136
        $region135: #{social_model_forward.2} parent=111 // pred_region
          %s1516 = smul.u32 16, %s25
        $region136: #{social_model_forward.2} parent=111 // pred_fallthru
          _
        // Predicated region
        $region137: #{social_model_forward.2} parent=111 // pred_check
          %p1517 = pneg %p248
        $region138: #{social_model_forward.2} parent=111 // pred_check_branch
          %1519 = sbr.rel (%p1517) target = $region140
        $region139: #{social_model_forward.2} parent=111 // pred_region
          %s1520 = smul.u32 16, %s25
        $region140: #{social_model_forward.2} parent=111 // pred_fallthru
          _
        // Predicated region
        $region141: #{social_model_forward.2} parent=111 // pred_check
          %p1521 = pneg %p274
        $region142: #{social_model_forward.2} parent=111 // pred_check_branch
          %1523 = sbr.rel (%p1521) target = $region144
        $region143: #{social_model_forward.2} parent=111 // pred_region
          %s1524 = smul.u32 16, %s25
        $region144: #{social_model_forward.2} parent=111 // pred_fallthru
          _
        // Predicated region
        $region145: #{social_model_forward.2} parent=111 // pred_check
          %p1525 = pneg %p300
        $region146: #{social_model_forward.2} parent=111 // pred_check_branch
          %1527 = sbr.rel (%p1525) target = $region148
        $region147: #{social_model_forward.2} parent=111 // pred_region
          %s1528 = smul.u32 16, %s25
        $region148: #{social_model_forward.2} parent=111 // pred_fallthru
          _
      $region112: #{social_model_forward.2} parent=5 // pred_fallthru
        _
      %p1529 = scmp.le.s32.totalorder 2, %s16
      // Predicated region
      $region149: #{social_model_forward.2} parent=5 // pred_check
        %p1530 = pneg %p1529
      $region150: #{social_model_forward.2} parent=5 // pred_check_branch
        %1532 = sbr.rel (%p1530) target = $region152
      $region151: #{social_model_forward.2} parent=5 // pred_region
        %s1533 = ssub.s32 %s16, 2
        // Predicated region
        $region153: #{social_model_forward.2} parent=151 // pred_check
          %p1534 = pneg %p228
        $region154: #{social_model_forward.2} parent=151 // pred_check_branch
          %1536 = sbr.rel (%p1534) target = $region156
        $region155: #{social_model_forward.2} parent=151 // pred_region
          %s1537 = smul.u32 16, %s27
          %p1538 = scmp.lt.s32.totalorder %s1537, 79
          %s1539 = scalar_select %p1538, %s1537, 79
          %s1540 = smul.addr %s1539, 8
          %s1541 = scalar_lea.vmem %s6, %s1540
        $region156: #{social_model_forward.2} parent=151 // pred_fallthru
          _
        // Predicated region
        $region157: #{social_model_forward.2} parent=151 // pred_check
          %p1542 = pneg %p254
        $region158: #{social_model_forward.2} parent=151 // pred_check_branch
          %1544 = sbr.rel (%p1542) target = $region160
        $region159: #{social_model_forward.2} parent=151 // pred_region
          %s1545 = smul.u32 16, %s27
          %p1546 = scmp.lt.s32.totalorder %s1545, 79
          %s1547 = scalar_select %p1546, %s1545, 79
          %s1548 = smul.addr %s1547, 8
          %s1549 = scalar_lea.vmem %s7, %s1548
        $region160: #{social_model_forward.2} parent=151 // pred_fallthru
          _
        // Predicated region
        $region161: #{social_model_forward.2} parent=151 // pred_check
          %p1550 = pneg %p280
        $region162: #{social_model_forward.2} parent=151 // pred_check_branch
          %1552 = sbr.rel (%p1550) target = $region164
        $region163: #{social_model_forward.2} parent=151 // pred_region
          %s1553 = smul.u32 16, %s27
          %p1554 = scmp.lt.s32.totalorder %s1553, 79
          %s1555 = scalar_select %p1554, %s1553, 79
          %s1556 = smul.addr %s1555, 4
          %s1557 = scalar_lea.vmem %s8, %s1556
        $region164: #{social_model_forward.2} parent=151 // pred_fallthru
          _
        // Predicated region
        $region165: #{social_model_forward.2} parent=151 // pred_check
          %p1558 = pneg %p306
        $region166: #{social_model_forward.2} parent=151 // pred_check_branch
          %1560 = sbr.rel (%p1558) target = $region168
        $region167: #{social_model_forward.2} parent=151 // pred_region
          %s1561 = smul.u32 16, %s27
          %p1562 = scmp.lt.s32.totalorder %s1561, 79
          %s1563 = scalar_select %p1562, %s1561, 79
          %s1564 = smul.addr %s1563, 8
          %s1565 = scalar_lea.vmem %s9, %s1564
        $region168: #{social_model_forward.2} parent=151 // pred_fallthru
          _
      $region152: #{social_model_forward.2} parent=5 // pred_fallthru
        _
    $region6: #{social_model_forward.2} parent=1 // loop_footer
      %s20 = sadd.s32 1, %s16
    $region7: #{social_model_forward.2} parent=1 // loop_footer_branch
      %15 = sbr.rel target = $region3
    $region8: #{social_model_forward.2} parent=1 // loop_exit
      _

// kernel: social_model_forward.3
$region0: #{social_model_forward.3}
  #allocation0 [shape = 'u32[]', space=smem, size = 0x4, offset = 0x4, fixed_abs, tag = 'smem constant byte address 0x4 - core index']
  #allocation1 [shape = 'u32[72,128]{1,0:T(1,128)}', space=vmem, size = 0x9000, scoped, tag = 'internal scratch']
  %s0 = inlined_call_operand.vmem [shape: s8[640,640], index: 0, kind: input, shape index: {}]
  %s1 = inlined_call_operand.vmem [shape: f32[640,1], index: 1, kind: input, shape index: {}]
  %s2 = inlined_call_operand.vmem [shape: s8[256,256], index: 2, kind: input, shape index: {}]
  %s3 = inlined_call_operand.vmem [shape: f32[256,1], index: 3, kind: input, shape index: {}]
  %s4 = inlined_call_operand.vmem [shape: bf16[640,128], index: 4, kind: input, shape index: {}]
  %s5 = inlined_call_operand.vmem [shape: f32[640,128], index: 5, kind: input, shape index: {}, may-alias: {5,9}]
  %s6 = inlined_call_operand.vmem [shape: f32[640,128], index: 6, kind: output, shape index: {0}]
  %s7 = inlined_call_operand.vmem [shape: f32[640,128], index: 7, kind: output, shape index: {1}]
  %s8 = inlined_call_operand.hbm [shape: bf16[640,128], index: 8, kind: output, shape index: {2}]
  %s9 = inlined_call_operand.vmem [shape: f32[640,128], index: 9, kind: output, shape index: {3}, may-alias: {5,9}]
  %10 = xla_tuple %s6, %s7, %s8, %s9
  %s11 = sld [smem:[#allocation0]]
  $region169: #{social_model_forward.3} parent=0
    _
  %s13 = ssub.s32 1, %s11
  %s14 = scalar_select 0, %s13, %s11
  $region1: #{social_model_forward.3} parent=0
    #allocation2 [shape = 'u8[32768]{0}', space=vmem, size = 0x8000, scoped, tag = 'input window, operand 0']
    #allocation3 [shape = 'u8[32768]{0}', space=vmem, size = 0x8000, scoped, tag = 'input window, operand 2']
    #allocation4 [shape = 'u8[65536]{0}', space=vmem, size = 0x10000, scoped, tag = 'output window, operand 2']
    #allocation5 [shape = 's32[2]{0}', space=sflag, size = 0x8, scoped, tag = 'scoped memory for social_model_forward.3']
    %15 = vsyncpa [#allocation5], 0
    %s16 = scalar_lea.sflag [#allocation5], 1
    %17 = vsyncpa %s16, 0
    loop: start=0, step=1, limit=27
    $region2: #{social_model_forward.3} parent=1 // loop_pre_header
      _
    $region3: #{social_model_forward.3} parent=1 // loop_header
      %s19 = sphi 0, %s23
      %p20 = scmp.ge.s32.totalorder %s19, 27
      %s26 = sphi 0, %s38
      %s27 = sphi 0, %s34
      %s28 = sphi 0, %s26
      %s29 = sphi 0, %s27
      %s30 = sphi 0, %s28
      %s31 = sphi 0, %s29
      %s43 = sphi 0, %s45
      %s46 = sphi 0, %s43
      %s47 = sphi 0, %s46
      %s63 = sphi 0, %s47
      %s69 = sphi 0, %s71
      %s72 = sphi 0, %s69
      %s73 = sphi 0, %s72
      %s89 = sphi 0, %s73
      %s109 = sphi 0, %s111
      %s112 = sphi 0, %s109
      %s113 = sphi 0, %s112
      %s129 = sphi 0, %s113
      %s139 = sphi 0, %s141
      %s142 = sphi 0, %s139
      %s143 = sphi 0, %s142
      %s159 = sphi 0, %s143
      %s163 = sphi 0, %s163
      %s165 = sphi 0, %s163
      %s166 = sphi 0, %s165
      %s180 = sphi 0, %s166
      %s186 = sphi 0, %s188
      %s189 = sphi 0, %s186
      %s190 = sphi 0, %s189
      %s206 = sphi 0, %s190
      %s212 = sphi 0, %s214
      %s215 = sphi 0, %s212
      %s216 = sphi 0, %s215
      %s232 = sphi 0, %s216
      %s238 = sphi 0, %s240
      %s241 = sphi 0, %s238
      %s242 = sphi 0, %s241
      %s258 = sphi 0, %s242
      %s264 = sphi 0, %s266
      %s267 = sphi 0, %s264
      %s268 = sphi 0, %s267
      %s284 = sphi 0, %s268
      %s290 = sphi 0, %s292
      %s293 = sphi 0, %s290
      %s294 = sphi 0, %s293
      %s310 = sphi 0, %s294
    $region4: #{social_model_forward.3} parent=1 // loop_header_branch
      %22 = sbr.rel (%p20) target = $region8
    $region5: #{social_model_forward.3} parent=1 // loop_body
      %s24 = ssub.s32 %s19, 1
      %s25 = ssub.s32 %s19, 2
      %s32 = sadd.s32 1, %s27
      %p33 = scmp.ge.s32.totalorder %s32, 5
      %s34 = scalar_select %p33, 0, %s32
      %s35 = sadd.s32 1, %s26
      %s36 = scalar_select %p33, %s35, %s26
      %p37 = scmp.ge.s32.totalorder %s36, 5
      %s38 = scalar_select %p37, 0, %s36
      %s39 = ssub.s32 %s26, %s38
      %s40 = ssub.s32 %s27, %s34
      %s41 = sor.u32 %s39, %s40
      %p42 = scmp.eq.s32.totalorder %s41, 0
      %s44 = sadd.s32 %s43, 1
      %s45 = scalar_select %p42, %s43, %s44
      %p48 = pneg %p42
      %p49 = scmp.eq.s32.totalorder %s19, 24
      %p50 = por %p48, %p49
      %p51 = scmp.ne.s32.totalorder %s43, %s46
      %p52 = scmp.eq.s32.totalorder %s19, 0
      %p53 = por %p51, %p52
      %p54 = scmp.ne.s32.totalorder %s43, %s46
      %p55 = scmp.eq.s32.totalorder %s24, 24
      %p56 = por %p54, %p55
      %p57 = scmp.ne.s32.totalorder %s46, %s47
      %p58 = scmp.eq.s32.totalorder %s24, 0
      %p59 = por %p57, %p58
      %p60 = scmp.ne.s32.totalorder %s46, %s47
      %p61 = scmp.eq.s32.totalorder %s25, 24
      %p62 = por %p60, %p61
      %p64 = scmp.ne.s32.totalorder %s47, %s63
      %p65 = scmp.eq.s32.totalorder %s25, 0
      %p66 = por %p64, %p65
      %s67 = ssub.s32 %s26, %s38
      %p68 = scmp.eq.s32.totalorder %s67, 0
      %s70 = sadd.s32 %s69, 1
      %s71 = scalar_select %p68, %s69, %s70
      %p74 = pneg %p68
      %p75 = scmp.eq.s32.totalorder %s19, 24
      %p76 = por %p74, %p75
      %p77 = scmp.ne.s32.totalorder %s69, %s72
      %p78 = scmp.eq.s32.totalorder %s19, 0
      %p79 = por %p77, %p78
      %p80 = scmp.ne.s32.totalorder %s69, %s72
      %p81 = scmp.eq.s32.totalorder %s24, 24
      %p82 = por %p80, %p81
      %p83 = scmp.ne.s32.totalorder %s72, %s73
      %p84 = scmp.eq.s32.totalorder %s24, 0
      %p85 = por %p83, %p84
      %p86 = scmp.ne.s32.totalorder %s72, %s73
      %p87 = scmp.eq.s32.totalorder %s25, 24
      %p88 = por %p86, %p87
      %p90 = scmp.ne.s32.totalorder %s73, %s89
      %p91 = scmp.eq.s32.totalorder %s25, 0
      %p92 = por %p90, %p91
      %p93 = scmp.lt.s32.totalorder %s26, 1
      %s94 = scalar_select %p93, %s26, 1
      %p95 = scmp.lt.s32.totalorder %s26, 2
      %p96 = scmp.lt.s32.totalorder %s27, 1
      %s97 = scalar_select %p96, %s27, 1
      %s98 = scalar_select %p95, %s97, 0
      %p99 = scmp.lt.s32.totalorder %s38, 1
      %s100 = scalar_select %p99, %s38, 1
      %p101 = scmp.lt.s32.totalorder %s38, 2
      %p102 = scmp.lt.s32.totalorder %s34, 1
      %s103 = scalar_select %p102, %s34, 1
      %s104 = scalar_select %p101, %s103, 0
      %s105 = ssub.s32 %s94, %s100
      %s106 = ssub.s32 %s98, %s104
      %s107 = sor.u32 %s105, %s106
      %p108 = scmp.eq.s32.totalorder %s107, 0
      %s110 = sadd.s32 %s109, 1
      %s111 = scalar_select %p108, %s109, %s110
      %p114 = pneg %p108
      %p115 = scmp.eq.s32.totalorder %s19, 24
      %p116 = por %p114, %p115
      %p117 = scmp.ne.s32.totalorder %s109, %s112
      %p118 = scmp.eq.s32.totalorder %s19, 0
      %p119 = por %p117, %p118
      %p120 = scmp.ne.s32.totalorder %s109, %s112
      %p121 = scmp.eq.s32.totalorder %s24, 24
      %p122 = por %p120, %p121
      %p123 = scmp.ne.s32.totalorder %s112, %s113
      %p124 = scmp.eq.s32.totalorder %s24, 0
      %p125 = por %p123, %p124
      %p126 = scmp.ne.s32.totalorder %s112, %s113
      %p127 = scmp.eq.s32.totalorder %s25, 24
      %p128 = por %p126, %p127
      %p130 = scmp.ne.s32.totalorder %s113, %s129
      %p131 = scmp.eq.s32.totalorder %s25, 0
      %p132 = por %p130, %p131
      %p133 = scmp.lt.s32.totalorder %s26, 1
      %s134 = scalar_select %p133, %s26, 1
      %p135 = scmp.lt.s32.totalorder %s38, 1
      %s136 = scalar_select %p135, %s38, 1
      %s137 = ssub.s32 %s134, %s136
      %p138 = scmp.eq.s32.totalorder %s137, 0
      %s140 = sadd.s32 %s139, 1
      %s141 = scalar_select %p138, %s139, %s140
      %p144 = pneg %p138
      %p145 = scmp.eq.s32.totalorder %s19, 24
      %p146 = por %p144, %p145
      %p147 = scmp.ne.s32.totalorder %s139, %s142
      %p148 = scmp.eq.s32.totalorder %s19, 0
      %p149 = por %p147, %p148
      %p150 = scmp.ne.s32.totalorder %s139, %s142
      %p151 = scmp.eq.s32.totalorder %s24, 24
      %p152 = por %p150, %p151
      %p153 = scmp.ne.s32.totalorder %s142, %s143
      %p154 = scmp.eq.s32.totalorder %s24, 0
      %p155 = por %p153, %p154
      %p156 = scmp.ne.s32.totalorder %s142, %s143
      %p157 = scmp.eq.s32.totalorder %s25, 24
      %p158 = por %p156, %p157
      %p160 = scmp.ne.s32.totalorder %s143, %s159
      %p161 = scmp.eq.s32.totalorder %s25, 0
      %p162 = por %p160, %p161
      %s164 = sadd.s32 %s163, 1
      %p167 = scmp.eq.s32.totalorder %s19, 24
      %p168 = scmp.ne.s32.totalorder %s163, %s165
      %p169 = scmp.eq.s32.totalorder %s19, 0
      %p170 = por %p168, %p169
      %p171 = scmp.ne.s32.totalorder %s163, %s165
      %p172 = scmp.eq.s32.totalorder %s24, 24
      %p173 = por %p171, %p172
      %p174 = scmp.ne.s32.totalorder %s165, %s166
      %p175 = scmp.eq.s32.totalorder %s24, 0
      %p176 = por %p174, %p175
      %p177 = scmp.ne.s32.totalorder %s165, %s166
      %p178 = scmp.eq.s32.totalorder %s25, 24
      %p179 = por %p177, %p178
      %p181 = scmp.ne.s32.totalorder %s166, %s180
      %p182 = scmp.eq.s32.totalorder %s25, 0
      %p183 = por %p181, %p182
      %s184 = ssub.s32 %s26, %s38
      %p185 = scmp.eq.s32.totalorder %s184, 0
      %s187 = sadd.s32 %s186, 1
      %s188 = scalar_select %p185, %s186, %s187
      %p191 = pneg %p185
      %p192 = scmp.eq.s32.totalorder %s19, 24
      %p193 = por %p191, %p192
      %p194 = scmp.ne.s32.totalorder %s186, %s189
      %p195 = scmp.eq.s32.totalorder %s19, 0
      %p196 = por %p194, %p195
      %p197 = scmp.ne.s32.totalorder %s186, %s189
      %p198 = scmp.eq.s32.totalorder %s24, 24
      %p199 = por %p197, %p198
      %p200 = scmp.ne.s32.totalorder %s189, %s190
      %p201 = scmp.eq.s32.totalorder %s24, 0
      %p202 = por %p200, %p201
      %p203 = scmp.ne.s32.totalorder %s189, %s190
      %p204 = scmp.eq.s32.totalorder %s25, 24
      %p205 = por %p203, %p204
      %p207 = scmp.ne.s32.totalorder %s190, %s206
      %p208 = scmp.eq.s32.totalorder %s25, 0
      %p209 = por %p207, %p208
      %s210 = ssub.s32 %s26, %s38
      %p211 = scmp.eq.s32.totalorder %s210, 0
      %s213 = sadd.s32 %s212, 1
      %s214 = scalar_select %p211, %s212, %s213
      %p217 = pneg %p211
      %p218 = scmp.eq.s32.totalorder %s19, 24
      %p219 = por %p217, %p218
      %p220 = scmp.ne.s32.totalorder %s212, %s215
      %p221 = scmp.eq.s32.totalorder %s19, 0
      %p222 = por %p220, %p221
      %p223 = scmp.ne.s32.totalorder %s212, %s215
      %p224 = scmp.eq.s32.totalorder %s24, 24
      %p225 = por %p223, %p224
      %p226 = scmp.ne.s32.totalorder %s215, %s216
      %p227 = scmp.eq.s32.totalorder %s24, 0
      %p228 = por %p226, %p227
      %p229 = scmp.ne.s32.totalorder %s215, %s216
      %p230 = scmp.eq.s32.totalorder %s25, 24
      %p231 = por %p229, %p230
      %p233 = scmp.ne.s32.totalorder %s216, %s232
      %p234 = scmp.eq.s32.totalorder %s25, 0
      %p235 = por %p233, %p234
      %s236 = ssub.s32 %s26, %s38
      %p237 = scmp.eq.s32.totalorder %s236, 0
      %s239 = sadd.s32 %s238, 1
      %s240 = scalar_select %p237, %s238, %s239
      %p243 = pneg %p237
      %p244 = scmp.eq.s32.totalorder %s19, 24
      %p245 = por %p243, %p244
      %p246 = scmp.ne.s32.totalorder %s238, %s241
      %p247 = scmp.eq.s32.totalorder %s19, 0
      %p248 = por %p246, %p247
      %p249 = scmp.ne.s32.totalorder %s238, %s241
      %p250 = scmp.eq.s32.totalorder %s24, 24
      %p251 = por %p249, %p250
      %p252 = scmp.ne.s32.totalorder %s241, %s242
      %p253 = scmp.eq.s32.totalorder %s24, 0
      %p254 = por %p252, %p253
      %p255 = scmp.ne.s32.totalorder %s241, %s242
      %p256 = scmp.eq.s32.totalorder %s25, 24
      %p257 = por %p255, %p256
      %p259 = scmp.ne.s32.totalorder %s242, %s258
      %p260 = scmp.eq.s32.totalorder %s25, 0
      %p261 = por %p259, %p260
      %s262 = ssub.s32 %s26, %s38
      %p263 = scmp.eq.s32.totalorder %s262, 0
      %s265 = sadd.s32 %s264, 1
      %s266 = scalar_select %p263, %s264, %s265
      %p269 = pneg %p263
      %p270 = scmp.eq.s32.totalorder %s19, 24
      %p271 = por %p269, %p270
      %p272 = scmp.ne.s32.totalorder %s264, %s267
      %p273 = scmp.eq.s32.totalorder %s19, 0
      %p274 = por %p272, %p273
      %p275 = scmp.ne.s32.totalorder %s264, %s267
      %p276 = scmp.eq.s32.totalorder %s24, 24
      %p277 = por %p275, %p276
      %p278 = scmp.ne.s32.totalorder %s267, %s268
      %p279 = scmp.eq.s32.totalorder %s24, 0
      %p280 = por %p278, %p279
      %p281 = scmp.ne.s32.totalorder %s267, %s268
      %p282 = scmp.eq.s32.totalorder %s25, 24
      %p283 = por %p281, %p282
      %p285 = scmp.ne.s32.totalorder %s268, %s284
      %p286 = scmp.eq.s32.totalorder %s25, 0
      %p287 = por %p285, %p286
      %s288 = ssub.s32 %s26, %s38
      %p289 = scmp.eq.s32.totalorder %s288, 0
      %s291 = sadd.s32 %s290, 1
      %s292 = scalar_select %p289, %s290, %s291
      %p295 = pneg %p289
      %p296 = scmp.eq.s32.totalorder %s19, 24
      %p297 = por %p295, %p296
      %p298 = scmp.ne.s32.totalorder %s290, %s293
      %p299 = scmp.eq.s32.totalorder %s19, 0
      %p300 = por %p298, %p299
      %p301 = scmp.ne.s32.totalorder %s290, %s293
      %p302 = scmp.eq.s32.totalorder %s24, 24
      %p303 = por %p301, %p302
      %p304 = scmp.ne.s32.totalorder %s293, %s294
      %p305 = scmp.eq.s32.totalorder %s24, 0
      %p306 = por %p304, %p305
      %p307 = scmp.ne.s32.totalorder %s293, %s294
      %p308 = scmp.eq.s32.totalorder %s25, 24
      %p309 = por %p307, %p308
      %p311 = scmp.ne.s32.totalorder %s294, %s310
      %p312 = scmp.eq.s32.totalorder %s25, 0
      %p313 = por %p311, %p312
      %p314 = scmp.le.s32.totalorder 1, %s19
      %p315 = scmp.lt.s32.totalorder %s19, 26
      %p316 = pnand %p314, %p315
      %p317 = pneg %p316
      // Predicated region
      $region9: #{social_model_forward.3} parent=5 // pred_check
        _
      $region10: #{social_model_forward.3} parent=5 // pred_check_branch
        %319 = sbr.rel (%p316) target = $region12
      $region11: #{social_model_forward.3} parent=5 // pred_region
        %s320 = ssub.s32 %s19, 1
        // Predicated region
        $region13: #{social_model_forward.3} parent=11 // pred_check
          %p321 = pneg %p176
        $region14: #{social_model_forward.3} parent=11 // pred_check_branch
          %323 = sbr.rel (%p321) target = $region16
        $region15: #{social_model_forward.3} parent=11 // pred_region
          _
        $region16: #{social_model_forward.3} parent=11 // pred_fallthru
          _
      $region12: #{social_model_forward.3} parent=5 // pred_fallthru
        _
      %p324 = scmp.lt.s32.totalorder %s19, 25
      // Predicated region
      $region17: #{social_model_forward.3} parent=5 // pred_check
        %p325 = pneg %p324
      $region18: #{social_model_forward.3} parent=5 // pred_check_branch
        %327 = sbr.rel (%p325) target = $region20
      $region19: #{social_model_forward.3} parent=5 // pred_region
        // Predicated region
        $region21: #{social_model_forward.3} parent=19 // pred_check
          %p328 = pneg %p53
        $region22: #{social_model_forward.3} parent=19 // pred_check_branch
          %330 = sbr.rel (%p328) target = $region24
        $region23: #{social_model_forward.3} parent=19 // pred_region
          %s331 = sand.u32 %s43, 1
          %s332 = sand.u32 %s43, 1
          %s333 = smul.addr %s332, 32
          %s334 = scalar_lea.vmem [#allocation2], %s333
          %s335 = smul.u32 4, %s26
          %s336 = smul.addr %s335, 5
          %s337 = sadd.s32 %s27, %s336
          %s338 = smul.addr %s337, 8
          %s339 = scalar_lea.vmem %s0, %s338
          // Predicated region
          $region25: #{social_model_forward.3} parent=23 // pred_check
            _
          $region26: #{social_model_forward.3} parent=23 // pred_check_branch
            %341 = sbr.rel (0) target = $region28
          $region27: #{social_model_forward.3} parent=23 // pred_region
            // Predicated region
            $region29: #{social_model_forward.3} parent=27 // pred_check
              _
            $region30: #{social_model_forward.3} parent=27 // pred_check_branch
              %343 = sbr.rel (0) target = $region32
            $region31: #{social_model_forward.3} parent=27 // pred_region
              // Predicated region
              $region44: #{social_model_forward.3} parent=31 // pred_check
                _
              $region45: #{social_model_forward.3} parent=31 // pred_check_branch
                %365 = sbr.rel (0) target = $region47
              $region46: #{social_model_forward.3} parent=31 // pred_region
                loop: start=0, step=1, limit=1
                $region48: #{social_model_forward.3} parent=46 // loop_pre_header
                  _
                $region49: #{social_model_forward.3} parent=46 // loop_header
                  %s367 = sphi 0, %s371
                  %p368 = scmp.ge.s32.totalorder %s367, 1
                  %s372 = sphi %s339, %s339
                  %s373 = sphi %s334, %s334
                $region50: #{social_model_forward.3} parent=46 // loop_header_branch
                  %370 = sbr.rel (%p368) target = $region54
                $region51: #{social_model_forward.3} parent=46 // loop_body
                  %v374 = vld [vmem:[%s372] sm:$0xff]
                  %375 = vst [vmem:[%s373] sm:$0xff] %v374
                  %v376 = vld [vmem:[%s372 + $0x28] sm:$0xff]
                  %377 = vst [vmem:[%s373 + $0x8] sm:$0xff] %v376
                  %v378 = vld [vmem:[%s372 + $0x50] sm:$0xff]
                  %379 = vst [vmem:[%s373 + $0x10] sm:$0xff] %v378
                  %v380 = vld [vmem:[%s372 + $0x78] sm:$0xff]
                  %381 = vst [vmem:[%s373 + $0x18] sm:$0xff] %v380
                $region52: #{social_model_forward.3} parent=46 // loop_footer
                  %s371 = sadd.s32 1, %s367
                $region53: #{social_model_forward.3} parent=46 // loop_footer_branch
                  %366 = sbr.rel target = $region49
                $region54: #{social_model_forward.3} parent=46 // loop_exit
                  _
              $region47: #{social_model_forward.3} parent=31 // pred_fallthru
                _
              // Predicated region
              $region55: #{social_model_forward.3} parent=31 // pred_check
                _
              $region56: #{social_model_forward.3} parent=31 // pred_check_branch
                %383 = sbr.rel target = $region58
              $region57: #{social_model_forward.3} parent=31 // pred_region
                _
              $region58: #{social_model_forward.3} parent=31 // pred_fallthru
                _
            $region32: #{social_model_forward.3} parent=27 // pred_fallthru
              _
            // Predicated region
            $region33: #{social_model_forward.3} parent=27 // pred_check
              _
            $region34: #{social_model_forward.3} parent=27 // pred_check_branch
              %345 = sbr.rel target = $region36
            $region35: #{social_model_forward.3} parent=27 // pred_region
              %s347 = ssub.s32 256, 1
              loop: start=0, step=1, limit=1
              $region37: #{social_model_forward.3} parent=35 // loop_pre_header
                _
              $region38: #{social_model_forward.3} parent=35 // loop_header
                %s349 = sphi 0, %s353
                %p350 = scmp.ge.s32.totalorder %s349, 1
                %s354 = sphi %s339, %s339
                %s355 = sphi %s334, %s334
              $region39: #{social_model_forward.3} parent=35 // loop_header_branch
                %352 = sbr.rel (%p350) target = $region43
              $region40: #{social_model_forward.3} parent=35 // loop_body
                %v356 = vld [vmem:[%s354] sm:%s347]
                %357 = vst [vmem:[%s355] sm:%s347] %v356
                %v358 = vld [vmem:[%s354 + $0x28] sm:%s347]
                %359 = vst [vmem:[%s355 + $0x8] sm:%s347] %v358
                %v360 = vld [vmem:[%s354 + $0x50] sm:%s347]
                %361 = vst [vmem:[%s355 + $0x10] sm:%s347] %v360
                %v362 = vld [vmem:[%s354 + $0x78] sm:%s347]
                %363 = vst [vmem:[%s355 + $0x18] sm:%s347] %v362
              $region41: #{social_model_forward.3} parent=35 // loop_footer
                %s353 = sadd.s32 1, %s349
              $region42: #{social_model_forward.3} parent=35 // loop_footer_branch
                %348 = sbr.rel target = $region38
              $region43: #{social_model_forward.3} parent=35 // loop_exit
                _
            $region36: #{social_model_forward.3} parent=27 // pred_fallthru
              _
          $region28: #{social_model_forward.3} parent=23 // pred_fallthru
            _
          %384 = vnop
        $region24: #{social_model_forward.3} parent=19 // pred_fallthru
          _
        // Predicated region
        $region59: #{social_model_forward.3} parent=19 // pred_check
          %p385 = pneg %p79
        $region60: #{social_model_forward.3} parent=19 // pred_check_branch
          %387 = sbr.rel (%p385) target = $region62
        $region61: #{social_model_forward.3} parent=19 // pred_region
          %s388 = smul.u32 16, %s26
          %p389 = scmp.lt.s32.totalorder %s388, 79
          %s390 = scalar_select %p389, %s388, 79
          %s391 = smul.addr %s390, 8
          %s392 = scalar_lea.vmem %s1, %s391
          %s393 = smul.u32 16, %s26
        $region62: #{social_model_forward.3} parent=19 // pred_fallthru
          _
        // Predicated region
        $region63: #{social_model_forward.3} parent=19 // pred_check
          %p394 = pneg %p119
        $region64: #{social_model_forward.3} parent=19 // pred_check_branch
          %396 = sbr.rel (%p394) target = $region66
        $region65: #{social_model_forward.3} parent=19 // pred_region
          %s397 = sand.u32 %s109, 1
          %s398 = sand.u32 %s109, 1
          %s399 = smul.addr %s398, 32
          %s400 = scalar_lea.vmem [#allocation3], %s399
          %p401 = scmp.lt.s32.totalorder %s26, 1
          %s402 = scalar_select %p401, %s26, 1
          %p403 = scmp.lt.s32.totalorder %s26, 2
          %p404 = scmp.lt.s32.totalorder %s27, 1
          %s405 = scalar_select %p404, %s27, 1
          %s406 = scalar_select %p403, %s405, 0
          %s407 = smul.u32 4, %s402
          %s408 = smul.addr %s407, 2
          %s409 = sadd.s32 %s406, %s408
          %s410 = smul.addr %s409, 8
          %s411 = scalar_lea.vmem %s2, %s410
          // Predicated region
          $region67: #{social_model_forward.3} parent=65 // pred_check
            _
          $region68: #{social_model_forward.3} parent=65 // pred_check_branch
            %413 = sbr.rel (0) target = $region70
          $region69: #{social_model_forward.3} parent=65 // pred_region
            // Predicated region
            $region71: #{social_model_forward.3} parent=69 // pred_check
              _
            $region72: #{social_model_forward.3} parent=69 // pred_check_branch
              %415 = sbr.rel (0) target = $region74
            $region73: #{social_model_forward.3} parent=69 // pred_region
              // Predicated region
              $region86: #{social_model_forward.3} parent=73 // pred_check
                _
              $region87: #{social_model_forward.3} parent=73 // pred_check_branch
                %437 = sbr.rel (0) target = $region89
              $region88: #{social_model_forward.3} parent=73 // pred_region
                loop: start=0, step=1, limit=1
                $region90: #{social_model_forward.3} parent=88 // loop_pre_header
                  _
                $region91: #{social_model_forward.3} parent=88 // loop_header
                  %s439 = sphi 0, %s443
                  %p440 = scmp.ge.s32.totalorder %s439, 1
                  %s444 = sphi %s411, %s411
                  %s445 = sphi %s400, %s400
                $region92: #{social_model_forward.3} parent=88 // loop_header_branch
                  %442 = sbr.rel (%p440) target = $region96
                $region93: #{social_model_forward.3} parent=88 // loop_body
                  %v446 = vld [vmem:[%s444] sm:$0xff]
                  %447 = vst [vmem:[%s445] sm:$0xff] %v446
                  %v448 = vld [vmem:[%s444 + $0x10] sm:$0xff]
                  %449 = vst [vmem:[%s445 + $0x8] sm:$0xff] %v448
                  %v450 = vld [vmem:[%s444 + $0x20] sm:$0xff]
                  %451 = vst [vmem:[%s445 + $0x10] sm:$0xff] %v450
                  %v452 = vld [vmem:[%s444 + $0x30] sm:$0xff]
                  %453 = vst [vmem:[%s445 + $0x18] sm:$0xff] %v452
                $region94: #{social_model_forward.3} parent=88 // loop_footer
                  %s443 = sadd.s32 1, %s439
                $region95: #{social_model_forward.3} parent=88 // loop_footer_branch
                  %438 = sbr.rel target = $region91
                $region96: #{social_model_forward.3} parent=88 // loop_exit
                  _
              $region89: #{social_model_forward.3} parent=73 // pred_fallthru
                _
              // Predicated region
              $region97: #{social_model_forward.3} parent=73 // pred_check
                _
              $region98: #{social_model_forward.3} parent=73 // pred_check_branch
                %455 = sbr.rel target = $region100
              $region99: #{social_model_forward.3} parent=73 // pred_region
                _
              $region100: #{social_model_forward.3} parent=73 // pred_fallthru
                _
            $region74: #{social_model_forward.3} parent=69 // pred_fallthru
              _
            // Predicated region
            $region75: #{social_model_forward.3} parent=69 // pred_check
              _
            $region76: #{social_model_forward.3} parent=69 // pred_check_branch
              %417 = sbr.rel target = $region78
            $region77: #{social_model_forward.3} parent=69 // pred_region
              %s419 = ssub.s32 256, 1
              loop: start=0, step=1, limit=1
              $region79: #{social_model_forward.3} parent=77 // loop_pre_header
                _
              $region80: #{social_model_forward.3} parent=77 // loop_header
                %s421 = sphi 0, %s425
                %p422 = scmp.ge.s32.totalorder %s421, 1
                %s426 = sphi %s411, %s411
                %s427 = sphi %s400, %s400
              $region81: #{social_model_forward.3} parent=77 // loop_header_branch
                %424 = sbr.rel (%p422) target = $region85
              $region82: #{social_model_forward.3} parent=77 // loop_body
                %v428 = vld [vmem:[%s426] sm:%s419]
                %429 = vst [vmem:[%s427] sm:%s419] %v428
                %v430 = vld [vmem:[%s426 + $0x10] sm:%s419]
                %431 = vst [vmem:[%s427 + $0x8] sm:%s419] %v430
                %v432 = vld [vmem:[%s426 + $0x20] sm:%s419]
                %433 = vst [vmem:[%s427 + $0x10] sm:%s419] %v432
                %v434 = vld [vmem:[%s426 + $0x30] sm:%s419]
                %435 = vst [vmem:[%s427 + $0x18] sm:%s419] %v434
              $region83: #{social_model_forward.3} parent=77 // loop_footer
                %s425 = sadd.s32 1, %s421
              $region84: #{social_model_forward.3} parent=77 // loop_footer_branch
                %420 = sbr.rel target = $region80
              $region85: #{social_model_forward.3} parent=77 // loop_exit
                _
            $region78: #{social_model_forward.3} parent=69 // pred_fallthru
              _
          $region70: #{social_model_forward.3} parent=65 // pred_fallthru
            _
          %456 = vnop
        $region66: #{social_model_forward.3} parent=19 // pred_fallthru
          _
        // Predicated region
        $region101: #{social_model_forward.3} parent=19 // pred_check
          %p457 = pneg %p149
        $region102: #{social_model_forward.3} parent=19 // pred_check_branch
          %459 = sbr.rel (%p457) target = $region104
        $region103: #{social_model_forward.3} parent=19 // pred_region
          %p460 = scmp.lt.s32.totalorder %s26, 1
          %s461 = scalar_select %p460, %s26, 1
          %s462 = smul.u32 16, %s461
          %p463 = scmp.lt.s32.totalorder %s462, 31
          %s464 = scalar_select %p463, %s462, 31
          %s465 = smul.addr %s464, 8
          %s466 = scalar_lea.vmem %s3, %s465
          %p467 = scmp.lt.s32.totalorder %s26, 1
          %s468 = scalar_select %p467, %s26, 1
          %s469 = smul.u32 16, %s468
        $region104: #{social_model_forward.3} parent=19 // pred_fallthru
          _
        // Predicated region
        $region105: #{social_model_forward.3} parent=19 // pred_check
          %p470 = pneg %p196
        $region106: #{social_model_forward.3} parent=19 // pred_check_branch
          %472 = sbr.rel (%p470) target = $region108
        $region107: #{social_model_forward.3} parent=19 // pred_region
          %s473 = smul.u32 16, %s26
          %p474 = scmp.lt.s32.totalorder %s473, 79
          %s475 = scalar_select %p474, %s473, 79
          %s476 = smul.addr %s475, 8
          %s477 = scalar_lea.vmem %s5, %s476
          %s478 = smul.u32 16, %s26
        $region108: #{social_model_forward.3} parent=19 // pred_fallthru
          _
      $region20: #{social_model_forward.3} parent=5 // pred_fallthru
        _
      %p479 = scmp.le.s32.totalorder 1, %s19
      %p480 = scmp.lt.s32.totalorder %s19, 26
      %p481 = pnand %p479, %p480
      %p482 = pneg %p481
      // Predicated region
      $region109: #{social_model_forward.3} parent=5 // pred_check
        _
      $region110: #{social_model_forward.3} parent=5 // pred_check_branch
        %484 = sbr.rel (%p481) target = $region112
      $region111: #{social_model_forward.3} parent=5 // pred_region
        %s485 = ssub.s32 %s19, 1
        %s486 = sand.u32 %s46, 1
        %s487 = sand.u32 %s46, 1
        %s488 = smul.addr %s487, 32
        %s489 = scalar_lea.vmem [#allocation2], %s488
        // Predicated region
        $region113: #{social_model_forward.3} parent=111 // pred_check
          %p490 = pneg %p59
        $region114: #{social_model_forward.3} parent=111 // pred_check_branch
          %492 = sbr.rel (%p490) target = $region116
        $region115: #{social_model_forward.3} parent=111 // pred_region
          _
        $region116: #{social_model_forward.3} parent=111 // pred_fallthru
          _
        %s493 = sand.u32 %s112, 1
        %s494 = sand.u32 %s112, 1
        %s495 = smul.addr %s494, 32
        %s496 = scalar_lea.vmem [#allocation3], %s495
        // Predicated region
        $region117: #{social_model_forward.3} parent=111 // pred_check
          %p497 = pneg %p125
        $region118: #{social_model_forward.3} parent=111 // pred_check_branch
          %499 = sbr.rel (%p497) target = $region120
        $region119: #{social_model_forward.3} parent=111 // pred_region
          _
        $region120: #{social_model_forward.3} parent=111 // pred_fallthru
          _
        %s500 = sand.u32 %s46, 1
        %s501 = sand.u32 %s46, 1
        %s502 = smul.addr %s501, 32
        %s503 = scalar_lea.vmem [#allocation2], %s502
        %p504 = pneg %p59
        %p505 = pneg %p56
        %s506 = smul.u32 16, %s28
        %p507 = scmp.lt.s32.totalorder %s506, 79
        %s508 = scalar_select %p507, %s506, 79
        %s509 = smul.addr %s508, 8
        %s510 = scalar_lea.vmem %s1, %s509
        %p511 = pneg %p85
        %p512 = pneg %p82
        %s513 = sand.u32 %s112, 1
        %s514 = sand.u32 %s112, 1
        %s515 = smul.addr %s514, 32
        %s516 = scalar_lea.vmem [#allocation3], %s515
        %p517 = pneg %p125
        %p518 = pneg %p122
        %p519 = scmp.lt.s32.totalorder %s28, 1
        %s520 = scalar_select %p519, %s28, 1
        %s521 = smul.u32 16, %s520
        %p522 = scmp.lt.s32.totalorder %s521, 31
        %s523 = scalar_select %p522, %s521, 31
        %s524 = smul.addr %s523, 8
        %s525 = scalar_lea.vmem %s3, %s524
        %p526 = pneg %p155
        %p527 = pneg %p152
        %p528 = pneg %p176
        %p529 = pneg %p173
        %s530 = smul.u32 16, %s28
        %p531 = scmp.lt.s32.totalorder %s530, 79
        %s532 = scalar_select %p531, %s530, 79
        %s533 = smul.addr %s532, 8
        %s534 = scalar_lea.vmem %s5, %s533
        %p535 = pneg %p202
        %p536 = pneg %p199
        %p537 = pneg %p228
        %p538 = pneg %p225
        %s539 = smul.u32 16, %s28
        %p540 = scmp.lt.s32.totalorder %s539, 79
        %s541 = scalar_select %p540, %s539, 79
        %s542 = smul.addr %s541, 8
        %s543 = scalar_lea.vmem %s6, %s542
        %p544 = pneg %p254
        %p545 = pneg %p251
        %s546 = smul.u32 16, %s28
        %p547 = scmp.lt.s32.totalorder %s546, 79
        %s548 = scalar_select %p547, %s546, 79
        %s549 = smul.addr %s548, 8
        %s550 = scalar_lea.vmem %s7, %s549
        %p551 = pneg %p280
        %p552 = pneg %p277
        %s553 = sand.u32 %s267, 1
        %s554 = scalar_lea.sflag [#allocation5], %s553
        %s555 = sand.u32 %s267, 1
        %s556 = smul.addr %s555, 64
        %s557 = scalar_lea.vmem [#allocation4], %s556
        %p558 = pneg %p306
        %p559 = pneg %p303
        %s560 = smul.u32 16, %s28
        %p561 = scmp.lt.s32.totalorder %s560, 79
        %s562 = scalar_select %p561, %s560, 79
        %s563 = smul.addr %s562, 8
        %s564 = scalar_lea.vmem %s9, %s563
        %s565 = smul.u32 4, %s28
        %s566 = smul.u32 16, %s28
        %p567 = scmp.lt.s32.totalorder %s566, 79
        %s568 = scalar_select %p567, %s566, 79
        %s569 = smul.addr %s568, 8
        %s570 = scalar_lea.vmem %s1, %s569
        %s571 = smul.u32 16, %s28
        %p572 = scmp.lt.s32.totalorder %s28, 1
        %s573 = scalar_select %p572, %s28, 1
        %p574 = scmp.lt.s32.totalorder %s28, 2
        %p575 = scmp.lt.s32.totalorder %s29, 1
        %s576 = scalar_select %p575, %s29, 1
        %s577 = scalar_select %p574, %s576, 0
        %s578 = smul.u32 4, %s573
        %p579 = scmp.lt.s32.totalorder %s28, 1
        %s580 = scalar_select %p579, %s28, 1
        %s581 = smul.u32 16, %s580
        %p582 = scmp.lt.s32.totalorder %s581, 31
        %s583 = scalar_select %p582, %s581, 31
        %s584 = smul.addr %s583, 8
        %s585 = scalar_lea.vmem %s3, %s584
        %p586 = scmp.lt.s32.totalorder %s28, 1
        %s587 = scalar_select %p586, %s28, 1
        %s588 = smul.u32 16, %s587
        %s589 = smul.u32 16, %s28
        %p590 = scmp.lt.s32.totalorder %s589, 79
        %s591 = scalar_select %p590, %s589, 79
        %s592 = smul.addr %s591, 8
        %s593 = scalar_lea.vmem %s5, %s592
        %s594 = smul.u32 16, %s28
        %s595 = smul.u32 16, %s28
        %p596 = scmp.lt.s32.totalorder %s595, 79
        %s597 = scalar_select %p596, %s595, 79
        %s598 = smul.addr %s597, 8
        %s599 = scalar_lea.vmem %s6, %s598
        %s600 = smul.u32 16, %s28
        %s601 = smul.u32 16, %s28
        %p602 = scmp.lt.s32.totalorder %s601, 79
        %s603 = scalar_select %p602, %s601, 79
        %s604 = smul.addr %s603, 8
        %s605 = scalar_lea.vmem %s7, %s604
        %s606 = smul.u32 16, %s28
        %s607 = smul.u32 16, %s28
        %s608 = smul.u32 16, %s28
        %p609 = scmp.lt.s32.totalorder %s608, 79
        %s610 = scalar_select %p609, %s608, 79
        %s611 = smul.addr %s610, 8
        %s612 = scalar_lea.vmem %s9, %s611
        %s613 = smul.u32 16, %s28
        %p614 = scmp.lt.s32.totalorder %s28, 2
        %p615 = scmp.eq.s32.totalorder %s29, 0
        // Predicated region
        $region121: #{social_model_forward.3} parent=111 // pred_check
          %p616 = pneg %p615
        $region122: #{social_model_forward.3} parent=111 // pred_check_branch
          %618 = sbr.rel (%p616) target = $region124
        $region123: #{social_model_forward.3} parent=111 // pred_region
          %619 = vst [vmem:[%s599] sm:$0xff] 0.0
          %620 = vst [vmem:[%s599 + $0x8] sm:$0xff] 0.0
          %621 = vst [vmem:[%s599 + $0x10] sm:$0xff] 0.0
          %622 = vst [vmem:[%s599 + $0x18] sm:$0xff] 0.0
          %623 = vst [vmem:[%s599 + $0x20] sm:$0xff] 0.0
          %624 = vst [vmem:[%s599 + $0x28] sm:$0xff] 0.0
          %625 = vst [vmem:[%s599 + $0x30] sm:$0xff] 0.0
          %626 = vst [vmem:[%s599 + $0x38] sm:$0xff] 0.0
          %627 = vst [vmem:[%s599 + $0x40] sm:$0xff] 0.0
          %628 = vst [vmem:[%s599 + $0x48] sm:$0xff] 0.0
          %629 = vst [vmem:[%s599 + $0x50] sm:$0xff] 0.0
          %630 = vst [vmem:[%s599 + $0x58] sm:$0xff] 0.0
          %631 = vst [vmem:[%s599 + $0x60] sm:$0xff] 0.0
          %632 = vst [vmem:[%s599 + $0x68] sm:$0xff] 0.0
          %633 = vst [vmem:[%s599 + $0x70] sm:$0xff] 0.0
          %634 = vst [vmem:[%s599 + $0x78] sm:$0xff] 0.0
          %635 = vst [vmem:[%s605] sm:$0xff] 0.0
          %636 = vst [vmem:[%s605 + $0x8] sm:$0xff] 0.0
          %637 = vst [vmem:[%s605 + $0x10] sm:$0xff] 0.0
          %638 = vst [vmem:[%s605 + $0x18] sm:$0xff] 0.0
          %639 = vst [vmem:[%s605 + $0x20] sm:$0xff] 0.0
          %640 = vst [vmem:[%s605 + $0x28] sm:$0xff] 0.0
          %641 = vst [vmem:[%s605 + $0x30] sm:$0xff] 0.0
          %642 = vst [vmem:[%s605 + $0x38] sm:$0xff] 0.0
          %643 = vst [vmem:[%s605 + $0x40] sm:$0xff] 0.0
          %644 = vst [vmem:[%s605 + $0x48] sm:$0xff] 0.0
          %645 = vst [vmem:[%s605 + $0x50] sm:$0xff] 0.0
          %646 = vst [vmem:[%s605 + $0x58] sm:$0xff] 0.0
          %647 = vst [vmem:[%s605 + $0x60] sm:$0xff] 0.0
          %648 = vst [vmem:[%s605 + $0x68] sm:$0xff] 0.0
          %649 = vst [vmem:[%s605 + $0x70] sm:$0xff] 0.0
          %650 = vst [vmem:[%s605 + $0x78] sm:$0xff] 0.0
        $region124: #{social_model_forward.3} parent=111 // pred_fallthru
          _
        %s651 = smul.u32 %s29, 128
        %s652 = sshra.s32 %s651, 3
        %s653 = sand.u32 %s651, 7
        %s654 = smul.addr %s652, 4
        %s655 = scalar_lea.vmem %s4, %s654
        %v656 = vld [vmem:[%s655] sm:$0xf]
        %v657 = vld [vmem:[%s655 + $0x4] sm:$0xf]
        %v658 = vld [vmem:[%s655 + $0x8] sm:$0xf]
        %v659 = vld [vmem:[%s655 + $0xc] sm:$0xf]
        %v660 = vld [vmem:[%s655 + $0x10] sm:$0xf]
        %v661 = vld [vmem:[%s655 + $0x14] sm:$0xf]
        %v662 = vld [vmem:[%s655 + $0x18] sm:$0xf]
        %v663 = vld [vmem:[%s655 + $0x1c] sm:$0xf]
        %v664 = vld [vmem:[%s655 + $0x20] sm:$0xf]
        %v665 = vld [vmem:[%s655 + $0x24] sm:$0xf]
        %v666 = vld [vmem:[%s655 + $0x28] sm:$0xf]
        %v667 = vld [vmem:[%s655 + $0x2c] sm:$0xf]
        %v668 = vld [vmem:[%s655 + $0x30] sm:$0xf]
        %v669 = vld [vmem:[%s655 + $0x34] sm:$0xf]
        %v670 = vld [vmem:[%s655 + $0x38] sm:$0xf]
        %v671 = vld [vmem:[%s655 + $0x3c] sm:$0xf]
        %v672 = vld [vmem:[%s489] sm:$0xff]
        %v673 = vld [vmem:[%s489 + $0x8] sm:$0xff]
        %v674 = vld [vmem:[%s489 + $0x10] sm:$0xff]
        %v675 = vld [vmem:[%s489 + $0x18] sm:$0xff]
        %v676 = vunpack.c.0.s8 %v672
        %v677 = vunpack.c.1.s8 %v672
        %v678 = vunpack.c.2.s8 %v672
        %v679 = vunpack.c.3.s8 %v672
        %v680 = vunpack.c.0.s8 %v673
        %v681 = vunpack.c.1.s8 %v673
        %v682 = vunpack.c.2.s8 %v673
        %v683 = vunpack.c.3.s8 %v673
        %v684 = vunpack.c.0.s8 %v674
        %v685 = vunpack.c.1.s8 %v674
        %v686 = vunpack.c.2.s8 %v674
        %v687 = vunpack.c.3.s8 %v674
        %v688 = vunpack.c.0.s8 %v675
        %v689 = vunpack.c.1.s8 %v675
        %v690 = vunpack.c.2.s8 %v675
        %v691 = vunpack.c.3.s8 %v675
        %v692 = vcvt.s32.f32 %v676
        %v693 = vcvt.s32.f32 %v677
        %v694 = vcvt.s32.f32 %v678
        %v695 = vcvt.s32.f32 %v679
        %v696 = vcvt.s32.f32 %v680
        %v697 = vcvt.s32.f32 %v681
        %v698 = vcvt.s32.f32 %v682
        %v699 = vcvt.s32.f32 %v683
        %v700 = vcvt.s32.f32 %v684
        %v701 = vcvt.s32.f32 %v685
        %v702 = vcvt.s32.f32 %v686
        %v703 = vcvt.s32.f32 %v687
        %v704 = vcvt.s32.f32 %v688
        %v705 = vcvt.s32.f32 %v689
        %v706 = vcvt.s32.f32 %v690
        %v707 = vcvt.s32.f32 %v691
        %v708 = vpack.c.bf16 %v693, %v692
        %v709 = vpack.c.bf16 %v695, %v694
        %v710 = vpack.c.bf16 %v697, %v696
        %v711 = vpack.c.bf16 %v699, %v698
        %v712 = vpack.c.bf16 %v701, %v700
        %v713 = vpack.c.bf16 %v703, %v702
        %v714 = vpack.c.bf16 %v705, %v704
        %v715 = vpack.c.bf16 %v707, %v706
        %v716 = vld [vmem:[%s599] sm:$0xff]
        %v717 = vld [vmem:[%s599 + $0x8] sm:$0xff]
        %v718 = vld [vmem:[%s599 + $0x10] sm:$0xff]
        %v719 = vld [vmem:[%s599 + $0x18] sm:$0xff]
        %v720 = vld [vmem:[%s599 + $0x20] sm:$0xff]
        %v721 = vld [vmem:[%s599 + $0x28] sm:$0xff]
        %v722 = vld [vmem:[%s599 + $0x30] sm:$0xff]
        %v723 = vld [vmem:[%s599 + $0x38] sm:$0xff]
        %v724 = vld [vmem:[%s599 + $0x40] sm:$0xff]
        %v725 = vld [vmem:[%s599 + $0x48] sm:$0xff]
        %v726 = vld [vmem:[%s599 + $0x50] sm:$0xff]
        %v727 = vld [vmem:[%s599 + $0x58] sm:$0xff]
        %v728 = vld [vmem:[%s599 + $0x60] sm:$0xff]
        %v729 = vld [vmem:[%s599 + $0x68] sm:$0xff]
        %v730 = vld [vmem:[%s599 + $0x70] sm:$0xff]
        %v731 = vld [vmem:[%s599 + $0x78] sm:$0xff]
        %v748 = vunpack.c.l.b16 %v656
        %v749 = vunpack.c.l.b16 %v657
        %v750 = vunpack.c.l.b16 %v658
        %v751 = vunpack.c.l.b16 %v659
        %v752 = vunpack.c.l.b16 %v660
        %v753 = vunpack.c.l.b16 %v661
        %v754 = vunpack.c.l.b16 %v662
        %v755 = vunpack.c.l.b16 %v663
        %v756 = vunpack.c.l.b16 %v664
        %v757 = vunpack.c.l.b16 %v665
        %v758 = vunpack.c.l.b16 %v666
        %v759 = vunpack.c.l.b16 %v667
        %v760 = vunpack.c.l.b16 %v668
        %v761 = vunpack.c.l.b16 %v669
        %v762 = vunpack.c.l.b16 %v670
        %v763 = vunpack.c.l.b16 %v671
        %v764 = vpack.c.b16 %v749, %v748
        %v765 = vpack.c.b16 %v751, %v750
        %v766 = vpack.c.b16 %v753, %v752
        %v767 = vpack.c.b16 %v755, %v754
        %v768 = vpack.c.b16 %v757, %v756
        %v769 = vpack.c.b16 %v759, %v758
        %v770 = vpack.c.b16 %v761, %v760
        %v771 = vpack.c.b16 %v763, %v762
        %780 = vmatpush.bf16.msra.mxu0 %v771
        %781 = vmatpush.bf16.msra.mxu0 %v770
        %782 = vmatpush.bf16.msra.mxu0 %v769
        %783 = vmatpush.bf16.msra.mxu0 %v768
        %784 = vmatpush.bf16.msra.mxu0 %v767
        %785 = vmatpush.bf16.msra.mxu0 %v766
        %786 = vmatpush.bf16.msra.mxu0 %v765
        %787 = vmatpush.bf16.msra.mxu0 %v764
        %788 = vmatmul.bf16.gmra.mxu0 %v708
        %v789 = vpop.f32.mrf.mxu0
        %v790 = vadd.f32 0.0, %v789
        %v791 = vpop.f32.mrf.mxu0
        %v792 = vadd.f32 0.0, %v791
        %793 = vmatmul.bf16.gmra.mxu0 %v709
        %v794 = vpop.f32.mrf.mxu0
        %v795 = vadd.f32 0.0, %v794
        %v796 = vpop.f32.mrf.mxu0
        %v797 = vadd.f32 0.0, %v796
        %798 = vmatmul.bf16.gmra.mxu0 %v710
        %v799 = vpop.f32.mrf.mxu0
        %v800 = vadd.f32 0.0, %v799
        %v801 = vpop.f32.mrf.mxu0
        %v802 = vadd.f32 0.0, %v801
        %803 = vmatmul.bf16.gmra.mxu0 %v711
        %v804 = vpop.f32.mrf.mxu0
        %v805 = vadd.f32 0.0, %v804
        %v806 = vpop.f32.mrf.mxu0
        %v807 = vadd.f32 0.0, %v806
        %808 = vmatmul.bf16.gmra.mxu0 %v712
        %v809 = vpop.f32.mrf.mxu0
        %v810 = vadd.f32 0.0, %v809
        %v811 = vpop.f32.mrf.mxu0
        %v812 = vadd.f32 0.0, %v811
        %813 = vmatmul.bf16.gmra.mxu0 %v713
        %v814 = vpop.f32.mrf.mxu0
        %v815 = vadd.f32 0.0, %v814
        %v816 = vpop.f32.mrf.mxu0
        %v817 = vadd.f32 0.0, %v816
        %818 = vmatmul.bf16.gmra.mxu0 %v714
        %v819 = vpop.f32.mrf.mxu0
        %v820 = vadd.f32 0.0, %v819
        %v821 = vpop.f32.mrf.mxu0
        %v822 = vadd.f32 0.0, %v821
        %823 = vmatmul.bf16.gmra.mxu0 %v715
        %v824 = vpop.f32.mrf.mxu0
        %v825 = vadd.f32 0.0, %v824
        %v826 = vpop.f32.mrf.mxu0
        %v827 = vadd.f32 0.0, %v826
        %828 = vdwg.mxu0
        %v829 = vadd.f32 %v716, %v790
        %v830 = vadd.f32 %v717, %v792
        %v831 = vadd.f32 %v718, %v795
        %v832 = vadd.f32 %v719, %v797
        %v833 = vadd.f32 %v720, %v800
        %v834 = vadd.f32 %v721, %v802
        %v835 = vadd.f32 %v722, %v805
        %v836 = vadd.f32 %v723, %v807
        %v837 = vadd.f32 %v724, %v810
        %v838 = vadd.f32 %v725, %v812
        %v839 = vadd.f32 %v726, %v815
        %v840 = vadd.f32 %v727, %v817
        %v841 = vadd.f32 %v728, %v820
        %v842 = vadd.f32 %v729, %v822
        %v843 = vadd.f32 %v730, %v825
        %v844 = vadd.f32 %v731, %v827
        %845 = vst [vmem:[%s599] sm:$0xff] %v829
        %846 = vst [vmem:[%s599 + $0x8] sm:$0xff] %v830
        %847 = vst [vmem:[%s599 + $0x10] sm:$0xff] %v831
        %848 = vst [vmem:[%s599 + $0x18] sm:$0xff] %v832
        %849 = vst [vmem:[%s599 + $0x20] sm:$0xff] %v833
        %850 = vst [vmem:[%s599 + $0x28] sm:$0xff] %v834
        %851 = vst [vmem:[%s599 + $0x30] sm:$0xff] %v835
        %852 = vst [vmem:[%s599 + $0x38] sm:$0xff] %v836
        %853 = vst [vmem:[%s599 + $0x40] sm:$0xff] %v837
        %854 = vst [vmem:[%s599 + $0x48] sm:$0xff] %v838
        %855 = vst [vmem:[%s599 + $0x50] sm:$0xff] %v839
        %856 = vst [vmem:[%s599 + $0x58] sm:$0xff] %v840
        %857 = vst [vmem:[%s599 + $0x60] sm:$0xff] %v841
        %858 = vst [vmem:[%s599 + $0x68] sm:$0xff] %v842
        %859 = vst [vmem:[%s599 + $0x70] sm:$0xff] %v843
        %860 = vst [vmem:[%s599 + $0x78] sm:$0xff] %v844
        %p861 = scmp.lt.s32.totalorder %s29, 2
        %p862 = pnand %p614, %p861
        %p863 = pneg %p862
        // Predicated region
        $region125: #{social_model_forward.3} parent=111 // pred_check
          _
        $region126: #{social_model_forward.3} parent=111 // pred_check_branch
          %865 = sbr.rel (%p862) target = $region128
        $region127: #{social_model_forward.3} parent=111 // pred_region
          %v866 = vld [vmem:[%s496] sm:$0xff]
          %v867 = vld [vmem:[%s496 + $0x8] sm:$0xff]
          %v868 = vld [vmem:[%s496 + $0x10] sm:$0xff]
          %v869 = vld [vmem:[%s496 + $0x18] sm:$0xff]
          %v870 = vunpack.c.0.s8 %v866
          %v871 = vunpack.c.1.s8 %v866
          %v872 = vunpack.c.2.s8 %v866
          %v873 = vunpack.c.3.s8 %v866
          %v874 = vunpack.c.0.s8 %v867
          %v875 = vunpack.c.1.s8 %v867
          %v876 = vunpack.c.2.s8 %v867
          %v877 = vunpack.c.3.s8 %v867
          %v878 = vunpack.c.0.s8 %v868
          %v879 = vunpack.c.1.s8 %v868
          %v880 = vunpack.c.2.s8 %v868
          %v881 = vunpack.c.3.s8 %v868
          %v882 = vunpack.c.0.s8 %v869
          %v883 = vunpack.c.1.s8 %v869
          %v884 = vunpack.c.2.s8 %v869
          %v885 = vunpack.c.3.s8 %v869
          %v886 = vcvt.s32.f32 %v870
          %v887 = vcvt.s32.f32 %v871
          %v888 = vcvt.s32.f32 %v872
          %v889 = vcvt.s32.f32 %v873
          %v890 = vcvt.s32.f32 %v874
          %v891 = vcvt.s32.f32 %v875
          %v892 = vcvt.s32.f32 %v876
          %v893 = vcvt.s32.f32 %v877
          %v894 = vcvt.s32.f32 %v878
          %v895 = vcvt.s32.f32 %v879
          %v896 = vcvt.s32.f32 %v880
          %v897 = vcvt.s32.f32 %v881
          %v898 = vcvt.s32.f32 %v882
          %v899 = vcvt.s32.f32 %v883
          %v900 = vcvt.s32.f32 %v884
          %v901 = vcvt.s32.f32 %v885
          %v902 = vpack.c.bf16 %v887, %v886
          %v903 = vpack.c.bf16 %v889, %v888
          %v904 = vpack.c.bf16 %v891, %v890
          %v905 = vpack.c.bf16 %v893, %v892
          %v906 = vpack.c.bf16 %v895, %v894
          %v907 = vpack.c.bf16 %v897, %v896
          %v908 = vpack.c.bf16 %v899, %v898
          %v909 = vpack.c.bf16 %v901, %v900
          %v910 = vld [vmem:[%s605] sm:$0xff]
          %v911 = vld [vmem:[%s605 + $0x8] sm:$0xff]
          %v912 = vld [vmem:[%s605 + $0x10] sm:$0xff]
          %v913 = vld [vmem:[%s605 + $0x18] sm:$0xff]
          %v914 = vld [vmem:[%s605 + $0x20] sm:$0xff]
          %v915 = vld [vmem:[%s605 + $0x28] sm:$0xff]
          %v916 = vld [vmem:[%s605 + $0x30] sm:$0xff]
          %v917 = vld [vmem:[%s605 + $0x38] sm:$0xff]
          %v918 = vld [vmem:[%s605 + $0x40] sm:$0xff]
          %v919 = vld [vmem:[%s605 + $0x48] sm:$0xff]
          %v920 = vld [vmem:[%s605 + $0x50] sm:$0xff]
          %v921 = vld [vmem:[%s605 + $0x58] sm:$0xff]
          %v922 = vld [vmem:[%s605 + $0x60] sm:$0xff]
          %v923 = vld [vmem:[%s605 + $0x68] sm:$0xff]
          %v924 = vld [vmem:[%s605 + $0x70] sm:$0xff]
          %v925 = vld [vmem:[%s605 + $0x78] sm:$0xff]
          %926 = vmatpush.bf16.msra.mxu0 %v771
          %927 = vmatpush.bf16.msra.mxu0 %v770
          %928 = vmatpush.bf16.msra.mxu0 %v769
          %929 = vmatpush.bf16.msra.mxu0 %v768
          %930 = vmatpush.bf16.msra.mxu0 %v767
          %931 = vmatpush.bf16.msra.mxu0 %v766
          %932 = vmatpush.bf16.msra.mxu0 %v765
          %933 = vmatpush.bf16.msra.mxu0 %v764
          %934 = vmatmul.bf16.gmra.mxu0 %v902
          %v935 = vpop.f32.mrf.mxu0
          %v936 = vadd.f32 0.0, %v935
          %v937 = vpop.f32.mrf.mxu0
          %v938 = vadd.f32 0.0, %v937
          %939 = vmatmul.bf16.gmra.mxu0 %v903
          %v940 = vpop.f32.mrf.mxu0
          %v941 = vadd.f32 0.0, %v940
          %v942 = vpop.f32.mrf.mxu0
          %v943 = vadd.f32 0.0, %v942
          %944 = vmatmul.bf16.gmra.mxu0 %v904
          %v945 = vpop.f32.mrf.mxu0
          %v946 = vadd.f32 0.0, %v945
          %v947 = vpop.f32.mrf.mxu0
          %v948 = vadd.f32 0.0, %v947
          %949 = vmatmul.bf16.gmra.mxu0 %v905
          %v950 = vpop.f32.mrf.mxu0
          %v951 = vadd.f32 0.0, %v950
          %v952 = vpop.f32.mrf.mxu0
          %v953 = vadd.f32 0.0, %v952
          %954 = vmatmul.bf16.gmra.mxu0 %v906
          %v955 = vpop.f32.mrf.mxu0
          %v956 = vadd.f32 0.0, %v955
          %v957 = vpop.f32.mrf.mxu0
          %v958 = vadd.f32 0.0, %v957
          %959 = vmatmul.bf16.gmra.mxu0 %v907
          %v960 = vpop.f32.mrf.mxu0
          %v961 = vadd.f32 0.0, %v960
          %v962 = vpop.f32.mrf.mxu0
          %v963 = vadd.f32 0.0, %v962
          %964 = vmatmul.bf16.gmra.mxu0 %v908
          %v965 = vpop.f32.mrf.mxu0
          %v966 = vadd.f32 0.0, %v965
          %v967 = vpop.f32.mrf.mxu0
          %v968 = vadd.f32 0.0, %v967
          %969 = vmatmul.bf16.gmra.mxu0 %v909
          %v970 = vpop.f32.mrf.mxu0
          %v971 = vadd.f32 0.0, %v970
          %v972 = vpop.f32.mrf.mxu0
          %v973 = vadd.f32 0.0, %v972
          %974 = vdwg.mxu0
          %v975 = vadd.f32 %v910, %v936
          %v976 = vadd.f32 %v911, %v938
          %v977 = vadd.f32 %v912, %v941
          %v978 = vadd.f32 %v913, %v943
          %v979 = vadd.f32 %v914, %v946
          %v980 = vadd.f32 %v915, %v948
          %v981 = vadd.f32 %v916, %v951
          %v982 = vadd.f32 %v917, %v953
          %v983 = vadd.f32 %v918, %v956
          %v984 = vadd.f32 %v919, %v958
          %v985 = vadd.f32 %v920, %v961
          %v986 = vadd.f32 %v921, %v963
          %v987 = vadd.f32 %v922, %v966
          %v988 = vadd.f32 %v923, %v968
          %v989 = vadd.f32 %v924, %v971
          %v990 = vadd.f32 %v925, %v973
          %991 = vst [vmem:[%s605] sm:$0xff] %v975
          %992 = vst [vmem:[%s605 + $0x8] sm:$0xff] %v976
          %993 = vst [vmem:[%s605 + $0x10] sm:$0xff] %v977
          %994 = vst [vmem:[%s605 + $0x18] sm:$0xff] %v978
          %995 = vst [vmem:[%s605 + $0x20] sm:$0xff] %v979
          %996 = vst [vmem:[%s605 + $0x28] sm:$0xff] %v980
          %997 = vst [vmem:[%s605 + $0x30] sm:$0xff] %v981
          %998 = vst [vmem:[%s605 + $0x38] sm:$0xff] %v982
          %999 = vst [vmem:[%s605 + $0x40] sm:$0xff] %v983
          %1000 = vst [vmem:[%s605 + $0x48] sm:$0xff] %v984
          %1001 = vst [vmem:[%s605 + $0x50] sm:$0xff] %v985
          %1002 = vst [vmem:[%s605 + $0x58] sm:$0xff] %v986
          %1003 = vst [vmem:[%s605 + $0x60] sm:$0xff] %v987
          %1004 = vst [vmem:[%s605 + $0x68] sm:$0xff] %v988
          %1005 = vst [vmem:[%s605 + $0x70] sm:$0xff] %v989
          %1006 = vst [vmem:[%s605 + $0x78] sm:$0xff] %v990
        $region128: #{social_model_forward.3} parent=111 // pred_fallthru
          _
        %p1007 = scmp.eq.s32.totalorder %s29, 4
        // Predicated region
        $region129: #{social_model_forward.3} parent=111 // pred_check
          %p1008 = pneg %p1007
        $region130: #{social_model_forward.3} parent=111 // pred_check_branch
          %1010 = sbr.rel (%p1008) target = $region132
        $region131: #{social_model_forward.3} parent=111 // pred_region
          %v1011 = vld [vmem:[%s599] sm:$0xff]
          %v1012 = vld [vmem:[%s599 + $0x8] sm:$0xff]
          %v1013 = vld [vmem:[%s599 + $0x10] sm:$0xff]
          %v1014 = vld [vmem:[%s599 + $0x18] sm:$0xff]
          %v1015 = vld [vmem:[%s599 + $0x20] sm:$0xff]
          %v1016 = vld [vmem:[%s599 + $0x28] sm:$0xff]
          %v1017 = vld [vmem:[%s599 + $0x30] sm:$0xff]
          %v1018 = vld [vmem:[%s599 + $0x38] sm:$0xff]
          %v1019 = vld [vmem:[%s599 + $0x40] sm:$0xff]
          %v1020 = vld [vmem:[%s599 + $0x48] sm:$0xff]
          %v1021 = vld [vmem:[%s599 + $0x50] sm:$0xff]
          %v1022 = vld [vmem:[%s599 + $0x58] sm:$0xff]
          %v1023 = vld [vmem:[%s599 + $0x60] sm:$0xff]
          %v1024 = vld [vmem:[%s599 + $0x68] sm:$0xff]
          %v1025 = vld [vmem:[%s599 + $0x70] sm:$0xff]
          %v1026 = vld [vmem:[%s599 + $0x78] sm:$0xff]
          %v1027 = vld [vmem:[%s605] sm:$0xff]
          %v1028 = vld [vmem:[%s605 + $0x8] sm:$0xff]
          %v1029 = vld [vmem:[%s605 + $0x10] sm:$0xff]
          %v1030 = vld [vmem:[%s605 + $0x18] sm:$0xff]
          %v1031 = vld [vmem:[%s605 + $0x20] sm:$0xff]
          %v1032 = vld [vmem:[%s605 + $0x28] sm:$0xff]
          %v1033 = vld [vmem:[%s605 + $0x30] sm:$0xff]
          %v1034 = vld [vmem:[%s605 + $0x38] sm:$0xff]
          %v1035 = vld [vmem:[%s605 + $0x40] sm:$0xff]
          %v1036 = vld [vmem:[%s605 + $0x48] sm:$0xff]
          %v1037 = vld [vmem:[%s605 + $0x50] sm:$0xff]
          %v1038 = vld [vmem:[%s605 + $0x58] sm:$0xff]
          %v1039 = vld [vmem:[%s605 + $0x60] sm:$0xff]
          %v1040 = vld [vmem:[%s605 + $0x68] sm:$0xff]
          %v1041 = vld [vmem:[%s605 + $0x70] sm:$0xff]
          %v1042 = vld [vmem:[%s605 + $0x78] sm:$0xff]
          %v1043 = vld [vmem:[%s570] sm:$0xff]
          %v1044 = vld [vmem:[%s570 + $0x8] sm:$0xff]
          %v1045 = vld [vmem:[%s570 + $0x10] sm:$0xff]
          %v1046 = vld [vmem:[%s570 + $0x18] sm:$0xff]
          %v1047 = vld [vmem:[%s570 + $0x20] sm:$0xff]
          %v1048 = vld [vmem:[%s570 + $0x28] sm:$0xff]
          %v1049 = vld [vmem:[%s570 + $0x30] sm:$0xff]
          %v1050 = vld [vmem:[%s570 + $0x38] sm:$0xff]
          %v1051 = vld [vmem:[%s570 + $0x40] sm:$0xff]
          %v1052 = vld [vmem:[%s570 + $0x48] sm:$0xff]
          %v1053 = vld [vmem:[%s570 + $0x50] sm:$0xff]
          %v1054 = vld [vmem:[%s570 + $0x58] sm:$0xff]
          %v1055 = vld [vmem:[%s570 + $0x60] sm:$0xff]
          %v1056 = vld [vmem:[%s570 + $0x68] sm:$0xff]
          %v1057 = vld [vmem:[%s570 + $0x70] sm:$0xff]
          %v1058 = vld [vmem:[%s570 + $0x78] sm:$0xff]
          %1060 = vset.pattern.permute.xlu0 0
          %1061 = vperm.xlu0 %1060, %v1043
          %v1062 = vpop.permute.xlu0 %1061
          %1065 = vset.pattern.permute.xlu0 0
          %1066 = vperm.xlu0 %1065, %v1044
          %v1067 = vpop.permute.xlu0 %1066
          %1070 = vset.pattern.permute.xlu0 0
          %1071 = vperm.xlu0 %1070, %v1045
          %v1072 = vpop.permute.xlu0 %1071
          %1075 = vset.pattern.permute.xlu0 0
          %1076 = vperm.xlu0 %1075, %v1046
          %v1077 = vpop.permute.xlu0 %1076
          %1080 = vset.pattern.permute.xlu0 0
          %1081 = vperm.xlu0 %1080, %v1047
          %v1082 = vpop.permute.xlu0 %1081
          %1085 = vset.pattern.permute.xlu0 0
          %1086 = vperm.xlu0 %1085, %v1048
          %v1087 = vpop.permute.xlu0 %1086
          %1090 = vset.pattern.permute.xlu0 0
          %1091 = vperm.xlu0 %1090, %v1049
          %v1092 = vpop.permute.xlu0 %1091
          %1095 = vset.pattern.permute.xlu0 0
          %1096 = vperm.xlu0 %1095, %v1050
          %v1097 = vpop.permute.xlu0 %1096
          %1100 = vset.pattern.permute.xlu0 0
          %1101 = vperm.xlu0 %1100, %v1051
          %v1102 = vpop.permute.xlu0 %1101
          %1105 = vset.pattern.permute.xlu0 0
          %1106 = vperm.xlu0 %1105, %v1052
          %v1107 = vpop.permute.xlu0 %1106
          %1110 = vset.pattern.permute.xlu0 0
          %1111 = vperm.xlu0 %1110, %v1053
          %v1112 = vpop.permute.xlu0 %1111
          %1115 = vset.pattern.permute.xlu0 0
          %1116 = vperm.xlu0 %1115, %v1054
          %v1117 = vpop.permute.xlu0 %1116
          %1120 = vset.pattern.permute.xlu0 0
          %1121 = vperm.xlu0 %1120, %v1055
          %v1122 = vpop.permute.xlu0 %1121
          %1125 = vset.pattern.permute.xlu0 0
          %1126 = vperm.xlu0 %1125, %v1056
          %v1127 = vpop.permute.xlu0 %1126
          %1130 = vset.pattern.permute.xlu0 0
          %1131 = vperm.xlu0 %1130, %v1057
          %v1132 = vpop.permute.xlu0 %1131
          %1135 = vset.pattern.permute.xlu0 0
          %1136 = vperm.xlu0 %1135, %v1058
          %v1137 = vpop.permute.xlu0 %1136
          %v1139 = vmul.f32 %v1011, %v1062
          %v1140 = vmul.f32 %v1012, %v1067
          %v1141 = vmul.f32 %v1013, %v1072
          %v1142 = vmul.f32 %v1014, %v1077
          %v1143 = vmul.f32 %v1015, %v1082
          %v1144 = vmul.f32 %v1016, %v1087
          %v1145 = vmul.f32 %v1017, %v1092
          %v1146 = vmul.f32 %v1018, %v1097
          %v1147 = vmul.f32 %v1019, %v1102
          %v1148 = vmul.f32 %v1020, %v1107
          %v1149 = vmul.f32 %v1021, %v1112
          %v1150 = vmul.f32 %v1022, %v1117
          %v1151 = vmul.f32 %v1023, %v1122
          %v1152 = vmul.f32 %v1024, %v1127
          %v1153 = vmul.f32 %v1025, %v1132
          %v1154 = vmul.f32 %v1026, %v1137
          %v1155 = vld [vmem:[%s585] sm:$0xff]
          %v1156 = vld [vmem:[%s585 + $0x8] sm:$0xff]
          %v1157 = vld [vmem:[%s585 + $0x10] sm:$0xff]
          %v1158 = vld [vmem:[%s585 + $0x18] sm:$0xff]
          %v1159 = vld [vmem:[%s585 + $0x20] sm:$0xff]
          %v1160 = vld [vmem:[%s585 + $0x28] sm:$0xff]
          %v1161 = vld [vmem:[%s585 + $0x30] sm:$0xff]
          %v1162 = vld [vmem:[%s585 + $0x38] sm:$0xff]
          %v1163 = vld [vmem:[%s585 + $0x40] sm:$0xff]
          %v1164 = vld [vmem:[%s585 + $0x48] sm:$0xff]
          %v1165 = vld [vmem:[%s585 + $0x50] sm:$0xff]
          %v1166 = vld [vmem:[%s585 + $0x58] sm:$0xff]
          %v1167 = vld [vmem:[%s585 + $0x60] sm:$0xff]
          %v1168 = vld [vmem:[%s585 + $0x68] sm:$0xff]
          %v1169 = vld [vmem:[%s585 + $0x70] sm:$0xff]
          %v1170 = vld [vmem:[%s585 + $0x78] sm:$0xff]
          %1172 = vset.pattern.permute.xlu0 0
          %1173 = vperm.xlu0 %1172, %v1155
          %v1174 = vpop.permute.xlu0 %1173
          %1177 = vset.pattern.permute.xlu0 0
          %1178 = vperm.xlu0 %1177, %v1156
          %v1179 = vpop.permute.xlu0 %1178
          %1182 = vset.pattern.permute.xlu0 0
          %1183 = vperm.xlu0 %1182, %v1157
          %v1184 = vpop.permute.xlu0 %1183
          %1187 = vset.pattern.permute.xlu0 0
          %1188 = vperm.xlu0 %1187, %v1158
          %v1189 = vpop.permute.xlu0 %1188
          %1192 = vset.pattern.permute.xlu0 0
          %1193 = vperm.xlu0 %1192, %v1159
          %v1194 = vpop.permute.xlu0 %1193
          %1197 = vset.pattern.permute.xlu0 0
          %1198 = vperm.xlu0 %1197, %v1160
          %v1199 = vpop.permute.xlu0 %1198
          %1202 = vset.pattern.permute.xlu0 0
          %1203 = vperm.xlu0 %1202, %v1161
          %v1204 = vpop.permute.xlu0 %1203
          %1207 = vset.pattern.permute.xlu0 0
          %1208 = vperm.xlu0 %1207, %v1162
          %v1209 = vpop.permute.xlu0 %1208
          %1212 = vset.pattern.permute.xlu0 0
          %1213 = vperm.xlu0 %1212, %v1163
          %v1214 = vpop.permute.xlu0 %1213
          %1217 = vset.pattern.permute.xlu0 0
          %1218 = vperm.xlu0 %1217, %v1164
          %v1219 = vpop.permute.xlu0 %1218
          %1222 = vset.pattern.permute.xlu0 0
          %1223 = vperm.xlu0 %1222, %v1165
          %v1224 = vpop.permute.xlu0 %1223
          %1227 = vset.pattern.permute.xlu0 0
          %1228 = vperm.xlu0 %1227, %v1166
          %v1229 = vpop.permute.xlu0 %1228
          %1232 = vset.pattern.permute.xlu0 0
          %1233 = vperm.xlu0 %1232, %v1167
          %v1234 = vpop.permute.xlu0 %1233
          %1237 = vset.pattern.permute.xlu0 0
          %1238 = vperm.xlu0 %1237, %v1168
          %v1239 = vpop.permute.xlu0 %1238
          %1242 = vset.pattern.permute.xlu0 0
          %1243 = vperm.xlu0 %1242, %v1169
          %v1244 = vpop.permute.xlu0 %1243
          %1247 = vset.pattern.permute.xlu0 0
          %1248 = vperm.xlu0 %1247, %v1170
          %v1249 = vpop.permute.xlu0 %1248
          %v1251 = vmul.f32 %v1027, %v1174
          %v1252 = vmul.f32 %v1028, %v1179
          %v1253 = vmul.f32 %v1029, %v1184
          %v1254 = vmul.f32 %v1030, %v1189
          %v1255 = vmul.f32 %v1031, %v1194
          %v1256 = vmul.f32 %v1032, %v1199
          %v1257 = vmul.f32 %v1033, %v1204
          %v1258 = vmul.f32 %v1034, %v1209
          %v1259 = vmul.f32 %v1035, %v1214
          %v1260 = vmul.f32 %v1036, %v1219
          %v1261 = vmul.f32 %v1037, %v1224
          %v1262 = vmul.f32 %v1038, %v1229
          %v1263 = vmul.f32 %v1039, %v1234
          %v1264 = vmul.f32 %v1040, %v1239
          %v1265 = vmul.f32 %v1041, %v1244
          %v1266 = vmul.f32 %v1042, %v1249
          %vm1267 = vcmp.gt.f32.partialorder %v1139, 0.0
          %vm1268 = vcmp.gt.f32.partialorder %v1140, 0.0
          %vm1269 = vcmp.gt.f32.partialorder %v1141, 0.0
          %vm1270 = vcmp.gt.f32.partialorder %v1142, 0.0
          %vm1271 = vcmp.gt.f32.partialorder %v1143, 0.0
          %vm1272 = vcmp.gt.f32.partialorder %v1144, 0.0
          %vm1273 = vcmp.gt.f32.partialorder %v1145, 0.0
          %vm1274 = vcmp.gt.f32.partialorder %v1146, 0.0
          %vm1275 = vcmp.gt.f32.partialorder %v1147, 0.0
          %vm1276 = vcmp.gt.f32.partialorder %v1148, 0.0
          %vm1277 = vcmp.gt.f32.partialorder %v1149, 0.0
          %vm1278 = vcmp.gt.f32.partialorder %v1150, 0.0
          %vm1279 = vcmp.gt.f32.partialorder %v1151, 0.0
          %vm1280 = vcmp.gt.f32.partialorder %v1152, 0.0
          %vm1281 = vcmp.gt.f32.partialorder %v1153, 0.0
          %vm1282 = vcmp.gt.f32.partialorder %v1154, 0.0
          %v1283 = vmul.f32 %v1139, 0.5
          %v1284 = vmul.f32 %v1140, 0.5
          %v1285 = vmul.f32 %v1141, 0.5
          %v1286 = vmul.f32 %v1142, 0.5
          %v1287 = vmul.f32 %v1143, 0.5
          %v1288 = vmul.f32 %v1144, 0.5
          %v1289 = vmul.f32 %v1145, 0.5
          %v1290 = vmul.f32 %v1146, 0.5
          %v1291 = vmul.f32 %v1147, 0.5
          %v1292 = vmul.f32 %v1148, 0.5
          %v1293 = vmul.f32 %v1149, 0.5
          %v1294 = vmul.f32 %v1150, 0.5
          %v1295 = vmul.f32 %v1151, 0.5
          %v1296 = vmul.f32 %v1152, 0.5
          %v1297 = vmul.f32 %v1153, 0.5
          %v1298 = vmul.f32 %v1154, 0.5
          %v1299 = vsel %vm1267, %v1139, %v1283
          %v1300 = vsel %vm1268, %v1140, %v1284
          %v1301 = vsel %vm1269, %v1141, %v1285
          %v1302 = vsel %vm1270, %v1142, %v1286
          %v1303 = vsel %vm1271, %v1143, %v1287
          %v1304 = vsel %vm1272, %v1144, %v1288
          %v1305 = vsel %vm1273, %v1145, %v1289
          %v1306 = vsel %vm1274, %v1146, %v1290
          %v1307 = vsel %vm1275, %v1147, %v1291
          %v1308 = vsel %vm1276, %v1148, %v1292
          %v1309 = vsel %vm1277, %v1149, %v1293
          %v1310 = vsel %vm1278, %v1150, %v1294
          %v1311 = vsel %vm1279, %v1151, %v1295
          %v1312 = vsel %vm1280, %v1152, %v1296
          %v1313 = vsel %vm1281, %v1153, %v1297
          %v1314 = vsel %vm1282, %v1154, %v1298
          %vm1315 = vcmp.gt.f32.partialorder %v1251, 0.0
          %vm1316 = vcmp.gt.f32.partialorder %v1252, 0.0
          %vm1317 = vcmp.gt.f32.partialorder %v1253, 0.0
          %vm1318 = vcmp.gt.f32.partialorder %v1254, 0.0
          %vm1319 = vcmp.gt.f32.partialorder %v1255, 0.0
          %vm1320 = vcmp.gt.f32.partialorder %v1256, 0.0
          %vm1321 = vcmp.gt.f32.partialorder %v1257, 0.0
          %vm1322 = vcmp.gt.f32.partialorder %v1258, 0.0
          %vm1323 = vcmp.gt.f32.partialorder %v1259, 0.0
          %vm1324 = vcmp.gt.f32.partialorder %v1260, 0.0
          %vm1325 = vcmp.gt.f32.partialorder %v1261, 0.0
          %vm1326 = vcmp.gt.f32.partialorder %v1262, 0.0
          %vm1327 = vcmp.gt.f32.partialorder %v1263, 0.0
          %vm1328 = vcmp.gt.f32.partialorder %v1264, 0.0
          %vm1329 = vcmp.gt.f32.partialorder %v1265, 0.0
          %vm1330 = vcmp.gt.f32.partialorder %v1266, 0.0
          %v1331 = vmul.f32 %v1251, 0.5
          %v1332 = vmul.f32 %v1252, 0.5
          %v1333 = vmul.f32 %v1253, 0.5
          %v1334 = vmul.f32 %v1254, 0.5
          %v1335 = vmul.f32 %v1255, 0.5
          %v1336 = vmul.f32 %v1256, 0.5
          %v1337 = vmul.f32 %v1257, 0.5
          %v1338 = vmul.f32 %v1258, 0.5
          %v1339 = vmul.f32 %v1259, 0.5
          %v1340 = vmul.f32 %v1260, 0.5
          %v1341 = vmul.f32 %v1261, 0.5
          %v1342 = vmul.f32 %v1262, 0.5
          %v1343 = vmul.f32 %v1263, 0.5
          %v1344 = vmul.f32 %v1264, 0.5
          %v1345 = vmul.f32 %v1265, 0.5
          %v1346 = vmul.f32 %v1266, 0.5
          %v1347 = vsel %vm1315, %v1251, %v1331
          %v1348 = vsel %vm1316, %v1252, %v1332
          %v1349 = vsel %vm1317, %v1253, %v1333
          %v1350 = vsel %vm1318, %v1254, %v1334
          %v1351 = vsel %vm1319, %v1255, %v1335
          %v1352 = vsel %vm1320, %v1256, %v1336
          %v1353 = vsel %vm1321, %v1257, %v1337
          %v1354 = vsel %vm1322, %v1258, %v1338
          %v1355 = vsel %vm1323, %v1259, %v1339
          %v1356 = vsel %vm1324, %v1260, %v1340
          %v1357 = vsel %vm1325, %v1261, %v1341
          %v1358 = vsel %vm1326, %v1262, %v1342
          %v1359 = vsel %vm1327, %v1263, %v1343
          %v1360 = vsel %vm1328, %v1264, %v1344
          %v1361 = vsel %vm1329, %v1265, %v1345
          %v1362 = vsel %vm1330, %v1266, %v1346
          %v1363 = vadd.f32 %v1299, %v1347
          %v1364 = vadd.f32 %v1300, %v1348
          %v1365 = vadd.f32 %v1301, %v1349
          %v1366 = vadd.f32 %v1302, %v1350
          %v1367 = vadd.f32 %v1303, %v1351
          %v1368 = vadd.f32 %v1304, %v1352
          %v1369 = vadd.f32 %v1305, %v1353
          %v1370 = vadd.f32 %v1306, %v1354
          %v1371 = vadd.f32 %v1307, %v1355
          %v1372 = vadd.f32 %v1308, %v1356
          %v1373 = vadd.f32 %v1309, %v1357
          %v1374 = vadd.f32 %v1310, %v1358
          %v1375 = vadd.f32 %v1311, %v1359
          %v1376 = vadd.f32 %v1312, %v1360
          %v1377 = vadd.f32 %v1313, %v1361
          %v1378 = vadd.f32 %v1314, %v1362
          %1379 = vst [vmem:[%s599] sm:$0xff] %v1299
          %1380 = vst [vmem:[%s599 + $0x8] sm:$0xff] %v1300
          %1381 = vst [vmem:[%s599 + $0x10] sm:$0xff] %v1301
          %1382 = vst [vmem:[%s599 + $0x18] sm:$0xff] %v1302
          %1383 = vst [vmem:[%s599 + $0x20] sm:$0xff] %v1303
          %1384 = vst [vmem:[%s599 + $0x28] sm:$0xff] %v1304
          %1385 = vst [vmem:[%s599 + $0x30] sm:$0xff] %v1305
          %1386 = vst [vmem:[%s599 + $0x38] sm:$0xff] %v1306
          %1387 = vst [vmem:[%s599 + $0x40] sm:$0xff] %v1307
          %1388 = vst [vmem:[%s599 + $0x48] sm:$0xff] %v1308
          %1389 = vst [vmem:[%s599 + $0x50] sm:$0xff] %v1309
          %1390 = vst [vmem:[%s599 + $0x58] sm:$0xff] %v1310
          %1391 = vst [vmem:[%s599 + $0x60] sm:$0xff] %v1311
          %1392 = vst [vmem:[%s599 + $0x68] sm:$0xff] %v1312
          %1393 = vst [vmem:[%s599 + $0x70] sm:$0xff] %v1313
          %1394 = vst [vmem:[%s599 + $0x78] sm:$0xff] %v1314
          %1395 = vst [vmem:[%s605] sm:$0xff] %v1347
          %1396 = vst [vmem:[%s605 + $0x8] sm:$0xff] %v1348
          %1397 = vst [vmem:[%s605 + $0x10] sm:$0xff] %v1349
          %1398 = vst [vmem:[%s605 + $0x18] sm:$0xff] %v1350
          %1399 = vst [vmem:[%s605 + $0x20] sm:$0xff] %v1351
          %1400 = vst [vmem:[%s605 + $0x28] sm:$0xff] %v1352
          %1401 = vst [vmem:[%s605 + $0x30] sm:$0xff] %v1353
          %1402 = vst [vmem:[%s605 + $0x38] sm:$0xff] %v1354
          %1403 = vst [vmem:[%s605 + $0x40] sm:$0xff] %v1355
          %1404 = vst [vmem:[%s605 + $0x48] sm:$0xff] %v1356
          %1405 = vst [vmem:[%s605 + $0x50] sm:$0xff] %v1357
          %1406 = vst [vmem:[%s605 + $0x58] sm:$0xff] %v1358
          %1407 = vst [vmem:[%s605 + $0x60] sm:$0xff] %v1359
          %1408 = vst [vmem:[%s605 + $0x68] sm:$0xff] %v1360
          %1409 = vst [vmem:[%s605 + $0x70] sm:$0xff] %v1361
          %1410 = vst [vmem:[%s605 + $0x78] sm:$0xff] %v1362
          %v1411 = vpack.c.bf16 %v1363, %v1363
          %v1412 = vpack.c.bf16 %v1364, %v1364
          %v1413 = vpack.c.bf16 %v1365, %v1365
          %v1414 = vpack.c.bf16 %v1366, %v1366
          %v1415 = vpack.c.bf16 %v1367, %v1367
          %v1416 = vpack.c.bf16 %v1368, %v1368
          %v1417 = vpack.c.bf16 %v1369, %v1369
          %v1418 = vpack.c.bf16 %v1370, %v1370
          %v1419 = vpack.c.bf16 %v1371, %v1371
          %v1420 = vpack.c.bf16 %v1372, %v1372
          %v1421 = vpack.c.bf16 %v1373, %v1373
          %v1422 = vpack.c.bf16 %v1374, %v1374
          %v1423 = vpack.c.bf16 %v1375, %v1375
          %v1424 = vpack.c.bf16 %v1376, %v1376
          %v1425 = vpack.c.bf16 %v1377, %v1377
          %v1426 = vpack.c.bf16 %v1378, %v1378
          %1427 = vst [vmem:[%s557] sm:$0xf] %v1411
          %1428 = vst [vmem:[%s557 + $0x4] sm:$0xf] %v1412
          %1429 = vst [vmem:[%s557 + $0x8] sm:$0xf] %v1413
          %1430 = vst [vmem:[%s557 + $0xc] sm:$0xf] %v1414
          %1431 = vst [vmem:[%s557 + $0x10] sm:$0xf] %v1415
          %1432 = vst [vmem:[%s557 + $0x14] sm:$0xf] %v1416
          %1433 = vst [vmem:[%s557 + $0x18] sm:$0xf] %v1417
          %1434 = vst [vmem:[%s557 + $0x1c] sm:$0xf] %v1418
          %1435 = vst [vmem:[%s557 + $0x20] sm:$0xf] %v1419
          %1436 = vst [vmem:[%s557 + $0x24] sm:$0xf] %v1420
          %1437 = vst [vmem:[%s557 + $0x28] sm:$0xf] %v1421
          %1438 = vst [vmem:[%s557 + $0x2c] sm:$0xf] %v1422
          %1439 = vst [vmem:[%s557 + $0x30] sm:$0xf] %v1423
          %1440 = vst [vmem:[%s557 + $0x34] sm:$0xf] %v1424
          %1441 = vst [vmem:[%s557 + $0x38] sm:$0xf] %v1425
          %1442 = vst [vmem:[%s557 + $0x3c] sm:$0xf] %v1426
          %v1443 = vld [vmem:[%s593] sm:$0xff]
          %v1444 = vld [vmem:[%s593 + $0x8] sm:$0xff]
          %v1445 = vld [vmem:[%s593 + $0x10] sm:$0xff]
          %v1446 = vld [vmem:[%s593 + $0x18] sm:$0xff]
          %v1447 = vld [vmem:[%s593 + $0x20] sm:$0xff]
          %v1448 = vld [vmem:[%s593 + $0x28] sm:$0xff]
          %v1449 = vld [vmem:[%s593 + $0x30] sm:$0xff]
          %v1450 = vld [vmem:[%s593 + $0x38] sm:$0xff]
          %v1451 = vld [vmem:[%s593 + $0x40] sm:$0xff]
          %v1452 = vld [vmem:[%s593 + $0x48] sm:$0xff]
          %v1453 = vld [vmem:[%s593 + $0x50] sm:$0xff]
          %v1454 = vld [vmem:[%s593 + $0x58] sm:$0xff]
          %v1455 = vld [vmem:[%s593 + $0x60] sm:$0xff]
          %v1456 = vld [vmem:[%s593 + $0x68] sm:$0xff]
          %v1457 = vld [vmem:[%s593 + $0x70] sm:$0xff]
          %v1458 = vld [vmem:[%s593 + $0x78] sm:$0xff]
          %v1459 = vadd.f32 %v1443, %v1363
          %v1460 = vadd.f32 %v1444, %v1364
          %v1461 = vadd.f32 %v1445, %v1365
          %v1462 = vadd.f32 %v1446, %v1366
          %v1463 = vadd.f32 %v1447, %v1367
          %v1464 = vadd.f32 %v1448, %v1368
          %v1465 = vadd.f32 %v1449, %v1369
          %v1466 = vadd.f32 %v1450, %v1370
          %v1467 = vadd.f32 %v1451, %v1371
          %v1468 = vadd.f32 %v1452, %v1372
          %v1469 = vadd.f32 %v1453, %v1373
          %v1470 = vadd.f32 %v1454, %v1374
          %v1471 = vadd.f32 %v1455, %v1375
          %v1472 = vadd.f32 %v1456, %v1376
          %v1473 = vadd.f32 %v1457, %v1377
          %v1474 = vadd.f32 %v1458, %v1378
          %1475 = vst [vmem:[%s612] sm:$0xff] %v1459
          %1476 = vst [vmem:[%s612 + $0x8] sm:$0xff] %v1460
          %1477 = vst [vmem:[%s612 + $0x10] sm:$0xff] %v1461
          %1478 = vst [vmem:[%s612 + $0x18] sm:$0xff] %v1462
          %1479 = vst [vmem:[%s612 + $0x20] sm:$0xff] %v1463
          %1480 = vst [vmem:[%s612 + $0x28] sm:$0xff] %v1464
          %1481 = vst [vmem:[%s612 + $0x30] sm:$0xff] %v1465
          %1482 = vst [vmem:[%s612 + $0x38] sm:$0xff] %v1466
          %1483 = vst [vmem:[%s612 + $0x40] sm:$0xff] %v1467
          %1484 = vst [vmem:[%s612 + $0x48] sm:$0xff] %v1468
          %1485 = vst [vmem:[%s612 + $0x50] sm:$0xff] %v1469
          %1486 = vst [vmem:[%s612 + $0x58] sm:$0xff] %v1470
          %1487 = vst [vmem:[%s612 + $0x60] sm:$0xff] %v1471
          %1488 = vst [vmem:[%s612 + $0x68] sm:$0xff] %v1472
          %1489 = vst [vmem:[%s612 + $0x70] sm:$0xff] %v1473
          %1490 = vst [vmem:[%s612 + $0x78] sm:$0xff] %v1474
        $region132: #{social_model_forward.3} parent=111 // pred_fallthru
          _
        %s1491 = smul.u32 16, %s28
        %p1492 = scmp.lt.s32.totalorder %s1491, 79
        %s1493 = scalar_select %p1492, %s1491, 79
        %s1494 = smul.addr %s1493, 8
        %s1495 = scalar_lea.vmem %s6, %s1494
        %s1496 = smul.u32 16, %s28
        %p1497 = scmp.lt.s32.totalorder %s1496, 79
        %s1498 = scalar_select %p1497, %s1496, 79
        %s1499 = smul.addr %s1498, 8
        %s1500 = scalar_lea.vmem %s7, %s1499
        %s1501 = sand.u32 %s267, 1
        %s1502 = scalar_lea.sflag [#allocation5], %s1501
        %s1503 = sand.u32 %s267, 1
        %s1504 = smul.addr %s1503, 64
        %s1505 = scalar_lea.vmem [#allocation4], %s1504
        %s1506 = smul.u32 16, %s28
        %p1507 = scmp.lt.s32.totalorder %s1506, 79
        %s1508 = scalar_select %p1507, %s1506, 79
        %s1509 = smul.addr %s1508, 8
        %s1510 = scalar_lea.vmem %s9, %s1509
        // Predicated region
        $region133: #{social_model_forward.3} parent=111 // pred_check
          %p1511 = pneg %p225
        $region134: #{social_model_forward.3} parent=111 // pred_check_branch
          %1513 = sbr.rel (%p1511) target = $region136
        $region135: #{social_model_forward.3} parent=111 // pred_region
          %s1514 = smul.u32 16, %s28
        $region136: #{social_model_forward.3} parent=111 // pred_fallthru
          _
        // Predicated region
        $region137: #{social_model_forward.3} parent=111 // pred_check
          %p1515 = pneg %p251
        $region138: #{social_model_forward.3} parent=111 // pred_check_branch
          %1517 = sbr.rel (%p1515) target = $region140
        $region139: #{social_model_forward.3} parent=111 // pred_region
          %s1518 = smul.u32 16, %s28
        $region140: #{social_model_forward.3} parent=111 // pred_fallthru
          _
        // Predicated region
        $region141: #{social_model_forward.3} parent=111 // pred_check
          %p1519 = pneg %p277
        $region142: #{social_model_forward.3} parent=111 // pred_check_branch
          %1521 = sbr.rel (%p1519) target = $region144
        $region143: #{social_model_forward.3} parent=111 // pred_region
          %s1522 = smul.u32 16, %s28
          %1524 = vsyncadd %s1502, 0
          %s1525 = smul.addr %s1522, 4
          %s1526 = scalar_lea.hbm %s8, %s1525
          %s1527 = sshll.u32 %s1505, 4
          %s1528 = int_to_ptr.vmem [resolvable:$true] %s1527
          %s1529 = sshll.u32 %s1526, 4
          %s1530 = int_to_ptr.hbm [resolvable:$true] %s1529
          %1535 = dma.vmem_to_hbm [thread:$0]  %s1528, 1024, %s1530, %s1502, 64, 64, 4
        $region144: #{social_model_forward.3} parent=111 // pred_fallthru
          _
        // Predicated region
        $region145: #{social_model_forward.3} parent=111 // pred_check
          %p1536 = pneg %p303
        $region146: #{social_model_forward.3} parent=111 // pred_check_branch
          %1538 = sbr.rel (%p1536) target = $region148
        $region147: #{social_model_forward.3} parent=111 // pred_region
          %s1539 = smul.u32 16, %s28
        $region148: #{social_model_forward.3} parent=111 // pred_fallthru
          _
      $region112: #{social_model_forward.3} parent=5 // pred_fallthru
        _
      %p1540 = scmp.le.s32.totalorder 2, %s19
      // Predicated region
      $region149: #{social_model_forward.3} parent=5 // pred_check
        %p1541 = pneg %p1540
      $region150: #{social_model_forward.3} parent=5 // pred_check_branch
        %1543 = sbr.rel (%p1541) target = $region152
      $region151: #{social_model_forward.3} parent=5 // pred_region
        %s1544 = ssub.s32 %s19, 2
        // Predicated region
        $region153: #{social_model_forward.3} parent=151 // pred_check
          %p1545 = pneg %p231
        $region154: #{social_model_forward.3} parent=151 // pred_check_branch
          %1547 = sbr.rel (%p1545) target = $region156
        $region155: #{social_model_forward.3} parent=151 // pred_region
          %s1548 = smul.u32 16, %s30
          %p1549 = scmp.lt.s32.totalorder %s1548, 79
          %s1550 = scalar_select %p1549, %s1548, 79
          %s1551 = smul.addr %s1550, 8
          %s1552 = scalar_lea.vmem %s6, %s1551
        $region156: #{social_model_forward.3} parent=151 // pred_fallthru
          _
        // Predicated region
        $region157: #{social_model_forward.3} parent=151 // pred_check
          %p1553 = pneg %p257
        $region158: #{social_model_forward.3} parent=151 // pred_check_branch
          %1555 = sbr.rel (%p1553) target = $region160
        $region159: #{social_model_forward.3} parent=151 // pred_region
          %s1556 = smul.u32 16, %s30
          %p1557 = scmp.lt.s32.totalorder %s1556, 79
          %s1558 = scalar_select %p1557, %s1556, 79
          %s1559 = smul.addr %s1558, 8
          %s1560 = scalar_lea.vmem %s7, %s1559
        $region160: #{social_model_forward.3} parent=151 // pred_fallthru
          _
        // Predicated region
        $region161: #{social_model_forward.3} parent=151 // pred_check
          %p1561 = pneg %p283
        $region162: #{social_model_forward.3} parent=151 // pred_check_branch
          %1563 = sbr.rel (%p1561) target = $region164
        $region163: #{social_model_forward.3} parent=151 // pred_region
          %s1564 = sand.u32 %s268, 1
          %s1565 = scalar_lea.sflag [#allocation5], %s1564
          %s1566 = sand.u32 %s268, 1
          %s1567 = smul.addr %s1566, 64
          %s1568 = scalar_lea.vmem [#allocation4], %s1567
          %1570 = dma.done %s1565, 1024
        $region164: #{social_model_forward.3} parent=151 // pred_fallthru
          _
        // Predicated region
        $region165: #{social_model_forward.3} parent=151 // pred_check
          %p1571 = pneg %p309
        $region166: #{social_model_forward.3} parent=151 // pred_check_branch
          %1573 = sbr.rel (%p1571) target = $region168
        $region167: #{social_model_forward.3} parent=151 // pred_region
          %s1574 = smul.u32 16, %s30
          %p1575 = scmp.lt.s32.totalorder %s1574, 79
          %s1576 = scalar_select %p1575, %s1574, 79
          %s1577 = smul.addr %s1576, 8
          %s1578 = scalar_lea.vmem %s9, %s1577
        $region168: #{social_model_forward.3} parent=151 // pred_fallthru
          _
      $region152: #{social_model_forward.3} parent=5 // pred_fallthru
        _
    $region6: #{social_model_forward.3} parent=1 // loop_footer
      %s23 = sadd.s32 1, %s19
    $region7: #{social_model_forward.3} parent=1 // loop_footer_branch
      %18 = sbr.rel target = $region3
    $region8: #{social_model_forward.3} parent=1 // loop_exit
      _
    %1579 = vsyncpa [#allocation5], 1
    %s1580 = scalar_lea.sflag [#allocation5], 1
    %1581 = vsyncpa %s1580, 1

</llo_original>
